<compile_context>
chip_gen: v6e
topology: v6e:2x2x1
jax: 0.10.0
libtpu: 0.0.40
codegen_flags: <defaults>
</compile_context>

<pallas_src>
import math
import jax
import jax.numpy as jnp
from jax import lax
from jax.experimental import pallas as pl
from jax.experimental.pallas import tpu as pltpu

SCALE = math.sqrt(0.5)
KSIZE = 3          # conv kernel size
HID = 32           # hidden / embedding dim
N_ENC_LAYERS = 2
N_DEC_LAYERS = 2
MAX_LEN = 64       # positional-embedding table size


# ------------------------------ in-kernel helpers ------------------------------

def _conv_glu(x, pad_ref, w_l, b_l, pad_left):
    """Conv1d(k=KSIZE) + GLU for one layer.  x: (L, H).  pad_ref: (L+KSIZE-1, H) VMEM scratch
    whose halo rows are already zero (padding done in-kernel, no jnp.pad in the wrapper)."""
    L, H = x.shape
    pad_ref[pad_left:pad_left + L, :] = x
    xp = pad_ref[...]                                        # (L+K-1, H)
    acc = b_l                                                # (1, 2H) broadcast
    for k in range(KSIZE):                                   # conv = K shifted matmuls (MXU)
        acc = acc + jnp.dot(xp[k:k + L, :], w_l[k],
                            preferred_element_type=jnp.float32)
    return acc[:, :H] * jax.nn.sigmoid(acc[:, H:])           # GLU


# ------------------------------ fused encoder kernel ------------------------------

def _encoder_kernel(src_ref, ew_ref, eb_ref, pos_ref, cw_ref, cb_ref,
                    conved_ref, comb_ref, pad_ref):
    pad_ref[...] = jnp.zeros_like(pad_ref)                   # zero halo once
    src = src_ref[0]                                         # (S, 1)
    # embedding linear (contraction of size 1 -> broadcast multiply) + positional add
    embedded = src * ew_ref[...] + eb_ref[...] + pos_ref[...]     # (S, H)
    x = embedded
    for l in range(N_ENC_LAYERS):
        conved = _conv_glu(x, pad_ref, cw_ref[l], cb_ref[l],
                           pad_left=(KSIZE - 1) // 2)        # same-length conv
        x = (conved + x) * SCALE                             # scaled residual
    conved_ref[0] = x
    comb_ref[0] = (x + embedded) * SCALE


def encoder_forward(src, p):
    B, S, _ = src.shape
    pos = p["enc_pos"][:S]
    return pl.pallas_call(
        _encoder_kernel,
        out_shape=(jax.ShapeDtypeStruct((B, S, HID), jnp.float32),
                   jax.ShapeDtypeStruct((B, S, HID), jnp.float32)),
        grid=(B,),
        in_specs=[
            pl.BlockSpec((1, S, 1), lambda b: (b, 0, 0)),
            pl.BlockSpec((1, HID), lambda b: (0, 0)),
            pl.BlockSpec((1, HID), lambda b: (0, 0)),
            pl.BlockSpec((S, HID), lambda b: (0, 0)),
            pl.BlockSpec((N_ENC_LAYERS, KSIZE, HID, 2 * HID), lambda b: (0, 0, 0, 0)),
            pl.BlockSpec((N_ENC_LAYERS, 1, 2 * HID), lambda b: (0, 0, 0)),
        ],
        out_specs=(pl.BlockSpec((1, S, HID), lambda b: (b, 0, 0)),
                   pl.BlockSpec((1, S, HID), lambda b: (b, 0, 0))),
        scratch_shapes=[pltpu.VMEM((S + KSIZE - 1, HID), jnp.float32)],
        compiler_params=pltpu.CompilerParams(dimension_semantics=("parallel",)),
    )(src, p["enc_emb_w"], p["enc_emb_b"], pos, p["enc_conv_w"], p["enc_conv_b"])


# ------------------------------ fused decoder kernel ------------------------------

def _decoder_kernel(dec_ref, ec_ref, ecb_ref, ew_ref, eb_ref, pos_ref,
                    cw_ref, cb_ref, h2ew_ref, h2eb_ref, e2hw_ref, e2hb_ref,
                    ow_ref, ob_ref, o_ref, pad_ref):
    pad_ref[...] = jnp.zeros_like(pad_ref)                   # zero halo once
    dec_in = dec_ref[0]                                      # (T, 1)
    embedded = dec_in * ew_ref[...] + eb_ref[...] + pos_ref[...]  # (T, H)
    enc_conved = ec_ref[0]                                   # (S, H)
    enc_combined = ecb_ref[0]                                # (S, H)
    x = embedded
    for l in range(N_DEC_LAYERS):
        conved = _conv_glu(x, pad_ref, cw_ref[l], cb_ref[l],
                           pad_left=KSIZE - 1)               # causal left pad
        # attention (probabilities stay in-register; not written back -> no lane-sparse store)
        conved_emb = jnp.dot(conved, h2ew_ref[...],
                             preferred_element_type=jnp.float32) + h2eb_ref[...]
        combined = (conved_emb + embedded) * SCALE
        energy = lax.dot_general(combined, enc_conved, (((1,), (1,)), ((), ())),
                                 preferred_element_type=jnp.float32)   # (T, S)
        e = jnp.exp(energy - jnp.max(energy, axis=-1, keepdims=True))
        prob = e / jnp.sum(e, axis=-1, keepdims=True)
        attended = jnp.dot(prob, enc_combined, preferred_element_type=jnp.float32)  # (T, H)
        attended = jnp.dot(attended, e2hw_ref[...],
                           preferred_element_type=jnp.float32) + e2hb_ref[...]
        conved = (conved + attended) * SCALE
        x = (conved + x) * SCALE                             # residual
    # output head: 1-wide linear as a lane reduction (folded into the fused kernel)
    o_ref[0] = jnp.sum(x * ow_ref[...], axis=1, keepdims=True) + ob_ref[...]


def decoder_forward(dec_in, enc_conved, enc_combined, p):
    B, T, _ = dec_in.shape
    S = enc_conved.shape[1]
    pos = p["dec_pos"][:T]
    out = pl.pallas_call(
        _decoder_kernel,
        out_shape=jax.ShapeDtypeStruct((B, T, 1), jnp.float32),
        grid=(B,),
        in_specs=[
            pl.BlockSpec((1, T, 1), lambda b: (b, 0, 0)),
            pl.BlockSpec((1, S, HID), lambda b: (b, 0, 0)),
            pl.BlockSpec((1, S, HID), lambda b: (b, 0, 0)),
            pl.BlockSpec((1, HID), lambda b: (0, 0)),
            pl.BlockSpec((1, HID), lambda b: (0, 0)),
            pl.BlockSpec((T, HID), lambda b: (0, 0)),
            pl.BlockSpec((N_DEC_LAYERS, KSIZE, HID, 2 * HID), lambda b: (0, 0, 0, 0)),
            pl.BlockSpec((N_DEC_LAYERS, 1, 2 * HID), lambda b: (0, 0, 0)),
            pl.BlockSpec((HID, HID), lambda b: (0, 0)),
            pl.BlockSpec((1, HID), lambda b: (0, 0)),
            pl.BlockSpec((HID, HID), lambda b: (0, 0)),
            pl.BlockSpec((1, HID), lambda b: (0, 0)),
            pl.BlockSpec((1, HID), lambda b: (0, 0)),
            pl.BlockSpec((1, 1), lambda b: (0, 0)),
        ],
        out_specs=pl.BlockSpec((1, T, 1), lambda b: (b, 0, 0)),
        scratch_shapes=[pltpu.VMEM((T + KSIZE - 1, HID), jnp.float32)],
        compiler_params=pltpu.CompilerParams(dimension_semantics=("parallel",)),
    )(dec_in, enc_conved, enc_combined,
      p["dec_emb_w"], p["dec_emb_b"], pos,
      p["dec_conv_w"], p["dec_conv_b"],
      p["attn_hid2emb_w"], p["attn_hid2emb_b"],
      p["attn_emb2hid_w"], p["attn_emb2hid_b"],
      p["out_w"], p["out_b"])
    return out, None   # attention probs intentionally not materialized (unused by ConvNet.forward)


# ------------------------------ ConvNet.forward ------------------------------

def convnet_forward(src, trg=None, trg_len=None, params=None, train=True):
    if trg_len is None:
        trg_len = trg.shape[1]
    else:
        assert trg is None, 'Input the target data'
    enc_conved, enc_combined = encoder_forward(src, params)
    B = src.shape[0]
    if train:
        # Teacher forcing: every decoder pass except the last is discarded in the reference loop,
        # and the last pass's input is exactly [0, trg[:, :trg_len-1]] -> run one decoder pass.
        decoder_input = jnp.concatenate(
            [jnp.zeros((B, 1, 1), jnp.float32), trg[:, :trg_len - 1, :]], axis=1)
        decoder_output, _ = decoder_forward(decoder_input, enc_conved, enc_combined, params)
        return decoder_output
    # Inference: autoregressive, on a fixed-length buffer (causal decoder => trailing zeros never
    # affect already-generated positions), so every step reuses one compiled kernel shape.
    decoder_input = jnp.zeros((B, trg_len, 1), jnp.float32)
    decoder_output = None
    for d_len in range(trg_len):
        decoder_output, _ = decoder_forward(decoder_input, enc_conved, enc_combined, params)
        if d_len + 1 < trg_len:
            decoder_input = lax.dynamic_update_slice(
                decoder_input, decoder_output[:, d_len:d_len + 1, :], (0, d_len + 1, 0))
    return decoder_output


# ------------------------------ deterministic params ------------------------------

def init_params(key):
    ks = jax.random.split(key, 16)

    def w(k, shape, s=0.1):
        return jax.random.normal(k, shape, jnp.float32) * s

    return {
        "enc_emb_w": w(ks[0], (1, HID)),
        "enc_emb_b": jnp.zeros((HID,), jnp.float32),
        "enc_pos": w(ks[1], (MAX_LEN, HID)),
        "enc_conv_w": [w(ks[2 + l], (KSIZE, HID, 2 * HID)) for l in range(N_ENC_LAYERS)],
        "enc_conv_b": [jnp.zeros((2 * HID,), jnp.float32) for _ in range(N_ENC_LAYERS)],
        "dec_emb_w": w(ks[5], (1, HID)),
        "dec_emb_b": jnp.zeros((HID,), jnp.float32),
        "dec_pos": w(ks[6], (MAX_LEN, HID)),
        "dec_conv_w": [w(ks[7 + l], (KSIZE, HID, 2 * HID)) for l in range(N_DEC_LAYERS)],
        "dec_conv_b": [jnp.zeros((2 * HID,), jnp.float32) for _ in range(N_DEC_LAYERS)],
        "attn_hid2emb_w": w(ks[10], (HID, HID)),
        "attn_hid2emb_b": jnp.zeros((HID,), jnp.float32),
        "attn_emb2hid_w": w(ks[11], (HID, HID)),
        "attn_emb2hid_b": jnp.zeros((HID,), jnp.float32),
        "out_w": w(ks[12], (HID, 1)),
        "out_b": jnp.zeros((1,), jnp.float32),
    }


def prepare_params(p):
    """One-time prep: stack per-layer conv weights and pre-reshape biases into kernel-ready
    shapes so the hot path does no reshapes and the fused kernels index layers directly."""
    return {
        "enc_emb_w": p["enc_emb_w"].reshape(1, HID),
        "enc_emb_b": p["enc_emb_b"].reshape(1, HID),
        "enc_pos": p["enc_pos"],
        "enc_conv_w": jnp.stack(p["enc_conv_w"]),                                   # (L, K, H, 2H)
        "enc_conv_b": jnp.stack([b.reshape(1, 2 * HID) for b in p["enc_conv_b"]]),  # (L, 1, 2H)
        "dec_emb_w": p["dec_emb_w"].reshape(1, HID),
        "dec_emb_b": p["dec_emb_b"].reshape(1, HID),
        "dec_pos": p["dec_pos"],
        "dec_conv_w": jnp.stack(p["dec_conv_w"]),
        "dec_conv_b": jnp.stack([b.reshape(1, 2 * HID) for b in p["dec_conv_b"]]),
        "attn_hid2emb_w": p["attn_hid2emb_w"],
        "attn_hid2emb_b": p["attn_hid2emb_b"].reshape(1, HID),
        "attn_emb2hid_w": p["attn_emb2hid_w"],
        "attn_emb2hid_b": p["attn_emb2hid_b"].reshape(1, HID),
        "out_w": p["out_w"].reshape(1, HID),
        "out_b": p["out_b"].reshape(1, 1),
    }


# TODO(synk): `parameterized(...)` alternate-weights path is not reproduced (same math,
#             different weight plumbing); only the standard forward is implemented.

if __name__ == "__main__":
    key = jax.random.PRNGKey(0)
    k_src, k_trg, k_par = jax.random.split(key, 3)
    B, S, T = 2, 8, 8
    src = jax.random.normal(k_src, (B, S, 1), jnp.float32)   # continuous-valued source seq
    trg = jax.random.normal(k_trg, (B, T, 1), jnp.float32)   # teacher-forcing targets
    params = prepare_params(init_params(k_par))

    fwd = jax.jit(convnet_forward, static_argnames=("trg_len", "train"))

    # train (teacher-forced) path: one encoder + one decoder pallas_call total
    out = fwd(src, trg=trg, trg_len=None, params=params, train=True)
    jax.block_until_ready(out)
    assert out.shape == (B, T, 1) and out.dtype == jnp.float32

    # autoregressive inference path: fixed-shape buffer, same compiled kernels every step
    out_inf = fwd(src, trg=None, trg_len=T, params=params, train=False)
    jax.block_until_ready(out_inf)
    assert out_inf.shape == (B, T, 1) and out_inf.dtype == jnp.float32

    print("KERNEL_OK")
</pallas_src>

<mosaic_0001>
module attributes {stable_mosaic.version = 11 : i64} {
  func.func @_encoder_kernel(%arg0: i32, %arg1: memref<1x8x1xf32, #tpu.memory_space<vmem>>, %arg2: memref<1x32xf32, #tpu.memory_space<vmem>>, %arg3: memref<1x32xf32, #tpu.memory_space<vmem>>, %arg4: memref<8x32xf32, #tpu.memory_space<vmem>>, %arg5: memref<2x3x32x64xf32, #tpu.memory_space<vmem>>, %arg6: memref<2x1x64xf32, #tpu.memory_space<vmem>>, %arg7: memref<1x8x32xf32, #tpu.memory_space<vmem>>, %arg8: memref<1x8x32xf32, #tpu.memory_space<vmem>>, %arg9: memref<10x32xf32, #tpu.memory_space<vmem>>) attributes {dimension_semantics = [#tpu.dimension_semantics<parallel>], iteration_bounds = array<i64: 2>, scalar_prefetch = 0 : i64, scratch_operands = 1 : i64, tpu.core_type = #tpu.core_type<tc>, window_params = [{transform_indices = @transform_0, window_bounds = array<i64: 1, 8, 1>}, {pipeline_mode = #tpu.pipeline_mode<synchronous>, transform_indices = @transform_1, window_bounds = array<i64: 1, 32>}, {pipeline_mode = #tpu.pipeline_mode<synchronous>, transform_indices = @transform_2, window_bounds = array<i64: 1, 32>}, {pipeline_mode = #tpu.pipeline_mode<synchronous>, transform_indices = @transform_3, window_bounds = array<i64: 8, 32>}, {pipeline_mode = #tpu.pipeline_mode<synchronous>, transform_indices = @transform_4, window_bounds = array<i64: 2, 3, 32, 64>}, {pipeline_mode = #tpu.pipeline_mode<synchronous>, transform_indices = @transform_5, window_bounds = array<i64: 2, 1, 64>}, {transform_indices = @transform_6, window_bounds = array<i64: 1, 8, 32>}, {transform_indices = @transform_7, window_bounds = array<i64: 1, 8, 32>}]} {
    %cst = arith.constant 0.000000e+00 : f32
    %0 = vector.broadcast %cst : f32 to vector<10x32xf32>
    %c0 = arith.constant 0 : index
    %c0_0 = arith.constant 0 : index
    %1 = vector.load %arg9[%c0, %c0_0] : memref<10x32xf32, #tpu.memory_space<vmem>>, vector<10x32xf32>
    tpu.vector_store %arg9[%c0, %c0_0], %0 {strides = array<i32>} : memref<10x32xf32, #tpu.memory_space<vmem>>, vector<10x32xf32>,
    %c0_1 = arith.constant 0 : index
    %c0_2 = arith.constant 0 : index
    %c0_3 = arith.constant 0 : index
    %2 = vector.load %arg1[%c0_1, %c0_2, %c0_3] : memref<1x8x1xf32, #tpu.memory_space<vmem>>, vector<1x8x1xf32>
    %3 = vector.shape_cast %2 : vector<1x8x1xf32> to vector<8x1xf32>
    %c0_4 = arith.constant 0 : index
    %c0_5 = arith.constant 0 : index
    %4 = vector.load %arg2[%c0_4, %c0_5] : memref<1x32xf32, #tpu.memory_space<vmem>>, vector<1x32xf32>
    %5 = vector.broadcast %3 : vector<8x1xf32> to vector<8x32xf32>
    %6 = vector.broadcast %4 : vector<1x32xf32> to vector<8x32xf32>
    %7 = arith.mulf %5, %6 : vector<8x32xf32>
    %c0_6 = arith.constant 0 : index
    %c0_7 = arith.constant 0 : index
    %8 = vector.load %arg3[%c0_6, %c0_7] : memref<1x32xf32, #tpu.memory_space<vmem>>, vector<1x32xf32>
    %9 = vector.broadcast %8 : vector<1x32xf32> to vector<8x32xf32>
    %10 = arith.addf %7, %9 : vector<8x32xf32>
    %c0_8 = arith.constant 0 : index
    %c0_9 = arith.constant 0 : index
    %11 = vector.load %arg4[%c0_8, %c0_9] : memref<8x32xf32, #tpu.memory_space<vmem>>, vector<8x32xf32>
    %12 = arith.addf %10, %11 : vector<8x32xf32>
    %c0_10 = arith.constant 0 : index
    %c0_11 = arith.constant 0 : index
    %c0_12 = arith.constant 0 : index
    %c0_13 = arith.constant 0 : index
    %13 = vector.load %arg5[%c0_10, %c0_11, %c0_12, %c0_13] : memref<2x3x32x64xf32, #tpu.memory_space<vmem>>, vector<1x3x32x64xf32>
    %14 = vector.shape_cast %13 : vector<1x3x32x64xf32> to vector<3x32x64xf32>
    %c0_14 = arith.constant 0 : index
    %c0_15 = arith.constant 0 : index
    %c0_16 = arith.constant 0 : index
    %15 = vector.load %arg6[%c0_14, %c0_15, %c0_16] : memref<2x1x64xf32, #tpu.memory_space<vmem>>, vector<1x1x64xf32>
    %16 = vector.shape_cast %15 : vector<1x1x64xf32> to vector<1x64xf32>
    %c1 = arith.constant 1 : index
    %c0_17 = arith.constant 0 : index
    %17 = vector.load %arg9[%c1, %c0_17] : memref<10x32xf32, #tpu.memory_space<vmem>>, vector<8x32xf32>
    tpu.vector_store %arg9[%c1, %c0_17], %12 {strides = array<i32>} : memref<10x32xf32, #tpu.memory_space<vmem>>, vector<8x32xf32>,
    %c0_18 = arith.constant 0 : index
    %c0_19 = arith.constant 0 : index
    %18 = vector.load %arg9[%c0_18, %c0_19] : memref<10x32xf32, #tpu.memory_space<vmem>>, vector<10x32xf32>
    %19 = vector.extract_strided_slice %18 {offsets = [0, 0], sizes = [8, 32], strides = [1, 1]} : vector<10x32xf32> to vector<8x32xf32>
    %20 = vector.extract_strided_slice %14 {offsets = [0, 0, 0], sizes = [1, 32, 64], strides = [1, 1, 1]} : vector<3x32x64xf32> to vector<1x32x64xf32>
    %21 = vector.shape_cast %20 : vector<1x32x64xf32> to vector<32x64xf32>
    %cst_20 = arith.constant dense<0.000000e+00> : vector<8x64xf32>
    %22 = tpu.matmul %19, %21, %cst_20 {dimension_numbers = #tpu.dot_dimension_numbers<[1], [0], [0], [1], [0, 0, 1, 1], [], []>} : vector<8x32xf32>, vector<32x64xf32>, vector<8x64xf32> -> vector<8x64xf32>
    %23 = vector.broadcast %16 : vector<1x64xf32> to vector<8x64xf32>
    %24 = arith.addf %23, %22 : vector<8x64xf32>
    %25 = vector.extract_strided_slice %18 {offsets = [1, 0], sizes = [8, 32], strides = [1, 1]} : vector<10x32xf32> to vector<8x32xf32>
    %26 = vector.extract_strided_slice %14 {offsets = [1, 0, 0], sizes = [1, 32, 64], strides = [1, 1, 1]} : vector<3x32x64xf32> to vector<1x32x64xf32>
    %27 = vector.shape_cast %26 : vector<1x32x64xf32> to vector<32x64xf32>
    %cst_21 = arith.constant dense<0.000000e+00> : vector<8x64xf32>
    %28 = tpu.matmul %25, %27, %cst_21 {dimension_numbers = #tpu.dot_dimension_numbers<[1], [0], [0], [1], [0, 0, 1, 1], [], []>} : vector<8x32xf32>, vector<32x64xf32>, vector<8x64xf32> -> vector<8x64xf32>
    %29 = arith.addf %24, %28 : vector<8x64xf32>
    %30 = vector.extract_strided_slice %18 {offsets = [2, 0], sizes = [8, 32], strides = [1, 1]} : vector<10x32xf32> to vector<8x32xf32>
    %31 = vector.extract_strided_slice %14 {offsets = [2, 0, 0], sizes = [1, 32, 64], strides = [1, 1, 1]} : vector<3x32x64xf32> to vector<1x32x64xf32>
    %32 = vector.shape_cast %31 : vector<1x32x64xf32> to vector<32x64xf32>
    %cst_22 = arith.constant dense<0.000000e+00> : vector<8x64xf32>
    %33 = tpu.matmul %30, %32, %cst_22 {dimension_numbers = #tpu.dot_dimension_numbers<[1], [0], [0], [1], [0, 0, 1, 1], [], []>} : vector<8x32xf32>, vector<32x64xf32>, vector<8x64xf32> -> vector<8x64xf32>
    %34 = arith.addf %29, %33 : vector<8x64xf32>
    %35 = vector.extract_strided_slice %34 {offsets = [0, 0], sizes = [8, 32], strides = [1, 1]} : vector<8x64xf32> to vector<8x32xf32>
    %36 = vector.extract_strided_slice %34 {offsets = [0, 32], sizes = [8, 32], strides = [1, 1]} : vector<8x64xf32> to vector<8x32xf32>
    %37 = arith.negf %36 : vector<8x32xf32>
    %38 = math.exp %37 : vector<8x32xf32>
    %cst_23 = arith.constant 1.000000e+00 : f32
    %39 = vector.broadcast %cst_23 : f32 to vector<8x32xf32>
    %40 = arith.addf %39, %38 : vector<8x32xf32>
    %41 = arith.divf %39, %40 : vector<8x32xf32>
    %42 = arith.mulf %35, %41 : vector<8x32xf32>
    %43 = arith.addf %42, %12 : vector<8x32xf32>
    %cst_24 = arith.constant 0.707106769 : f32
    %44 = vector.broadcast %cst_24 : f32 to vector<8x32xf32>
    %45 = arith.mulf %43, %44 : vector<8x32xf32>
    %c1_25 = arith.constant 1 : index
    %c0_26 = arith.constant 0 : index
    %c0_27 = arith.constant 0 : index
    %c0_28 = arith.constant 0 : index
    %46 = vector.load %arg5[%c1_25, %c0_26, %c0_27, %c0_28] : memref<2x3x32x64xf32, #tpu.memory_space<vmem>>, vector<1x3x32x64xf32>
    %47 = vector.shape_cast %46 : vector<1x3x32x64xf32> to vector<3x32x64xf32>
    %c1_29 = arith.constant 1 : index
    %c0_30 = arith.constant 0 : index
    %c0_31 = arith.constant 0 : index
    %48 = vector.load %arg6[%c1_29, %c0_30, %c0_31] : memref<2x1x64xf32, #tpu.memory_space<vmem>>, vector<1x1x64xf32>
    %49 = vector.shape_cast %48 : vector<1x1x64xf32> to vector<1x64xf32>
    %c1_32 = arith.constant 1 : index
    %c0_33 = arith.constant 0 : index
    %50 = vector.load %arg9[%c1_32, %c0_33] : memref<10x32xf32, #tpu.memory_space<vmem>>, vector<8x32xf32>
    tpu.vector_store %arg9[%c1_32, %c0_33], %45 {strides = array<i32>} : memref<10x32xf32, #tpu.memory_space<vmem>>, vector<8x32xf32>,
    %c0_34 = arith.constant 0 : index
    %c0_35 = arith.constant 0 : index
    %51 = vector.load %arg9[%c0_34, %c0_35] : memref<10x32xf32, #tpu.memory_space<vmem>>, vector<10x32xf32>
    %52 = vector.extract_strided_slice %51 {offsets = [0, 0], sizes = [8, 32], strides = [1, 1]} : vector<10x32xf32> to vector<8x32xf32>
    %53 = vector.extract_strided_slice %47 {offsets = [0, 0, 0], sizes = [1, 32, 64], strides = [1, 1, 1]} : vector<3x32x64xf32> to vector<1x32x64xf32>
    %54 = vector.shape_cast %53 : vector<1x32x64xf32> to vector<32x64xf32>
    %cst_36 = arith.constant dense<0.000000e+00> : vector<8x64xf32>
    %55 = tpu.matmul %52, %54, %cst_36 {dimension_numbers = #tpu.dot_dimension_numbers<[1], [0], [0], [1], [0, 0, 1, 1], [], []>} : vector<8x32xf32>, vector<32x64xf32>, vector<8x64xf32> -> vector<8x64xf32>
    %56 = vector.broadcast %49 : vector<1x64xf32> to vector<8x64xf32>
    %57 = arith.addf %56, %55 : vector<8x64xf32>
    %58 = vector.extract_strided_slice %51 {offsets = [1, 0], sizes = [8, 32], strides = [1, 1]} : vector<10x32xf32> to vector<8x32xf32>
    %59 = vector.extract_strided_slice %47 {offsets = [1, 0, 0], sizes = [1, 32, 64], strides = [1, 1, 1]} : vector<3x32x64xf32> to vector<1x32x64xf32>
    %60 = vector.shape_cast %59 : vector<1x32x64xf32> to vector<32x64xf32>
    %cst_37 = arith.constant dense<0.000000e+00> : vector<8x64xf32>
    %61 = tpu.matmul %58, %60, %cst_37 {dimension_numbers = #tpu.dot_dimension_numbers<[1], [0], [0], [1], [0, 0, 1, 1], [], []>} : vector<8x32xf32>, vector<32x64xf32>, vector<8x64xf32> -> vector<8x64xf32>
    %62 = arith.addf %57, %61 : vector<8x64xf32>
    %63 = vector.extract_strided_slice %51 {offsets = [2, 0], sizes = [8, 32], strides = [1, 1]} : vector<10x32xf32> to vector<8x32xf32>
    %64 = vector.extract_strided_slice %47 {offsets = [2, 0, 0], sizes = [1, 32, 64], strides = [1, 1, 1]} : vector<3x32x64xf32> to vector<1x32x64xf32>
    %65 = vector.shape_cast %64 : vector<1x32x64xf32> to vector<32x64xf32>
    %cst_38 = arith.constant dense<0.000000e+00> : vector<8x64xf32>
    %66 = tpu.matmul %63, %65, %cst_38 {dimension_numbers = #tpu.dot_dimension_numbers<[1], [0], [0], [1], [0, 0, 1, 1], [], []>} : vector<8x32xf32>, vector<32x64xf32>, vector<8x64xf32> -> vector<8x64xf32>
    %67 = arith.addf %62, %66 : vector<8x64xf32>
    %68 = vector.extract_strided_slice %67 {offsets = [0, 0], sizes = [8, 32], strides = [1, 1]} : vector<8x64xf32> to vector<8x32xf32>
    %69 = vector.extract_strided_slice %67 {offsets = [0, 32], sizes = [8, 32], strides = [1, 1]} : vector<8x64xf32> to vector<8x32xf32>
    %70 = arith.negf %69 : vector<8x32xf32>
    %71 = math.exp %70 : vector<8x32xf32>
    %cst_39 = arith.constant 1.000000e+00 : f32
    %72 = vector.broadcast %cst_39 : f32 to vector<8x32xf32>
    %73 = arith.addf %72, %71 : vector<8x32xf32>
    %74 = arith.divf %72, %73 : vector<8x32xf32>
    %75 = arith.mulf %68, %74 : vector<8x32xf32>
    %76 = arith.addf %75, %45 : vector<8x32xf32>
    %cst_40 = arith.constant 0.707106769 : f32
    %77 = vector.broadcast %cst_40 : f32 to vector<8x32xf32>
    %78 = arith.mulf %76, %77 : vector<8x32xf32>
    %c0_41 = arith.constant 0 : index
    %c0_42 = arith.constant 0 : index
    %c0_43 = arith.constant 0 : index
    %79 = vector.load %arg7[%c0_41, %c0_42, %c0_43] : memref<1x8x32xf32, #tpu.memory_space<vmem>>, vector<1x8x32xf32>
    %80 = vector.shape_cast %79 : vector<1x8x32xf32> to vector<8x32xf32>
    %81 = vector.shape_cast %78 : vector<8x32xf32> to vector<1x8x32xf32>
    tpu.vector_store %arg7[%c0_41, %c0_42, %c0_43], %81 {strides = array<i32>} : memref<1x8x32xf32, #tpu.memory_space<vmem>>, vector<1x8x32xf32>,
    %82 = arith.addf %78, %12 : vector<8x32xf32>
    %cst_44 = arith.constant 0.707106769 : f32
    %83 = vector.broadcast %cst_44 : f32 to vector<8x32xf32>
    %84 = arith.mulf %82, %83 : vector<8x32xf32>
    %c0_45 = arith.constant 0 : index
    %c0_46 = arith.constant 0 : index
    %c0_47 = arith.constant 0 : index
    %85 = vector.load %arg8[%c0_45, %c0_46, %c0_47] : memref<1x8x32xf32, #tpu.memory_space<vmem>>, vector<1x8x32xf32>
    %86 = vector.shape_cast %85 : vector<1x8x32xf32> to vector<8x32xf32>
    %87 = vector.shape_cast %84 : vector<8x32xf32> to vector<1x8x32xf32>
    tpu.vector_store %arg8[%c0_45, %c0_46, %c0_47], %87 {strides = array<i32>} : memref<1x8x32xf32, #tpu.memory_space<vmem>>, vector<1x8x32xf32>,
    return
  }
  func.func @transform_0(%arg0: i32) -> (i32, i32, i32) {
    %c0_i32 = arith.constant 0 : i32
    %c0_i32_0 = arith.constant 0 : i32
    %c0_i32_1 = arith.constant 0 : i32
    return %arg0, %c0_i32, %c0_i32_0 : i32, i32, i32
  }
  func.func @transform_1(%arg0: i32) -> (i32, i32) {
    %c0_i32 = arith.constant 0 : i32
    %c0_i32_0 = arith.constant 0 : i32
    %c0_i32_1 = arith.constant 0 : i32
    return %c0_i32, %c0_i32_0 : i32, i32
  }
  func.func @transform_2(%arg0: i32) -> (i32, i32) {
    %c0_i32 = arith.constant 0 : i32
    %c0_i32_0 = arith.constant 0 : i32
    %c0_i32_1 = arith.constant 0 : i32
    return %c0_i32, %c0_i32_0 : i32, i32
  }
  func.func @transform_3(%arg0: i32) -> (i32, i32) {
    %c0_i32 = arith.constant 0 : i32
    %c0_i32_0 = arith.constant 0 : i32
    %c0_i32_1 = arith.constant 0 : i32
    return %c0_i32, %c0_i32_0 : i32, i32
  }
  func.func @transform_4(%arg0: i32) -> (i32, i32, i32, i32) {
    %c0_i32 = arith.constant 0 : i32
    %c0_i32_0 = arith.constant 0 : i32
    %c0_i32_1 = arith.constant 0 : i32
    %c0_i32_2 = arith.constant 0 : i32
    %c0_i32_3 = arith.constant 0 : i32
    return %c0_i32, %c0_i32_0, %c0_i32_1, %c0_i32_2 : i32, i32, i32, i32
  }
  func.func @transform_5(%arg0: i32) -> (i32, i32, i32) {
    %c0_i32 = arith.constant 0 : i32
    %c0_i32_0 = arith.constant 0 : i32
    %c0_i32_1 = arith.constant 0 : i32
    %c0_i32_2 = arith.constant 0 : i32
    return %c0_i32, %c0_i32_0, %c0_i32_1 : i32, i32, i32
  }
  func.func @transform_6(%arg0: i32) -> (i32, i32, i32) {
    %c0_i32 = arith.constant 0 : i32
    %c0_i32_0 = arith.constant 0 : i32
    %c0_i32_1 = arith.constant 0 : i32
    return %arg0, %c0_i32, %c0_i32_0 : i32, i32, i32
  }
  func.func @transform_7(%arg0: i32) -> (i32, i32, i32) {
    %c0_i32 = arith.constant 0 : i32
    %c0_i32_0 = arith.constant 0 : i32
    %c0_i32_1 = arith.constant 0 : i32
    return %arg0, %c0_i32, %c0_i32_0 : i32, i32, i32
  }
}

module attributes {stable_mosaic.version = 11 : i64} {
  func.func @_decoder_kernel(%arg0: i32, %arg1: memref<1x8x1xf32, #tpu.memory_space<vmem>>, %arg2: memref<1x8x32xf32, #tpu.memory_space<vmem>>, %arg3: memref<1x8x32xf32, #tpu.memory_space<vmem>>, %arg4: memref<1x32xf32, #tpu.memory_space<vmem>>, %arg5: memref<1x32xf32, #tpu.memory_space<vmem>>, %arg6: memref<8x32xf32, #tpu.memory_space<vmem>>, %arg7: memref<2x3x32x64xf32, #tpu.memory_space<vmem>>, %arg8: memref<2x1x64xf32, #tpu.memory_space<vmem>>, %arg9: memref<32x32xf32, #tpu.memory_space<vmem>>, %arg10: memref<1x32xf32, #tpu.memory_space<vmem>>, %arg11: memref<32x32xf32, #tpu.memory_space<vmem>>, %arg12: memref<1x32xf32, #tpu.memory_space<vmem>>, %arg13: memref<1x32xf32, #tpu.memory_space<vmem>>, %arg14: memref<1x1xf32, #tpu.memory_space<vmem>>, %arg15: memref<1x8x1xf32, #tpu.memory_space<vmem>>, %arg16: memref<10x32xf32, #tpu.memory_space<vmem>>) attributes {dimension_semantics = [#tpu.dimension_semantics<parallel>], iteration_bounds = array<i64: 2>, scalar_prefetch = 0 : i64, scratch_operands = 1 : i64, tpu.core_type = #tpu.core_type<tc>, window_params = [{transform_indices = @transform_0, window_bounds = array<i64: 1, 8, 1>}, {transform_indices = @transform_1, window_bounds = array<i64: 1, 8, 32>}, {transform_indices = @transform_2, window_bounds = array<i64: 1, 8, 32>}, {pipeline_mode = #tpu.pipeline_mode<synchronous>, transform_indices = @transform_3, window_bounds = array<i64: 1, 32>}, {pipeline_mode = #tpu.pipeline_mode<synchronous>, transform_indices = @transform_4, window_bounds = array<i64: 1, 32>}, {pipeline_mode = #tpu.pipeline_mode<synchronous>, transform_indices = @transform_5, window_bounds = array<i64: 8, 32>}, {pipeline_mode = #tpu.pipeline_mode<synchronous>, transform_indices = @transform_6, window_bounds = array<i64: 2, 3, 32, 64>}, {pipeline_mode = #tpu.pipeline_mode<synchronous>, transform_indices = @transform_7, window_bounds = array<i64: 2, 1, 64>}, {pipeline_mode = #tpu.pipeline_mode<synchronous>, transform_indices = @transform_8, window_bounds = array<i64: 32, 32>}, {pipeline_mode = #tpu.pipeline_mode<synchronous>, transform_indices = @transform_9, window_bounds = array<i64: 1, 32>}, {pipeline_mode = #tpu.pipeline_mode<synchronous>, transform_indices = @transform_10, window_bounds = array<i64: 32, 32>}, {pipeline_mode = #tpu.pipeline_mode<synchronous>, transform_indices = @transform_11, window_bounds = array<i64: 1, 32>}, {pipeline_mode = #tpu.pipeline_mode<synchronous>, transform_indices = @transform_12, window_bounds = array<i64: 1, 32>}, {pipeline_mode = #tpu.pipeline_mode<synchronous>, transform_indices = @transform_13, window_bounds = array<i64: 1, 1>}, {transform_indices = @transform_14, window_bounds = array<i64: 1, 8, 1>}]} {
    %cst = arith.constant 0.000000e+00 : f32
    %0 = vector.broadcast %cst : f32 to vector<10x32xf32>
    %c0 = arith.constant 0 : index
    %c0_0 = arith.constant 0 : index
    %1 = vector.load %arg16[%c0, %c0_0] : memref<10x32xf32, #tpu.memory_space<vmem>>, vector<10x32xf32>
    tpu.vector_store %arg16[%c0, %c0_0], %0 {strides = array<i32>} : memref<10x32xf32, #tpu.memory_space<vmem>>, vector<10x32xf32>,
    %c0_1 = arith.constant 0 : index
    %c0_2 = arith.constant 0 : index
    %c0_3 = arith.constant 0 : index
    %2 = vector.load %arg1[%c0_1, %c0_2, %c0_3] : memref<1x8x1xf32, #tpu.memory_space<vmem>>, vector<1x8x1xf32>
    %3 = vector.shape_cast %2 : vector<1x8x1xf32> to vector<8x1xf32>
    %c0_4 = arith.constant 0 : index
    %c0_5 = arith.constant 0 : index
    %4 = vector.load %arg4[%c0_4, %c0_5] : memref<1x32xf32, #tpu.memory_space<vmem>>, vector<1x32xf32>
    %5 = vector.broadcast %3 : vector<8x1xf32> to vector<8x32xf32>
    %6 = vector.broadcast %4 : vector<1x32xf32> to vector<8x32xf32>
    %7 = arith.mulf %5, %6 : vector<8x32xf32>
    %c0_6 = arith.constant 0 : index
    %c0_7 = arith.constant 0 : index
    %8 = vector.load %arg5[%c0_6, %c0_7] : memref<1x32xf32, #tpu.memory_space<vmem>>, vector<1x32xf32>
    %9 = vector.broadcast %8 : vector<1x32xf32> to vector<8x32xf32>
    %10 = arith.addf %7, %9 : vector<8x32xf32>
    %c0_8 = arith.constant 0 : index
    %c0_9 = arith.constant 0 : index
    %11 = vector.load %arg6[%c0_8, %c0_9] : memref<8x32xf32, #tpu.memory_space<vmem>>, vector<8x32xf32>
    %12 = arith.addf %10, %11 : vector<8x32xf32>
    %c0_10 = arith.constant 0 : index
    %c0_11 = arith.constant 0 : index
    %c0_12 = arith.constant 0 : index
    %13 = vector.load %arg2[%c0_10, %c0_11, %c0_12] : memref<1x8x32xf32, #tpu.memory_space<vmem>>, vector<1x8x32xf32>
    %14 = vector.shape_cast %13 : vector<1x8x32xf32> to vector<8x32xf32>
    %c0_13 = arith.constant 0 : index
    %c0_14 = arith.constant 0 : index
    %c0_15 = arith.constant 0 : index
    %15 = vector.load %arg3[%c0_13, %c0_14, %c0_15] : memref<1x8x32xf32, #tpu.memory_space<vmem>>, vector<1x8x32xf32>
    %16 = vector.shape_cast %15 : vector<1x8x32xf32> to vector<8x32xf32>
    %c0_16 = arith.constant 0 : index
    %c0_17 = arith.constant 0 : index
    %c0_18 = arith.constant 0 : index
    %c0_19 = arith.constant 0 : index
    %17 = vector.load %arg7[%c0_16, %c0_17, %c0_18, %c0_19] : memref<2x3x32x64xf32, #tpu.memory_space<vmem>>, vector<1x3x32x64xf32>
    %18 = vector.shape_cast %17 : vector<1x3x32x64xf32> to vector<3x32x64xf32>
    %c0_20 = arith.constant 0 : index
    %c0_21 = arith.constant 0 : index
    %c0_22 = arith.constant 0 : index
    %19 = vector.load %arg8[%c0_20, %c0_21, %c0_22] : memref<2x1x64xf32, #tpu.memory_space<vmem>>, vector<1x1x64xf32>
    %20 = vector.shape_cast %19 : vector<1x1x64xf32> to vector<1x64xf32>
    %c2 = arith.constant 2 : index
    %c0_23 = arith.constant 0 : index
    %21 = vector.load %arg16[%c2, %c0_23] : memref<10x32xf32, #tpu.memory_space<vmem>>, vector<8x32xf32>
    tpu.vector_store %arg16[%c2, %c0_23], %12 {strides = array<i32>} : memref<10x32xf32, #tpu.memory_space<vmem>>, vector<8x32xf32>,
    %c0_24 = arith.constant 0 : index
    %c0_25 = arith.constant 0 : index
    %22 = vector.load %arg16[%c0_24, %c0_25] : memref<10x32xf32, #tpu.memory_space<vmem>>, vector<10x32xf32>
    %23 = vector.extract_strided_slice %22 {offsets = [0, 0], sizes = [8, 32], strides = [1, 1]} : vector<10x32xf32> to vector<8x32xf32>
    %24 = vector.extract_strided_slice %18 {offsets = [0, 0, 0], sizes = [1, 32, 64], strides = [1, 1, 1]} : vector<3x32x64xf32> to vector<1x32x64xf32>
    %25 = vector.shape_cast %24 : vector<1x32x64xf32> to vector<32x64xf32>
    %cst_26 = arith.constant dense<0.000000e+00> : vector<8x64xf32>
    %26 = tpu.matmul %23, %25, %cst_26 {dimension_numbers = #tpu.dot_dimension_numbers<[1], [0], [0], [1], [0, 0, 1, 1], [], []>} : vector<8x32xf32>, vector<32x64xf32>, vector<8x64xf32> -> vector<8x64xf32>
    %27 = vector.broadcast %20 : vector<1x64xf32> to vector<8x64xf32>
    %28 = arith.addf %27, %26 : vector<8x64xf32>
    %29 = vector.extract_strided_slice %22 {offsets = [1, 0], sizes = [8, 32], strides = [1, 1]} : vector<10x32xf32> to vector<8x32xf32>
    %30 = vector.extract_strided_slice %18 {offsets = [1, 0, 0], sizes = [1, 32, 64], strides = [1, 1, 1]} : vector<3x32x64xf32> to vector<1x32x64xf32>
    %31 = vector.shape_cast %30 : vector<1x32x64xf32> to vector<32x64xf32>
    %cst_27 = arith.constant dense<0.000000e+00> : vector<8x64xf32>
    %32 = tpu.matmul %29, %31, %cst_27 {dimension_numbers = #tpu.dot_dimension_numbers<[1], [0], [0], [1], [0, 0, 1, 1], [], []>} : vector<8x32xf32>, vector<32x64xf32>, vector<8x64xf32> -> vector<8x64xf32>
    %33 = arith.addf %28, %32 : vector<8x64xf32>
    %34 = vector.extract_strided_slice %22 {offsets = [2, 0], sizes = [8, 32], strides = [1, 1]} : vector<10x32xf32> to vector<8x32xf32>
    %35 = vector.extract_strided_slice %18 {offsets = [2, 0, 0], sizes = [1, 32, 64], strides = [1, 1, 1]} : vector<3x32x64xf32> to vector<1x32x64xf32>
    %36 = vector.shape_cast %35 : vector<1x32x64xf32> to vector<32x64xf32>
    %cst_28 = arith.constant dense<0.000000e+00> : vector<8x64xf32>
    %37 = tpu.matmul %34, %36, %cst_28 {dimension_numbers = #tpu.dot_dimension_numbers<[1], [0], [0], [1], [0, 0, 1, 1], [], []>} : vector<8x32xf32>, vector<32x64xf32>, vector<8x64xf32> -> vector<8x64xf32>
    %38 = arith.addf %33, %37 : vector<8x64xf32>
    %39 = vector.extract_strided_slice %38 {offsets = [0, 0], sizes = [8, 32], strides = [1, 1]} : vector<8x64xf32> to vector<8x32xf32>
    %40 = vector.extract_strided_slice %38 {offsets = [0, 32], sizes = [8, 32], strides = [1, 1]} : vector<8x64xf32> to vector<8x32xf32>
    %41 = arith.negf %40 : vector<8x32xf32>
    %42 = math.exp %41 : vector<8x32xf32>
    %cst_29 = arith.constant 1.000000e+00 : f32
    %43 = vector.broadcast %cst_29 : f32 to vector<8x32xf32>
    %44 = arith.addf %43, %42 : vector<8x32xf32>
    %45 = arith.divf %43, %44 : vector<8x32xf32>
    %46 = arith.mulf %39, %45 : vector<8x32xf32>
    %c0_30 = arith.constant 0 : index
    %c0_31 = arith.constant 0 : index
    %47 = vector.load %arg9[%c0_30, %c0_31] : memref<32x32xf32, #tpu.memory_space<vmem>>, vector<32x32xf32>
    %cst_32 = arith.constant dense<0.000000e+00> : vector<8x32xf32>
    %48 = tpu.matmul %46, %47, %cst_32 {dimension_numbers = #tpu.dot_dimension_numbers<[1], [0], [0], [1], [0, 0, 1, 1], [], []>} : vector<8x32xf32>, vector<32x32xf32>, vector<8x32xf32> -> vector<8x32xf32>
    %c0_33 = arith.constant 0 : index
    %c0_34 = arith.constant 0 : index
    %49 = vector.load %arg10[%c0_33, %c0_34] : memref<1x32xf32, #tpu.memory_space<vmem>>, vector<1x32xf32>
    %50 = vector.broadcast %49 : vector<1x32xf32> to vector<8x32xf32>
    %51 = arith.addf %48, %50 : vector<8x32xf32>
    %52 = arith.addf %51, %12 : vector<8x32xf32>
    %cst_35 = arith.constant 0.707106769 : f32
    %53 = vector.broadcast %cst_35 : f32 to vector<8x32xf32>
    %54 = arith.mulf %52, %53 : vector<8x32xf32>
    %cst_36 = arith.constant dense<0.000000e+00> : vector<8x8xf32>
    %55 = tpu.matmul %54, %14, %cst_36 {dimension_numbers = #tpu.dot_dimension_numbers<[1], [1], [0], [0], [0, 0, 1, 0], [], []>} : vector<8x32xf32>, vector<8x32xf32>, vector<8x8xf32> -> vector<8x8xf32>
    %cst_37 = arith.constant dense<0xFF800000> : vector<8xf32>
    %56 = vector.multi_reduction <maximumf>, %55, %cst_37 [1] : vector<8x8xf32> to vector<8xf32>
    %57 = vector.shape_cast %56 : vector<8xf32> to vector<8x1xf32>
    %58 = vector.broadcast %57 : vector<8x1xf32> to vector<8x8xf32>
    %59 = arith.subf %55, %58 : vector<8x8xf32>
    %60 = math.exp %59 : vector<8x8xf32>
    %cst_38 = arith.constant dense<0.000000e+00> : vector<8xf32>
    %61 = vector.multi_reduction <add>, %60, %cst_38 [1] : vector<8x8xf32> to vector<8xf32>
    %62 = vector.shape_cast %61 : vector<8xf32> to vector<8x1xf32>
    %63 = vector.broadcast %62 : vector<8x1xf32> to vector<8x8xf32>
    %64 = arith.divf %60, %63 : vector<8x8xf32>
    %cst_39 = arith.constant dense<0.000000e+00> : vector<8x32xf32>
    %65 = tpu.matmul %64, %16, %cst_39 {dimension_numbers = #tpu.dot_dimension_numbers<[1], [0], [0], [1], [0, 0, 1, 1], [], []>} : vector<8x8xf32>, vector<8x32xf32>, vector<8x32xf32> -> vector<8x32xf32>
    %c0_40 = arith.constant 0 : index
    %c0_41 = arith.constant 0 : index
    %66 = vector.load %arg11[%c0_40, %c0_41] : memref<32x32xf32, #tpu.memory_space<vmem>>, vector<32x32xf32>
    %cst_42 = arith.constant dense<0.000000e+00> : vector<8x32xf32>
    %67 = tpu.matmul %65, %66, %cst_42 {dimension_numbers = #tpu.dot_dimension_numbers<[1], [0], [0], [1], [0, 0, 1, 1], [], []>} : vector<8x32xf32>, vector<32x32xf32>, vector<8x32xf32> -> vector<8x32xf32>
    %c0_43 = arith.constant 0 : index
    %c0_44 = arith.constant 0 : index
    %68 = vector.load %arg12[%c0_43, %c0_44] : memref<1x32xf32, #tpu.memory_space<vmem>>, vector<1x32xf32>
    %69 = vector.broadcast %68 : vector<1x32xf32> to vector<8x32xf32>
    %70 = arith.addf %67, %69 : vector<8x32xf32>
    %71 = arith.addf %46, %70 : vector<8x32xf32>
    %cst_45 = arith.constant 0.707106769 : f32
    %72 = vector.broadcast %cst_45 : f32 to vector<8x32xf32>
    %73 = arith.mulf %71, %72 : vector<8x32xf32>
    %74 = arith.addf %73, %12 : vector<8x32xf32>
    %cst_46 = arith.constant 0.707106769 : f32
    %75 = vector.broadcast %cst_46 : f32 to vector<8x32xf32>
    %76 = arith.mulf %74, %75 : vector<8x32xf32>
    %c1 = arith.constant 1 : index
    %c0_47 = arith.constant 0 : index
    %c0_48 = arith.constant 0 : index
    %c0_49 = arith.constant 0 : index
    %77 = vector.load %arg7[%c1, %c0_47, %c0_48, %c0_49] : memref<2x3x32x64xf32, #tpu.memory_space<vmem>>, vector<1x3x32x64xf32>
    %78 = vector.shape_cast %77 : vector<1x3x32x64xf32> to vector<3x32x64xf32>
    %c1_50 = arith.constant 1 : index
    %c0_51 = arith.constant 0 : index
    %c0_52 = arith.constant 0 : index
    %79 = vector.load %arg8[%c1_50, %c0_51, %c0_52] : memref<2x1x64xf32, #tpu.memory_space<vmem>>, vector<1x1x64xf32>
    %80 = vector.shape_cast %79 : vector<1x1x64xf32> to vector<1x64xf32>
    %c2_53 = arith.constant 2 : index
    %c0_54 = arith.constant 0 : index
    %81 = vector.load %arg16[%c2_53, %c0_54] : memref<10x32xf32, #tpu.memory_space<vmem>>, vector<8x32xf32>
    tpu.vector_store %arg16[%c2_53, %c0_54], %76 {strides = array<i32>} : memref<10x32xf32, #tpu.memory_space<vmem>>, vector<8x32xf32>,
    %c0_55 = arith.constant 0 : index
    %c0_56 = arith.constant 0 : index
    %82 = vector.load %arg16[%c0_55, %c0_56] : memref<10x32xf32, #tpu.memory_space<vmem>>, vector<10x32xf32>
    %83 = vector.extract_strided_slice %82 {offsets = [0, 0], sizes = [8, 32], strides = [1, 1]} : vector<10x32xf32> to vector<8x32xf32>
    %84 = vector.extract_strided_slice %78 {offsets = [0, 0, 0], sizes = [1, 32, 64], strides = [1, 1, 1]} : vector<3x32x64xf32> to vector<1x32x64xf32>
    %85 = vector.shape_cast %84 : vector<1x32x64xf32> to vector<32x64xf32>
    %cst_57 = arith.constant dense<0.000000e+00> : vector<8x64xf32>
    %86 = tpu.matmul %83, %85, %cst_57 {dimension_numbers = #tpu.dot_dimension_numbers<[1], [0], [0], [1], [0, 0, 1, 1], [], []>} : vector<8x32xf32>, vector<32x64xf32>, vector<8x64xf32> -> vector<8x64xf32>
    %87 = vector.broadcast %80 : vector<1x64xf32> to vector<8x64xf32>
    %88 = arith.addf %87, %86 : vector<8x64xf32>
    %89 = vector.extract_strided_slice %82 {offsets = [1, 0], sizes = [8, 32], strides = [1, 1]} : vector<10x32xf32> to vector<8x32xf32>
    %90 = vector.extract_strided_slice %78 {offsets = [1, 0, 0], sizes = [1, 32, 64], strides = [1, 1, 1]} : vector<3x32x64xf32> to vector<1x32x64xf32>
    %91 = vector.shape_cast %90 : vector<1x32x64xf32> to vector<32x64xf32>
    %cst_58 = arith.constant dense<0.000000e+00> : vector<8x64xf32>
    %92 = tpu.matmul %89, %91, %cst_58 {dimension_numbers = #tpu.dot_dimension_numbers<[1], [0], [0], [1], [0, 0, 1, 1], [], []>} : vector<8x32xf32>, vector<32x64xf32>, vector<8x64xf32> -> vector<8x64xf32>
    %93 = arith.addf %88, %92 : vector<8x64xf32>
    %94 = vector.extract_strided_slice %82 {offsets = [2, 0], sizes = [8, 32], strides = [1, 1]} : vector<10x32xf32> to vector<8x32xf32>
    %95 = vector.extract_strided_slice %78 {offsets = [2, 0, 0], sizes = [1, 32, 64], strides = [1, 1, 1]} : vector<3x32x64xf32> to vector<1x32x64xf32>
    %96 = vector.shape_cast %95 : vector<1x32x64xf32> to vector<32x64xf32>
    %cst_59 = arith.constant dense<0.000000e+00> : vector<8x64xf32>
    %97 = tpu.matmul %94, %96, %cst_59 {dimension_numbers = #tpu.dot_dimension_numbers<[1], [0], [0], [1], [0, 0, 1, 1], [], []>} : vector<8x32xf32>, vector<32x64xf32>, vector<8x64xf32> -> vector<8x64xf32>
    %98 = arith.addf %93, %97 : vector<8x64xf32>
    %99 = vector.extract_strided_slice %98 {offsets = [0, 0], sizes = [8, 32], strides = [1, 1]} : vector<8x64xf32> to vector<8x32xf32>
    %100 = vector.extract_strided_slice %98 {offsets = [0, 32], sizes = [8, 32], strides = [1, 1]} : vector<8x64xf32> to vector<8x32xf32>
    %101 = arith.negf %100 : vector<8x32xf32>
    %102 = math.exp %101 : vector<8x32xf32>
    %cst_60 = arith.constant 1.000000e+00 : f32
    %103 = vector.broadcast %cst_60 : f32 to vector<8x32xf32>
    %104 = arith.addf %103, %102 : vector<8x32xf32>
    %105 = arith.divf %103, %104 : vector<8x32xf32>
    %106 = arith.mulf %99, %105 : vector<8x32xf32>
    %c0_61 = arith.constant 0 : index
    %c0_62 = arith.constant 0 : index
    %107 = vector.load %arg9[%c0_61, %c0_62] : memref<32x32xf32, #tpu.memory_space<vmem>>, vector<32x32xf32>
    %cst_63 = arith.constant dense<0.000000e+00> : vector<8x32xf32>
    %108 = tpu.matmul %106, %107, %cst_63 {dimension_numbers = #tpu.dot_dimension_numbers<[1], [0], [0], [1], [0, 0, 1, 1], [], []>} : vector<8x32xf32>, vector<32x32xf32>, vector<8x32xf32> -> vector<8x32xf32>
    %c0_64 = arith.constant 0 : index
    %c0_65 = arith.constant 0 : index
    %109 = vector.load %arg10[%c0_64, %c0_65] : memref<1x32xf32, #tpu.memory_space<vmem>>, vector<1x32xf32>
    %110 = vector.broadcast %109 : vector<1x32xf32> to vector<8x32xf32>
    %111 = arith.addf %108, %110 : vector<8x32xf32>
    %112 = arith.addf %111, %12 : vector<8x32xf32>
    %cst_66 = arith.constant 0.707106769 : f32
    %113 = vector.broadcast %cst_66 : f32 to vector<8x32xf32>
    %114 = arith.mulf %112, %113 : vector<8x32xf32>
    %cst_67 = arith.constant dense<0.000000e+00> : vector<8x8xf32>
    %115 = tpu.matmul %114, %14, %cst_67 {dimension_numbers = #tpu.dot_dimension_numbers<[1], [1], [0], [0], [0, 0, 1, 0], [], []>} : vector<8x32xf32>, vector<8x32xf32>, vector<8x8xf32> -> vector<8x8xf32>
    %cst_68 = arith.constant dense<0xFF800000> : vector<8xf32>
    %116 = vector.multi_reduction <maximumf>, %115, %cst_68 [1] : vector<8x8xf32> to vector<8xf32>
    %117 = vector.shape_cast %116 : vector<8xf32> to vector<8x1xf32>
    %118 = vector.broadcast %117 : vector<8x1xf32> to vector<8x8xf32>
    %119 = arith.subf %115, %118 : vector<8x8xf32>
    %120 = math.exp %119 : vector<8x8xf32>
    %cst_69 = arith.constant dense<0.000000e+00> : vector<8xf32>
    %121 = vector.multi_reduction <add>, %120, %cst_69 [1] : vector<8x8xf32> to vector<8xf32>
    %122 = vector.shape_cast %121 : vector<8xf32> to vector<8x1xf32>
    %123 = vector.broadcast %122 : vector<8x1xf32> to vector<8x8xf32>
    %124 = arith.divf %120, %123 : vector<8x8xf32>
    %cst_70 = arith.constant dense<0.000000e+00> : vector<8x32xf32>
    %125 = tpu.matmul %124, %16, %cst_70 {dimension_numbers = #tpu.dot_dimension_numbers<[1], [0], [0], [1], [0, 0, 1, 1], [], []>} : vector<8x8xf32>, vector<8x32xf32>, vector<8x32xf32> -> vector<8x32xf32>
    %c0_71 = arith.constant 0 : index
    %c0_72 = arith.constant 0 : index
    %126 = vector.load %arg11[%c0_71, %c0_72] : memref<32x32xf32, #tpu.memory_space<vmem>>, vector<32x32xf32>
    %cst_73 = arith.constant dense<0.000000e+00> : vector<8x32xf32>
    %127 = tpu.matmul %125, %126, %cst_73 {dimension_numbers = #tpu.dot_dimension_numbers<[1], [0], [0], [1], [0, 0, 1, 1], [], []>} : vector<8x32xf32>, vector<32x32xf32>, vector<8x32xf32> -> vector<8x32xf32>
    %c0_74 = arith.constant 0 : index
    %c0_75 = arith.constant 0 : index
    %128 = vector.load %arg12[%c0_74, %c0_75] : memref<1x32xf32, #tpu.memory_space<vmem>>, vector<1x32xf32>
    %129 = vector.broadcast %128 : vector<1x32xf32> to vector<8x32xf32>
    %130 = arith.addf %127, %129 : vector<8x32xf32>
    %131 = arith.addf %106, %130 : vector<8x32xf32>
    %cst_76 = arith.constant 0.707106769 : f32
    %132 = vector.broadcast %cst_76 : f32 to vector<8x32xf32>
    %133 = arith.mulf %131, %132 : vector<8x32xf32>
    %134 = arith.addf %133, %76 : vector<8x32xf32>
    %cst_77 = arith.constant 0.707106769 : f32
    %135 = vector.broadcast %cst_77 : f32 to vector<8x32xf32>
    %136 = arith.mulf %134, %135 : vector<8x32xf32>
    %c0_78 = arith.constant 0 : index
    %c0_79 = arith.constant 0 : index
    %137 = vector.load %arg13[%c0_78, %c0_79] : memref<1x32xf32, #tpu.memory_space<vmem>>, vector<1x32xf32>
    %138 = vector.broadcast %137 : vector<1x32xf32> to vector<8x32xf32>
    %139 = arith.mulf %136, %138 : vector<8x32xf32>
    %cst_80 = arith.constant dense<0.000000e+00> : vector<8xf32>
    %140 = vector.multi_reduction <add>, %139, %cst_80 [1] : vector<8x32xf32> to vector<8xf32>
    %141 = vector.shape_cast %140 : vector<8xf32> to vector<8x1xf32>
    %c0_81 = arith.constant 0 : index
    %c0_82 = arith.constant 0 : index
    %142 = vector.load %arg14[%c0_81, %c0_82] : memref<1x1xf32, #tpu.memory_space<vmem>>, vector<1x1xf32>
    %143 = vector.broadcast %142 : vector<1x1xf32> to vector<8x1xf32>
    %144 = arith.addf %141, %143 : vector<8x1xf32>
    %c0_83 = arith.constant 0 : index
    %c0_84 = arith.constant 0 : index
    %c0_85 = arith.constant 0 : index
    %145 = vector.load %arg15[%c0_83, %c0_84, %c0_85] : memref<1x8x1xf32, #tpu.memory_space<vmem>>, vector<1x8x1xf32>
    %146 = vector.shape_cast %145 : vector<1x8x1xf32> to vector<8x1xf32>
    %147 = vector.shape_cast %144 : vector<8x1xf32> to vector<1x8x1xf32>
    tpu.vector_store %arg15[%c0_83, %c0_84, %c0_85], %147 {strides = array<i32>} : memref<1x8x1xf32, #tpu.memory_space<vmem>>, vector<1x8x1xf32>,
    return
  }
  func.func @transform_0(%arg0: i32) -> (i32, i32, i32) {
    %c0_i32 = arith.constant 0 : i32
    %c0_i32_0 = arith.constant 0 : i32
    %c0_i32_1 = arith.constant 0 : i32
    return %arg0, %c0_i32, %c0_i32_0 : i32, i32, i32
  }
  func.func @transform_1(%arg0: i32) -> (i32, i32, i32) {
    %c0_i32 = arith.constant 0 : i32
    %c0_i32_0 = arith.constant 0 : i32
    %c0_i32_1 = arith.constant 0 : i32
    return %arg0, %c0_i32, %c0_i32_0 : i32, i32, i32
  }
  func.func @transform_2(%arg0: i32) -> (i32, i32, i32) {
    %c0_i32 = arith.constant 0 : i32
    %c0_i32_0 = arith.constant 0 : i32
    %c0_i32_1 = arith.constant 0 : i32
    return %arg0, %c0_i32, %c0_i32_0 : i32, i32, i32
  }
  func.func @transform_3(%arg0: i32) -> (i32, i32) {
    %c0_i32 = arith.constant 0 : i32
    %c0_i32_0 = arith.constant 0 : i32
    %c0_i32_1 = arith.constant 0 : i32
    return %c0_i32, %c0_i32_0 : i32, i32
  }
  func.func @transform_4(%arg0: i32) -> (i32, i32) {
    %c0_i32 = arith.constant 0 : i32
    %c0_i32_0 = arith.constant 0 : i32
    %c0_i32_1 = arith.constant 0 : i32
    return %c0_i32, %c0_i32_0 : i32, i32
  }
  func.func @transform_5(%arg0: i32) -> (i32, i32) {
    %c0_i32 = arith.constant 0 : i32
    %c0_i32_0 = arith.constant 0 : i32
    %c0_i32_1 = arith.constant 0 : i32
    return %c0_i32, %c0_i32_0 : i32, i32
  }
  func.func @transform_6(%arg0: i32) -> (i32, i32, i32, i32) {
    %c0_i32 = arith.constant 0 : i32
    %c0_i32_0 = arith.constant 0 : i32
    %c0_i32_1 = arith.constant 0 : i32
    %c0_i32_2 = arith.constant 0 : i32
    %c0_i32_3 = arith.constant 0 : i32
    return %c0_i32, %c0_i32_0, %c0_i32_1, %c0_i32_2 : i32, i32, i32, i32
  }
  func.func @transform_7(%arg0: i32) -> (i32, i32, i32) {
    %c0_i32 = arith.constant 0 : i32
    %c0_i32_0 = arith.constant 0 : i32
    %c0_i32_1 = arith.constant 0 : i32
    %c0_i32_2 = arith.constant 0 : i32
    return %c0_i32, %c0_i32_0, %c0_i32_1 : i32, i32, i32
  }
  func.func @transform_8(%arg0: i32) -> (i32, i32) {
    %c0_i32 = arith.constant 0 : i32
    %c0_i32_0 = arith.constant 0 : i32
    %c0_i32_1 = arith.constant 0 : i32
    return %c0_i32, %c0_i32_0 : i32, i32
  }
  func.func @transform_9(%arg0: i32) -> (i32, i32) {
    %c0_i32 = arith.constant 0 : i32
    %c0_i32_0 = arith.constant 0 : i32
    %c0_i32_1 = arith.constant 0 : i32
    return %c0_i32, %c0_i32_0 : i32, i32
  }
  func.func @transform_10(%arg0: i32) -> (i32, i32) {
    %c0_i32 = arith.constant 0 : i32
    %c0_i32_0 = arith.constant 0 : i32
    %c0_i32_1 = arith.constant 0 : i32
    return %c0_i32, %c0_i32_0 : i32, i32
  }
  func.func @transform_11(%arg0: i32) -> (i32, i32) {
    %c0_i32 = arith.constant 0 : i32
    %c0_i32_0 = arith.constant 0 : i32
    %c0_i32_1 = arith.constant 0 : i32
    return %c0_i32, %c0_i32_0 : i32, i32
  }
  func.func @transform_12(%arg0: i32) -> (i32, i32) {
    %c0_i32 = arith.constant 0 : i32
    %c0_i32_0 = arith.constant 0 : i32
    %c0_i32_1 = arith.constant 0 : i32
    return %c0_i32, %c0_i32_0 : i32, i32
  }
  func.func @transform_13(%arg0: i32) -> (i32, i32) {
    %c0_i32 = arith.constant 0 : i32
    %c0_i32_0 = arith.constant 0 : i32
    %c0_i32_1 = arith.constant 0 : i32
    return %c0_i32, %c0_i32_0 : i32, i32
  }
  func.func @transform_14(%arg0: i32) -> (i32, i32, i32) {
    %c0_i32 = arith.constant 0 : i32
    %c0_i32_0 = arith.constant 0 : i32
    %c0_i32_1 = arith.constant 0 : i32
    return %arg0, %c0_i32, %c0_i32_0 : i32, i32, i32
  }
}

</mosaic_0001>

<llo_original>
// kernel: convnet_forward.2
$region0: #{convnet_forward.2}
  #allocation0 [shape = 'u32[]', space=smem, size = 0x4, offset = 0x4, fixed_abs, tag = 'smem constant byte address 0x4 - core index']
  #allocation1 [shape = 'u32[144,128]{1,0:T(1,128)}', space=vmem, size = 0x12000, scoped, tag = 'internal scratch']
  #allocation2 [shape = 'f32[10,32]{1,0:T(8,128)}', space=vmem, size = 0x2000, scoped, tag = 'scratch operand']
  %s0 = inlined_call_operand.vmem [shape: f32[2,8,1], index: 0, kind: input, shape index: {}]
  %s1 = inlined_call_operand.vmem [shape: f32[1,32], index: 1, kind: input, shape index: {}]
  %s2 = inlined_call_operand.vmem [shape: f32[1,32], index: 2, kind: input, shape index: {}]
  %s3 = inlined_call_operand.vmem [shape: f32[8,32], index: 3, kind: input, shape index: {}]
  %s4 = inlined_call_operand.hbm [shape: f32[2,3,32,64], index: 4, kind: input, shape index: {}]
  %s5 = inlined_call_operand.vmem [shape: f32[2,1,64], index: 5, kind: input, shape index: {}]
  %s6 = inlined_call_operand.vmem [shape: f32[2,8,32], index: 6, kind: output, shape index: {0}]
  %s7 = inlined_call_operand.vmem [shape: f32[2,8,32], index: 7, kind: output, shape index: {1}]
  %8 = xla_tuple %s6, %s7
  %s9 = sld [smem:[#allocation0]]
  $region69: #{convnet_forward.2} parent=0
    _
  %s11 = ssub.s32 1, %s9
  %s12 = scalar_select 0, %s11, %s9
  $region1: #{convnet_forward.2} parent=0
    #allocation3 [shape = 'u8[98304]{0}', space=vmem, size = 0x18000, scoped, tag = 'input window, operand 4, single buffered']
    #allocation4 [shape = 's32[2]{0}', space=sflag, size = 0x8, scoped, tag = 'scoped memory for convnet_forward.2']
    %13 = vsyncpa [#allocation4], 0
    loop: start=0, step=1, limit=4
    $region2: #{convnet_forward.2} parent=1 // loop_pre_header
      _
    $region3: #{convnet_forward.2} parent=1 // loop_header
      %s15 = sphi 0, %s19
      %p16 = scmp.ge.s32.totalorder %s15, 4
      %s25 = sphi 0, %s27
      %s28 = sphi 0, %s25
      %s29 = sphi 0, %s28
      %s45 = sphi 0, %s29
      %s49 = sphi 0, %s49
      %s51 = sphi 0, %s49
      %s52 = sphi 0, %s51
      %s66 = sphi 0, %s52
      %s70 = sphi 0, %s70
      %s72 = sphi 0, %s70
      %s73 = sphi 0, %s72
      %s87 = sphi 0, %s73
      %s91 = sphi 0, %s91
      %s93 = sphi 0, %s91
      %s94 = sphi 0, %s93
      %s108 = sphi 0, %s94
      %s112 = sphi 0, %s112
      %s114 = sphi 0, %s112
      %s115 = sphi 0, %s114
      %s129 = sphi 0, %s115
      %s133 = sphi 0, %s133
      %s135 = sphi 0, %s133
      %s136 = sphi 0, %s135
      %s150 = sphi 0, %s136
      %s156 = sphi 0, %s158
      %s159 = sphi 0, %s156
      %s160 = sphi 0, %s159
      %s176 = sphi 0, %s160
      %s182 = sphi 0, %s184
      %s185 = sphi 0, %s182
      %s186 = sphi 0, %s185
      %s202 = sphi 0, %s186
    $region4: #{convnet_forward.2} parent=1 // loop_header_branch
      %18 = sbr.rel (%p16) target = $region8
    $region5: #{convnet_forward.2} parent=1 // loop_body
      %s20 = ssub.s32 %s15, 1
      %s21 = ssub.s32 %s15, 2
      %s22 = sadd.s32 %s15, 1
      %s23 = ssub.s32 %s15, %s22
      %p24 = scmp.eq.s32.totalorder %s23, 0
      %s26 = sadd.s32 %s25, 1
      %s27 = scalar_select %p24, %s25, %s26
      %p30 = pneg %p24
      %p31 = scmp.eq.s32.totalorder %s15, 1
      %p32 = por %p30, %p31
      %p33 = scmp.ne.s32.totalorder %s25, %s28
      %p34 = scmp.eq.s32.totalorder %s15, 0
      %p35 = por %p33, %p34
      %p36 = scmp.ne.s32.totalorder %s25, %s28
      %p37 = scmp.eq.s32.totalorder %s20, 1
      %p38 = por %p36, %p37
      %p39 = scmp.ne.s32.totalorder %s28, %s29
      %p40 = scmp.eq.s32.totalorder %s20, 0
      %p41 = por %p39, %p40
      %p42 = scmp.ne.s32.totalorder %s28, %s29
      %p43 = scmp.eq.s32.totalorder %s21, 1
      %p44 = por %p42, %p43
      %p46 = scmp.ne.s32.totalorder %s29, %s45
      %p47 = scmp.eq.s32.totalorder %s21, 0
      %p48 = por %p46, %p47
      %s50 = sadd.s32 %s49, 1
      %p53 = scmp.eq.s32.totalorder %s15, 1
      %p54 = scmp.ne.s32.totalorder %s49, %s51
      %p55 = scmp.eq.s32.totalorder %s15, 0
      %p56 = por %p54, %p55
      %p57 = scmp.ne.s32.totalorder %s49, %s51
      %p58 = scmp.eq.s32.totalorder %s20, 1
      %p59 = por %p57, %p58
      %p60 = scmp.ne.s32.totalorder %s51, %s52
      %p61 = scmp.eq.s32.totalorder %s20, 0
      %p62 = por %p60, %p61
      %p63 = scmp.ne.s32.totalorder %s51, %s52
      %p64 = scmp.eq.s32.totalorder %s21, 1
      %p65 = por %p63, %p64
      %p67 = scmp.ne.s32.totalorder %s52, %s66
      %p68 = scmp.eq.s32.totalorder %s21, 0
      %p69 = por %p67, %p68
      %s71 = sadd.s32 %s70, 1
      %p74 = scmp.eq.s32.totalorder %s15, 1
      %p75 = scmp.ne.s32.totalorder %s70, %s72
      %p76 = scmp.eq.s32.totalorder %s15, 0
      %p77 = por %p75, %p76
      %p78 = scmp.ne.s32.totalorder %s70, %s72
      %p79 = scmp.eq.s32.totalorder %s20, 1
      %p80 = por %p78, %p79
      %p81 = scmp.ne.s32.totalorder %s72, %s73
      %p82 = scmp.eq.s32.totalorder %s20, 0
      %p83 = por %p81, %p82
      %p84 = scmp.ne.s32.totalorder %s72, %s73
      %p85 = scmp.eq.s32.totalorder %s21, 1
      %p86 = por %p84, %p85
      %p88 = scmp.ne.s32.totalorder %s73, %s87
      %p89 = scmp.eq.s32.totalorder %s21, 0
      %p90 = por %p88, %p89
      %s92 = sadd.s32 %s91, 1
      %p95 = scmp.eq.s32.totalorder %s15, 1
      %p96 = scmp.ne.s32.totalorder %s91, %s93
      %p97 = scmp.eq.s32.totalorder %s15, 0
      %p98 = por %p96, %p97
      %p99 = scmp.ne.s32.totalorder %s91, %s93
      %p100 = scmp.eq.s32.totalorder %s20, 1
      %p101 = por %p99, %p100
      %p102 = scmp.ne.s32.totalorder %s93, %s94
      %p103 = scmp.eq.s32.totalorder %s20, 0
      %p104 = por %p102, %p103
      %p105 = scmp.ne.s32.totalorder %s93, %s94
      %p106 = scmp.eq.s32.totalorder %s21, 1
      %p107 = por %p105, %p106
      %p109 = scmp.ne.s32.totalorder %s94, %s108
      %p110 = scmp.eq.s32.totalorder %s21, 0
      %p111 = por %p109, %p110
      %s113 = sadd.s32 %s112, 1
      %p116 = scmp.eq.s32.totalorder %s15, 1
      %p117 = scmp.ne.s32.totalorder %s112, %s114
      %p118 = scmp.eq.s32.totalorder %s15, 0
      %p119 = por %p117, %p118
      %p120 = scmp.ne.s32.totalorder %s112, %s114
      %p121 = scmp.eq.s32.totalorder %s20, 1
      %p122 = por %p120, %p121
      %p123 = scmp.ne.s32.totalorder %s114, %s115
      %p124 = scmp.eq.s32.totalorder %s20, 0
      %p125 = por %p123, %p124
      %p126 = scmp.ne.s32.totalorder %s114, %s115
      %p127 = scmp.eq.s32.totalorder %s21, 1
      %p128 = por %p126, %p127
      %p130 = scmp.ne.s32.totalorder %s115, %s129
      %p131 = scmp.eq.s32.totalorder %s21, 0
      %p132 = por %p130, %p131
      %s134 = sadd.s32 %s133, 1
      %p137 = scmp.eq.s32.totalorder %s15, 1
      %p138 = scmp.ne.s32.totalorder %s133, %s135
      %p139 = scmp.eq.s32.totalorder %s15, 0
      %p140 = por %p138, %p139
      %p141 = scmp.ne.s32.totalorder %s133, %s135
      %p142 = scmp.eq.s32.totalorder %s20, 1
      %p143 = por %p141, %p142
      %p144 = scmp.ne.s32.totalorder %s135, %s136
      %p145 = scmp.eq.s32.totalorder %s20, 0
      %p146 = por %p144, %p145
      %p147 = scmp.ne.s32.totalorder %s135, %s136
      %p148 = scmp.eq.s32.totalorder %s21, 1
      %p149 = por %p147, %p148
      %p151 = scmp.ne.s32.totalorder %s136, %s150
      %p152 = scmp.eq.s32.totalorder %s21, 0
      %p153 = por %p151, %p152
      %s154 = ssub.s32 %s15, %s22
      %p155 = scmp.eq.s32.totalorder %s154, 0
      %s157 = sadd.s32 %s156, 1
      %s158 = scalar_select %p155, %s156, %s157
      %p161 = pneg %p155
      %p162 = scmp.eq.s32.totalorder %s15, 1
      %p163 = por %p161, %p162
      %p164 = scmp.ne.s32.totalorder %s156, %s159
      %p165 = scmp.eq.s32.totalorder %s15, 0
      %p166 = por %p164, %p165
      %p167 = scmp.ne.s32.totalorder %s156, %s159
      %p168 = scmp.eq.s32.totalorder %s20, 1
      %p169 = por %p167, %p168
      %p170 = scmp.ne.s32.totalorder %s159, %s160
      %p171 = scmp.eq.s32.totalorder %s20, 0
      %p172 = por %p170, %p171
      %p173 = scmp.ne.s32.totalorder %s159, %s160
      %p174 = scmp.eq.s32.totalorder %s21, 1
      %p175 = por %p173, %p174
      %p177 = scmp.ne.s32.totalorder %s160, %s176
      %p178 = scmp.eq.s32.totalorder %s21, 0
      %p179 = por %p177, %p178
      %s180 = ssub.s32 %s15, %s22
      %p181 = scmp.eq.s32.totalorder %s180, 0
      %s183 = sadd.s32 %s182, 1
      %s184 = scalar_select %p181, %s182, %s183
      %p187 = pneg %p181
      %p188 = scmp.eq.s32.totalorder %s15, 1
      %p189 = por %p187, %p188
      %p190 = scmp.ne.s32.totalorder %s182, %s185
      %p191 = scmp.eq.s32.totalorder %s15, 0
      %p192 = por %p190, %p191
      %p193 = scmp.ne.s32.totalorder %s182, %s185
      %p194 = scmp.eq.s32.totalorder %s20, 1
      %p195 = por %p193, %p194
      %p196 = scmp.ne.s32.totalorder %s185, %s186
      %p197 = scmp.eq.s32.totalorder %s20, 0
      %p198 = por %p196, %p197
      %p199 = scmp.ne.s32.totalorder %s185, %s186
      %p200 = scmp.eq.s32.totalorder %s21, 1
      %p201 = por %p199, %p200
      %p203 = scmp.ne.s32.totalorder %s186, %s202
      %p204 = scmp.eq.s32.totalorder %s21, 0
      %p205 = por %p203, %p204
      %p206 = scmp.le.s32.totalorder 1, %s15
      %p207 = scmp.lt.s32.totalorder %s15, 3
      %p208 = pnand %p206, %p207
      %p209 = pneg %p208
      // Predicated region
      $region9: #{convnet_forward.2} parent=5 // pred_check
        _
      $region10: #{convnet_forward.2} parent=5 // pred_check_branch
        %211 = sbr.rel (%p208) target = $region12
      $region11: #{convnet_forward.2} parent=5 // pred_region
        %s212 = ssub.s32 %s15, 1
        // Predicated region
        $region13: #{convnet_forward.2} parent=11 // pred_check
          %p213 = pneg %p62
        $region14: #{convnet_forward.2} parent=11 // pred_check_branch
          %215 = sbr.rel (%p213) target = $region16
        $region15: #{convnet_forward.2} parent=11 // pred_region
          _
        $region16: #{convnet_forward.2} parent=11 // pred_fallthru
          _
        // Predicated region
        $region17: #{convnet_forward.2} parent=11 // pred_check
          %p216 = pneg %p83
        $region18: #{convnet_forward.2} parent=11 // pred_check_branch
          %218 = sbr.rel (%p216) target = $region20
        $region19: #{convnet_forward.2} parent=11 // pred_region
          _
        $region20: #{convnet_forward.2} parent=11 // pred_fallthru
          _
        // Predicated region
        $region21: #{convnet_forward.2} parent=11 // pred_check
          %p219 = pneg %p104
        $region22: #{convnet_forward.2} parent=11 // pred_check_branch
          %221 = sbr.rel (%p219) target = $region24
        $region23: #{convnet_forward.2} parent=11 // pred_region
          _
        $region24: #{convnet_forward.2} parent=11 // pred_fallthru
          _
        // Predicated region
        $region25: #{convnet_forward.2} parent=11 // pred_check
          %p222 = pneg %p125
        $region26: #{convnet_forward.2} parent=11 // pred_check_branch
          %224 = sbr.rel (%p222) target = $region28
        $region27: #{convnet_forward.2} parent=11 // pred_region
          %s226 = ssub.s32 3072, 3072
          %227 = vsyncadd [#allocation4], %s226
          %s228 = sshll.u32 [#allocation3], 4
          %s229 = int_to_ptr.vmem [resolvable:$true] %s228
          %234 = dma.hbm_to_vmem [thread:$0]  %s4, 3072, %s229, [#allocation4], 128, 128, 8
        $region28: #{convnet_forward.2} parent=11 // pred_fallthru
          _
        // Predicated region
        $region29: #{convnet_forward.2} parent=11 // pred_check
          %p235 = pneg %p146
        $region30: #{convnet_forward.2} parent=11 // pred_check_branch
          %237 = sbr.rel (%p235) target = $region32
        $region31: #{convnet_forward.2} parent=11 // pred_region
          _
        $region32: #{convnet_forward.2} parent=11 // pred_fallthru
          _
      $region12: #{convnet_forward.2} parent=5 // pred_fallthru
        _
      %p238 = scmp.lt.s32.totalorder %s15, 2
      // Predicated region
      $region33: #{convnet_forward.2} parent=5 // pred_check
        %p239 = pneg %p238
      $region34: #{convnet_forward.2} parent=5 // pred_check_branch
        %241 = sbr.rel (%p239) target = $region36
      $region35: #{convnet_forward.2} parent=5 // pred_region
        // Predicated region
        $region37: #{convnet_forward.2} parent=35 // pred_check
          %p242 = pneg %p35
        $region38: #{convnet_forward.2} parent=35 // pred_check_branch
          %244 = sbr.rel (%p242) target = $region40
        $region39: #{convnet_forward.2} parent=35 // pred_region
          %p245 = scmp.lt.s32.totalorder %s15, 1
          %s246 = scalar_select %p245, %s15, 1
          %s247 = smul.addr %s246, 8
          %s248 = scalar_lea.vmem %s0, %s247
        $region40: #{convnet_forward.2} parent=35 // pred_fallthru
          _
      $region36: #{convnet_forward.2} parent=5 // pred_fallthru
        _
      %p249 = scmp.le.s32.totalorder 1, %s15
      %p250 = scmp.lt.s32.totalorder %s15, 3
      %p251 = pnand %p249, %p250
      %p252 = pneg %p251
      // Predicated region
      $region41: #{convnet_forward.2} parent=5 // pred_check
        _
      $region42: #{convnet_forward.2} parent=5 // pred_check_branch
        %254 = sbr.rel (%p251) target = $region44
      $region43: #{convnet_forward.2} parent=5 // pred_region
        %s255 = ssub.s32 %s15, 1
        // Predicated region
        $region45: #{convnet_forward.2} parent=43 // pred_check
          %p256 = pneg %p125
        $region46: #{convnet_forward.2} parent=43 // pred_check_branch
          %258 = sbr.rel (%p256) target = $region48
        $region47: #{convnet_forward.2} parent=43 // pred_region
          %259 = dma.done [#allocation4], 3072
        $region48: #{convnet_forward.2} parent=43 // pred_fallthru
          _
        %p260 = scmp.lt.s32.totalorder %s20, 1
        %s261 = scalar_select %p260, %s20, 1
        %s262 = smul.addr %s261, 8
        %s263 = scalar_lea.vmem %s0, %s262
        %p264 = pneg %p41
        %p265 = pneg %p38
        %p266 = pneg %p62
        %p267 = pneg %p59
        %p268 = pneg %p83
        %p269 = pneg %p80
        %p270 = pneg %p104
        %p271 = pneg %p101
        %p272 = pneg %p125
        %p273 = pneg %p122
        %p274 = pneg %p146
        %p275 = pneg %p143
        %p276 = pneg %p172
        %p277 = pneg %p169
        %p278 = scmp.lt.s32.totalorder %s20, 1
        %s279 = scalar_select %p278, %s20, 1
        %s280 = smul.addr %s279, 8
        %s281 = scalar_lea.vmem %s6, %s280
        %p282 = pneg %p198
        %p283 = pneg %p195
        %p284 = scmp.lt.s32.totalorder %s20, 1
        %s285 = scalar_select %p284, %s20, 1
        %s286 = smul.addr %s285, 8
        %s287 = scalar_lea.vmem %s7, %s286
        %p288 = scmp.lt.s32.totalorder %s20, 1
        %s289 = scalar_select %p288, %s20, 1
        %s290 = smul.addr %s289, 8
        %s291 = scalar_lea.vmem %s0, %s290
        %p292 = scmp.lt.s32.totalorder %s20, 1
        %s293 = scalar_select %p292, %s20, 1
        %s294 = smul.addr %s293, 8
        %s295 = scalar_lea.vmem %s6, %s294
        %p296 = scmp.lt.s32.totalorder %s20, 1
        %s297 = scalar_select %p296, %s20, 1
        %s298 = smul.addr %s297, 8
        %s299 = scalar_lea.vmem %s7, %s298
        %vm300 = vcmask 261120
        %301 = vst.msk [vmem:[#allocation2] sm:$0xff] %vm300, 0.0
        %vm302 = vcmask 254976
        %303 = vst.msk [vmem:[#allocation2 + $0x8] sm:$0x3] %vm302, 0.0
        %v304 = vld [vmem:[%s291] sm:$0xff]
        %v305 = vld [vmem:[%s1] sm:$0x1]
        %307 = vset.pattern.permute.xlu0 0
        %308 = vperm.xlu0 %307, %v304
        %v309 = vpop.permute.xlu0 %308
        %v312 = vlaneseq
        %v313 = vshrl.u32 %v312, 7
        %v314 = vsub.s32 0, %v313
        %v315 = vrot.slane %v305, %v314
        %v317 = vmul.f32 %v309, %v315
        %v318 = vld [vmem:[%s2] sm:$0x1]
        %v320 = vlaneseq
        %v321 = vshrl.u32 %v320, 7
        %v322 = vsub.s32 0, %v321
        %v323 = vrot.slane %v318, %v322
        %v325 = vadd.f32 %v317, %v323
        %v326 = vld [vmem:[%s3] sm:$0xff]
        %v327 = vadd.f32 %v325, %v326
        %v328 = vld [vmem:[#allocation3] sm:$0xff]
        %v329 = vld [vmem:[#allocation3 + $0x8] sm:$0xff]
        %v330 = vld [vmem:[#allocation3 + $0x10] sm:$0xff]
        %v331 = vld [vmem:[#allocation3 + $0x18] sm:$0xff]
        %v332 = vld [vmem:[#allocation3 + $0x20] sm:$0xff]
        %v333 = vld [vmem:[#allocation3 + $0x28] sm:$0xff]
        %v334 = vld [vmem:[#allocation3 + $0x30] sm:$0xff]
        %v335 = vld [vmem:[#allocation3 + $0x38] sm:$0xff]
        %v336 = vld [vmem:[#allocation3 + $0x40] sm:$0xff]
        %v337 = vld [vmem:[#allocation3 + $0x48] sm:$0xff]
        %v338 = vld [vmem:[#allocation3 + $0x50] sm:$0xff]
        %v339 = vld [vmem:[#allocation3 + $0x58] sm:$0xff]
        %v340 = vld [vmem:[%s5] sm:$0x1]
        %341 = vst.msk [vmem:[#allocation2 + $0x1] sm:$0xff] %vm300, %v327
        %v342 = vld [vmem:[#allocation2] sm:$0xff]
        %v343 = vld [vmem:[#allocation2 + $0x8] sm:$0x3]
        %v345 = vsel %vm300, %v342, 0
        %347 = vmatprep.subr.mxu0 0.0
        %348 = vmatpush1.msra.mxu0 0.0
        %349 = vmatprep.subr.mxu0 0.0
        %350 = vmatpush1.msra.mxu0 0.0
        %351 = vmatprep.subr.mxu0 0.0
        %352 = vmatpush1.msra.mxu0 0.0
        %353 = vmatprep.subr.mxu0 0.0
        %354 = vmatpush1.msra.mxu0 0.0
        %355 = vmatprep.subr.mxu0 0.0
        %356 = vmatpush1.msra.mxu0 0.0
        %357 = vmatprep.subr.mxu0 0.0
        %358 = vmatpush1.msra.mxu0 0.0
        %359 = vmatprep.subr.mxu0 0.0
        %360 = vmatpush1.msra.mxu0 0.0
        %361 = vmatprep.subr.mxu0 0.0
        %362 = vmatpush1.msra.mxu0 0.0
        %363 = vmatprep.subr.mxu0 0.0
        %364 = vmatpush1.msra.mxu0 0.0
        %365 = vmatprep.subr.mxu0 0.0
        %366 = vmatpush1.msra.mxu0 0.0
        %367 = vmatprep.subr.mxu0 0.0
        %368 = vmatpush1.msra.mxu0 0.0
        %369 = vmatprep.subr.mxu0 0.0
        %370 = vmatpush1.msra.mxu0 0.0
        %371 = vmatprep.subr.mxu0 0.0
        %372 = vmatpush1.msra.mxu0 %v331
        %373 = vmatprep.subr.mxu0 0.0
        %374 = vmatpush1.msra.mxu0 %v330
        %375 = vmatprep.subr.mxu0 0.0
        %376 = vmatpush1.msra.mxu0 %v329
        %377 = vmatprep.subr.mxu0 0.0
        %378 = vmatpush1.msra.mxu0 %v328
        %379 = vmatprep.subr.mxu0 0.0
        %380 = vmatpush2.msra.mxu0 0.0
        %381 = vmatprep.subr.mxu0 0.0
        %382 = vmatpush2.msra.mxu0 0.0
        %383 = vmatprep.subr.mxu0 0.0
        %384 = vmatpush2.msra.mxu0 0.0
        %385 = vmatprep.subr.mxu0 0.0
        %386 = vmatpush2.msra.mxu0 0.0
        %387 = vmatprep.subr.mxu0 0.0
        %388 = vmatpush2.msra.mxu0 0.0
        %389 = vmatprep.subr.mxu0 0.0
        %390 = vmatpush2.msra.mxu0 0.0
        %391 = vmatprep.subr.mxu0 0.0
        %392 = vmatpush2.msra.mxu0 0.0
        %393 = vmatprep.subr.mxu0 0.0
        %394 = vmatpush2.msra.mxu0 0.0
        %395 = vmatprep.subr.mxu0 0.0
        %396 = vmatpush2.msra.mxu0 0.0
        %397 = vmatprep.subr.mxu0 0.0
        %398 = vmatpush2.msra.mxu0 0.0
        %399 = vmatprep.subr.mxu0 0.0
        %400 = vmatpush2.msra.mxu0 0.0
        %401 = vmatprep.subr.mxu0 0.0
        %402 = vmatpush2.msra.mxu0 0.0
        %403 = vmatprep.subr.mxu0 0.0
        %404 = vmatpush2.msra.mxu0 0.0
        %405 = vmatprep.subr.mxu0 0.0
        %406 = vmatpush2.msra.mxu0 0.0
        %407 = vmatprep.subr.mxu0 0.0
        %408 = vmatpush2.msra.mxu0 0.0
        %409 = vmatprep.subr.mxu0 0.0
        %410 = vmatpush2.msra.mxu0 0.0
        %411 = vmatprep.mubr.f32.mxu0 0.0
        %412 = vmatmul.mubr.f32.gmra.mxu0 %v345
        %v413 = vpop.f32.mrf.mxu0
        %v414 = vadd.f32 0.0, %v413
        %v415 = vpop.f32.mrf.mxu0
        %416 = vdwg.mxu0
        %v418 = vlaneseq
        %v419 = vshrl.u32 %v418, 7
        %v420 = vsub.s32 0, %v419
        %v421 = vrot.slane %v340, %v420
        %v423 = vadd.f32 %v421, %v414
        %vm425 = vcmask 1046528
        %v426 = vrot.slane %v342, 1
        %v427 = vrot.slane %v343, 1
        %v428 = vsel %vm425, %v426, %v427
        %v429 = vsel %vm300, %v428, 0
        %431 = vmatprep.subr.mxu0 0.0
        %432 = vmatpush1.msra.mxu0 0.0
        %433 = vmatprep.subr.mxu0 0.0
        %434 = vmatpush1.msra.mxu0 0.0
        %435 = vmatprep.subr.mxu0 0.0
        %436 = vmatpush1.msra.mxu0 0.0
        %437 = vmatprep.subr.mxu0 0.0
        %438 = vmatpush1.msra.mxu0 0.0
        %439 = vmatprep.subr.mxu0 0.0
        %440 = vmatpush1.msra.mxu0 0.0
        %441 = vmatprep.subr.mxu0 0.0
        %442 = vmatpush1.msra.mxu0 0.0
        %443 = vmatprep.subr.mxu0 0.0
        %444 = vmatpush1.msra.mxu0 0.0
        %445 = vmatprep.subr.mxu0 0.0
        %446 = vmatpush1.msra.mxu0 0.0
        %447 = vmatprep.subr.mxu0 0.0
        %448 = vmatpush1.msra.mxu0 0.0
        %449 = vmatprep.subr.mxu0 0.0
        %450 = vmatpush1.msra.mxu0 0.0
        %451 = vmatprep.subr.mxu0 0.0
        %452 = vmatpush1.msra.mxu0 0.0
        %453 = vmatprep.subr.mxu0 0.0
        %454 = vmatpush1.msra.mxu0 0.0
        %455 = vmatprep.subr.mxu0 0.0
        %456 = vmatpush1.msra.mxu0 %v335
        %457 = vmatprep.subr.mxu0 0.0
        %458 = vmatpush1.msra.mxu0 %v334
        %459 = vmatprep.subr.mxu0 0.0
        %460 = vmatpush1.msra.mxu0 %v333
        %461 = vmatprep.subr.mxu0 0.0
        %462 = vmatpush1.msra.mxu0 %v332
        %463 = vmatprep.subr.mxu0 0.0
        %464 = vmatpush2.msra.mxu0 0.0
        %465 = vmatprep.subr.mxu0 0.0
        %466 = vmatpush2.msra.mxu0 0.0
        %467 = vmatprep.subr.mxu0 0.0
        %468 = vmatpush2.msra.mxu0 0.0
        %469 = vmatprep.subr.mxu0 0.0
        %470 = vmatpush2.msra.mxu0 0.0
        %471 = vmatprep.subr.mxu0 0.0
        %472 = vmatpush2.msra.mxu0 0.0
        %473 = vmatprep.subr.mxu0 0.0
        %474 = vmatpush2.msra.mxu0 0.0
        %475 = vmatprep.subr.mxu0 0.0
        %476 = vmatpush2.msra.mxu0 0.0
        %477 = vmatprep.subr.mxu0 0.0
        %478 = vmatpush2.msra.mxu0 0.0
        %479 = vmatprep.subr.mxu0 0.0
        %480 = vmatpush2.msra.mxu0 0.0
        %481 = vmatprep.subr.mxu0 0.0
        %482 = vmatpush2.msra.mxu0 0.0
        %483 = vmatprep.subr.mxu0 0.0
        %484 = vmatpush2.msra.mxu0 0.0
        %485 = vmatprep.subr.mxu0 0.0
        %486 = vmatpush2.msra.mxu0 0.0
        %487 = vmatprep.subr.mxu0 0.0
        %488 = vmatpush2.msra.mxu0 0.0
        %489 = vmatprep.subr.mxu0 0.0
        %490 = vmatpush2.msra.mxu0 0.0
        %491 = vmatprep.subr.mxu0 0.0
        %492 = vmatpush2.msra.mxu0 0.0
        %493 = vmatprep.subr.mxu0 0.0
        %494 = vmatpush2.msra.mxu0 0.0
        %495 = vmatprep.mubr.f32.mxu0 0.0
        %496 = vmatmul.mubr.f32.gmra.mxu0 %v429
        %v497 = vpop.f32.mrf.mxu0
        %v498 = vadd.f32 0.0, %v497
        %v499 = vpop.f32.mrf.mxu0
        %500 = vdwg.mxu0
        %v501 = vadd.f32 %v423, %v498
        %vm502 = vcmask 1045504
        %v503 = vrot.slane %v342, 2
        %v504 = vrot.slane %v343, 2
        %v505 = vsel %vm502, %v503, %v504
        %v506 = vsel %vm300, %v505, 0
        %508 = vmatprep.subr.mxu0 0.0
        %509 = vmatpush1.msra.mxu0 0.0
        %510 = vmatprep.subr.mxu0 0.0
        %511 = vmatpush1.msra.mxu0 0.0
        %512 = vmatprep.subr.mxu0 0.0
        %513 = vmatpush1.msra.mxu0 0.0
        %514 = vmatprep.subr.mxu0 0.0
        %515 = vmatpush1.msra.mxu0 0.0
        %516 = vmatprep.subr.mxu0 0.0
        %517 = vmatpush1.msra.mxu0 0.0
        %518 = vmatprep.subr.mxu0 0.0
        %519 = vmatpush1.msra.mxu0 0.0
        %520 = vmatprep.subr.mxu0 0.0
        %521 = vmatpush1.msra.mxu0 0.0
        %522 = vmatprep.subr.mxu0 0.0
        %523 = vmatpush1.msra.mxu0 0.0
        %524 = vmatprep.subr.mxu0 0.0
        %525 = vmatpush1.msra.mxu0 0.0
        %526 = vmatprep.subr.mxu0 0.0
        %527 = vmatpush1.msra.mxu0 0.0
        %528 = vmatprep.subr.mxu0 0.0
        %529 = vmatpush1.msra.mxu0 0.0
        %530 = vmatprep.subr.mxu0 0.0
        %531 = vmatpush1.msra.mxu0 0.0
        %532 = vmatprep.subr.mxu0 0.0
        %533 = vmatpush1.msra.mxu0 %v339
        %534 = vmatprep.subr.mxu0 0.0
        %535 = vmatpush1.msra.mxu0 %v338
        %536 = vmatprep.subr.mxu0 0.0
        %537 = vmatpush1.msra.mxu0 %v337
        %538 = vmatprep.subr.mxu0 0.0
        %539 = vmatpush1.msra.mxu0 %v336
        %540 = vmatprep.subr.mxu0 0.0
        %541 = vmatpush2.msra.mxu0 0.0
        %542 = vmatprep.subr.mxu0 0.0
        %543 = vmatpush2.msra.mxu0 0.0
        %544 = vmatprep.subr.mxu0 0.0
        %545 = vmatpush2.msra.mxu0 0.0
        %546 = vmatprep.subr.mxu0 0.0
        %547 = vmatpush2.msra.mxu0 0.0
        %548 = vmatprep.subr.mxu0 0.0
        %549 = vmatpush2.msra.mxu0 0.0
        %550 = vmatprep.subr.mxu0 0.0
        %551 = vmatpush2.msra.mxu0 0.0
        %552 = vmatprep.subr.mxu0 0.0
        %553 = vmatpush2.msra.mxu0 0.0
        %554 = vmatprep.subr.mxu0 0.0
        %555 = vmatpush2.msra.mxu0 0.0
        %556 = vmatprep.subr.mxu0 0.0
        %557 = vmatpush2.msra.mxu0 0.0
        %558 = vmatprep.subr.mxu0 0.0
        %559 = vmatpush2.msra.mxu0 0.0
        %560 = vmatprep.subr.mxu0 0.0
        %561 = vmatpush2.msra.mxu0 0.0
        %562 = vmatprep.subr.mxu0 0.0
        %563 = vmatpush2.msra.mxu0 0.0
        %564 = vmatprep.subr.mxu0 0.0
        %565 = vmatpush2.msra.mxu0 0.0
        %566 = vmatprep.subr.mxu0 0.0
        %567 = vmatpush2.msra.mxu0 0.0
        %568 = vmatprep.subr.mxu0 0.0
        %569 = vmatpush2.msra.mxu0 0.0
        %570 = vmatprep.subr.mxu0 0.0
        %571 = vmatpush2.msra.mxu0 0.0
        %572 = vmatprep.mubr.f32.mxu0 0.0
        %573 = vmatmul.mubr.f32.gmra.mxu0 %v506
        %v574 = vpop.f32.mrf.mxu0
        %v575 = vadd.f32 0.0, %v574
        %v576 = vpop.f32.mrf.mxu0
        %577 = vdwg.mxu0
        %v578 = vadd.f32 %v501, %v575
        %v579 = vxor.u32 %v578, 2147483648
        %v580 = vmul.f32 %v579, 1.442695
        %v581 = vpow.pop %v580
        %v582 = vadd.f32 %v581, 1.0
        %v583 = vrcp.pop %v582
        %v584 = vmul.f32 1.0, %v583
        %586 = vrot.lane.b32.xlu0 %v584, 96
        %v587 = vpop.permute.xlu0 %586
        %v589 = vmul.f32 %v578, %v587
        %v590 = vadd.f32 %v589, %v327
        %v591 = vmul.f32 %v590, 0.70710677
        %s592 = scalar_lea.vmem [#allocation3], 96
        %v593 = vld [vmem:[%s592] sm:$0xff]
        %v594 = vld [vmem:[%s592 + $0x8] sm:$0xff]
        %v595 = vld [vmem:[%s592 + $0x10] sm:$0xff]
        %v596 = vld [vmem:[%s592 + $0x18] sm:$0xff]
        %v597 = vld [vmem:[%s592 + $0x20] sm:$0xff]
        %v598 = vld [vmem:[%s592 + $0x28] sm:$0xff]
        %v599 = vld [vmem:[%s592 + $0x30] sm:$0xff]
        %v600 = vld [vmem:[%s592 + $0x38] sm:$0xff]
        %v601 = vld [vmem:[%s592 + $0x40] sm:$0xff]
        %v602 = vld [vmem:[%s592 + $0x48] sm:$0xff]
        %v603 = vld [vmem:[%s592 + $0x50] sm:$0xff]
        %v604 = vld [vmem:[%s592 + $0x58] sm:$0xff]
        %s605 = scalar_lea.vmem %s5, 1
        %v606 = vld [vmem:[%s605] sm:$0x1]
        %607 = vst.msk [vmem:[#allocation2 + $0x1] sm:$0xff] %vm300, %v591
        %v608 = vld [vmem:[#allocation2] sm:$0xff]
        %v609 = vld [vmem:[#allocation2 + $0x8] sm:$0x3]
        %v611 = vsel %vm300, %v608, 0
        %613 = vmatprep.subr.mxu0 0.0
        %614 = vmatpush1.msra.mxu0 0.0
        %615 = vmatprep.subr.mxu0 0.0
        %616 = vmatpush1.msra.mxu0 0.0
        %617 = vmatprep.subr.mxu0 0.0
        %618 = vmatpush1.msra.mxu0 0.0
        %619 = vmatprep.subr.mxu0 0.0
        %620 = vmatpush1.msra.mxu0 0.0
        %621 = vmatprep.subr.mxu0 0.0
        %622 = vmatpush1.msra.mxu0 0.0
        %623 = vmatprep.subr.mxu0 0.0
        %624 = vmatpush1.msra.mxu0 0.0
        %625 = vmatprep.subr.mxu0 0.0
        %626 = vmatpush1.msra.mxu0 0.0
        %627 = vmatprep.subr.mxu0 0.0
        %628 = vmatpush1.msra.mxu0 0.0
        %629 = vmatprep.subr.mxu0 0.0
        %630 = vmatpush1.msra.mxu0 0.0
        %631 = vmatprep.subr.mxu0 0.0
        %632 = vmatpush1.msra.mxu0 0.0
        %633 = vmatprep.subr.mxu0 0.0
        %634 = vmatpush1.msra.mxu0 0.0
        %635 = vmatprep.subr.mxu0 0.0
        %636 = vmatpush1.msra.mxu0 0.0
        %637 = vmatprep.subr.mxu0 0.0
        %638 = vmatpush1.msra.mxu0 %v596
        %639 = vmatprep.subr.mxu0 0.0
        %640 = vmatpush1.msra.mxu0 %v595
        %641 = vmatprep.subr.mxu0 0.0
        %642 = vmatpush1.msra.mxu0 %v594
        %643 = vmatprep.subr.mxu0 0.0
        %644 = vmatpush1.msra.mxu0 %v593
        %645 = vmatprep.subr.mxu0 0.0
        %646 = vmatpush2.msra.mxu0 0.0
        %647 = vmatprep.subr.mxu0 0.0
        %648 = vmatpush2.msra.mxu0 0.0
        %649 = vmatprep.subr.mxu0 0.0
        %650 = vmatpush2.msra.mxu0 0.0
        %651 = vmatprep.subr.mxu0 0.0
        %652 = vmatpush2.msra.mxu0 0.0
        %653 = vmatprep.subr.mxu0 0.0
        %654 = vmatpush2.msra.mxu0 0.0
        %655 = vmatprep.subr.mxu0 0.0
        %656 = vmatpush2.msra.mxu0 0.0
        %657 = vmatprep.subr.mxu0 0.0
        %658 = vmatpush2.msra.mxu0 0.0
        %659 = vmatprep.subr.mxu0 0.0
        %660 = vmatpush2.msra.mxu0 0.0
        %661 = vmatprep.subr.mxu0 0.0
        %662 = vmatpush2.msra.mxu0 0.0
        %663 = vmatprep.subr.mxu0 0.0
        %664 = vmatpush2.msra.mxu0 0.0
        %665 = vmatprep.subr.mxu0 0.0
        %666 = vmatpush2.msra.mxu0 0.0
        %667 = vmatprep.subr.mxu0 0.0
        %668 = vmatpush2.msra.mxu0 0.0
        %669 = vmatprep.subr.mxu0 0.0
        %670 = vmatpush2.msra.mxu0 0.0
        %671 = vmatprep.subr.mxu0 0.0
        %672 = vmatpush2.msra.mxu0 0.0
        %673 = vmatprep.subr.mxu0 0.0
        %674 = vmatpush2.msra.mxu0 0.0
        %675 = vmatprep.subr.mxu0 0.0
        %676 = vmatpush2.msra.mxu0 0.0
        %677 = vmatprep.mubr.f32.mxu0 0.0
        %678 = vmatmul.mubr.f32.gmra.mxu0 %v611
        %v679 = vpop.f32.mrf.mxu0
        %v680 = vadd.f32 0.0, %v679
        %v681 = vpop.f32.mrf.mxu0
        %682 = vdwg.mxu0
        %v684 = vlaneseq
        %v685 = vshrl.u32 %v684, 7
        %v686 = vsub.s32 0, %v685
        %v687 = vrot.slane %v606, %v686
        %v689 = vadd.f32 %v687, %v680
        %v691 = vrot.slane %v608, 1
        %v692 = vrot.slane %v609, 1
        %v693 = vsel %vm425, %v691, %v692
        %v694 = vsel %vm300, %v693, 0
        %696 = vmatprep.subr.mxu0 0.0
        %697 = vmatpush1.msra.mxu0 0.0
        %698 = vmatprep.subr.mxu0 0.0
        %699 = vmatpush1.msra.mxu0 0.0
        %700 = vmatprep.subr.mxu0 0.0
        %701 = vmatpush1.msra.mxu0 0.0
        %702 = vmatprep.subr.mxu0 0.0
        %703 = vmatpush1.msra.mxu0 0.0
        %704 = vmatprep.subr.mxu0 0.0
        %705 = vmatpush1.msra.mxu0 0.0
        %706 = vmatprep.subr.mxu0 0.0
        %707 = vmatpush1.msra.mxu0 0.0
        %708 = vmatprep.subr.mxu0 0.0
        %709 = vmatpush1.msra.mxu0 0.0
        %710 = vmatprep.subr.mxu0 0.0
        %711 = vmatpush1.msra.mxu0 0.0
        %712 = vmatprep.subr.mxu0 0.0
        %713 = vmatpush1.msra.mxu0 0.0
        %714 = vmatprep.subr.mxu0 0.0
        %715 = vmatpush1.msra.mxu0 0.0
        %716 = vmatprep.subr.mxu0 0.0
        %717 = vmatpush1.msra.mxu0 0.0
        %718 = vmatprep.subr.mxu0 0.0
        %719 = vmatpush1.msra.mxu0 0.0
        %720 = vmatprep.subr.mxu0 0.0
        %721 = vmatpush1.msra.mxu0 %v600
        %722 = vmatprep.subr.mxu0 0.0
        %723 = vmatpush1.msra.mxu0 %v599
        %724 = vmatprep.subr.mxu0 0.0
        %725 = vmatpush1.msra.mxu0 %v598
        %726 = vmatprep.subr.mxu0 0.0
        %727 = vmatpush1.msra.mxu0 %v597
        %728 = vmatprep.subr.mxu0 0.0
        %729 = vmatpush2.msra.mxu0 0.0
        %730 = vmatprep.subr.mxu0 0.0
        %731 = vmatpush2.msra.mxu0 0.0
        %732 = vmatprep.subr.mxu0 0.0
        %733 = vmatpush2.msra.mxu0 0.0
        %734 = vmatprep.subr.mxu0 0.0
        %735 = vmatpush2.msra.mxu0 0.0
        %736 = vmatprep.subr.mxu0 0.0
        %737 = vmatpush2.msra.mxu0 0.0
        %738 = vmatprep.subr.mxu0 0.0
        %739 = vmatpush2.msra.mxu0 0.0
        %740 = vmatprep.subr.mxu0 0.0
        %741 = vmatpush2.msra.mxu0 0.0
        %742 = vmatprep.subr.mxu0 0.0
        %743 = vmatpush2.msra.mxu0 0.0
        %744 = vmatprep.subr.mxu0 0.0
        %745 = vmatpush2.msra.mxu0 0.0
        %746 = vmatprep.subr.mxu0 0.0
        %747 = vmatpush2.msra.mxu0 0.0
        %748 = vmatprep.subr.mxu0 0.0
        %749 = vmatpush2.msra.mxu0 0.0
        %750 = vmatprep.subr.mxu0 0.0
        %751 = vmatpush2.msra.mxu0 0.0
        %752 = vmatprep.subr.mxu0 0.0
        %753 = vmatpush2.msra.mxu0 0.0
        %754 = vmatprep.subr.mxu0 0.0
        %755 = vmatpush2.msra.mxu0 0.0
        %756 = vmatprep.subr.mxu0 0.0
        %757 = vmatpush2.msra.mxu0 0.0
        %758 = vmatprep.subr.mxu0 0.0
        %759 = vmatpush2.msra.mxu0 0.0
        %760 = vmatprep.mubr.f32.mxu0 0.0
        %761 = vmatmul.mubr.f32.gmra.mxu0 %v694
        %v762 = vpop.f32.mrf.mxu0
        %v763 = vadd.f32 0.0, %v762
        %v764 = vpop.f32.mrf.mxu0
        %765 = vdwg.mxu0
        %v766 = vadd.f32 %v689, %v763
        %v767 = vrot.slane %v608, 2
        %v768 = vrot.slane %v609, 2
        %v769 = vsel %vm502, %v767, %v768
        %v770 = vsel %vm300, %v769, 0
        %772 = vmatprep.subr.mxu0 0.0
        %773 = vmatpush1.msra.mxu0 0.0
        %774 = vmatprep.subr.mxu0 0.0
        %775 = vmatpush1.msra.mxu0 0.0
        %776 = vmatprep.subr.mxu0 0.0
        %777 = vmatpush1.msra.mxu0 0.0
        %778 = vmatprep.subr.mxu0 0.0
        %779 = vmatpush1.msra.mxu0 0.0
        %780 = vmatprep.subr.mxu0 0.0
        %781 = vmatpush1.msra.mxu0 0.0
        %782 = vmatprep.subr.mxu0 0.0
        %783 = vmatpush1.msra.mxu0 0.0
        %784 = vmatprep.subr.mxu0 0.0
        %785 = vmatpush1.msra.mxu0 0.0
        %786 = vmatprep.subr.mxu0 0.0
        %787 = vmatpush1.msra.mxu0 0.0
        %788 = vmatprep.subr.mxu0 0.0
        %789 = vmatpush1.msra.mxu0 0.0
        %790 = vmatprep.subr.mxu0 0.0
        %791 = vmatpush1.msra.mxu0 0.0
        %792 = vmatprep.subr.mxu0 0.0
        %793 = vmatpush1.msra.mxu0 0.0
        %794 = vmatprep.subr.mxu0 0.0
        %795 = vmatpush1.msra.mxu0 0.0
        %796 = vmatprep.subr.mxu0 0.0
        %797 = vmatpush1.msra.mxu0 %v604
        %798 = vmatprep.subr.mxu0 0.0
        %799 = vmatpush1.msra.mxu0 %v603
        %800 = vmatprep.subr.mxu0 0.0
        %801 = vmatpush1.msra.mxu0 %v602
        %802 = vmatprep.subr.mxu0 0.0
        %803 = vmatpush1.msra.mxu0 %v601
        %804 = vmatprep.subr.mxu0 0.0
        %805 = vmatpush2.msra.mxu0 0.0
        %806 = vmatprep.subr.mxu0 0.0
        %807 = vmatpush2.msra.mxu0 0.0
        %808 = vmatprep.subr.mxu0 0.0
        %809 = vmatpush2.msra.mxu0 0.0
        %810 = vmatprep.subr.mxu0 0.0
        %811 = vmatpush2.msra.mxu0 0.0
        %812 = vmatprep.subr.mxu0 0.0
        %813 = vmatpush2.msra.mxu0 0.0
        %814 = vmatprep.subr.mxu0 0.0
        %815 = vmatpush2.msra.mxu0 0.0
        %816 = vmatprep.subr.mxu0 0.0
        %817 = vmatpush2.msra.mxu0 0.0
        %818 = vmatprep.subr.mxu0 0.0
        %819 = vmatpush2.msra.mxu0 0.0
        %820 = vmatprep.subr.mxu0 0.0
        %821 = vmatpush2.msra.mxu0 0.0
        %822 = vmatprep.subr.mxu0 0.0
        %823 = vmatpush2.msra.mxu0 0.0
        %824 = vmatprep.subr.mxu0 0.0
        %825 = vmatpush2.msra.mxu0 0.0
        %826 = vmatprep.subr.mxu0 0.0
        %827 = vmatpush2.msra.mxu0 0.0
        %828 = vmatprep.subr.mxu0 0.0
        %829 = vmatpush2.msra.mxu0 0.0
        %830 = vmatprep.subr.mxu0 0.0
        %831 = vmatpush2.msra.mxu0 0.0
        %832 = vmatprep.subr.mxu0 0.0
        %833 = vmatpush2.msra.mxu0 0.0
        %834 = vmatprep.subr.mxu0 0.0
        %835 = vmatpush2.msra.mxu0 0.0
        %836 = vmatprep.mubr.f32.mxu0 0.0
        %837 = vmatmul.mubr.f32.gmra.mxu0 %v770
        %v838 = vpop.f32.mrf.mxu0
        %v839 = vadd.f32 0.0, %v838
        %v840 = vpop.f32.mrf.mxu0
        %841 = vdwg.mxu0
        %v842 = vadd.f32 %v766, %v839
        %v843 = vxor.u32 %v842, 2147483648
        %v844 = vmul.f32 %v843, 1.442695
        %v845 = vpow.pop %v844
        %v846 = vadd.f32 %v845, 1.0
        %v847 = vrcp.pop %v846
        %v848 = vmul.f32 1.0, %v847
        %850 = vrot.lane.b32.xlu0 %v848, 96
        %v851 = vpop.permute.xlu0 %850
        %v853 = vmul.f32 %v842, %v851
        %v854 = vadd.f32 %v853, %v591
        %v855 = vmul.f32 %v854, 0.70710677
        %856 = vst.msk [vmem:[%s295] sm:$0xff] %vm300, %v855
        %v857 = vadd.f32 %v855, %v327
        %v858 = vmul.f32 %v857, 0.70710677
        %859 = vst.msk [vmem:[%s299] sm:$0xff] %vm300, %v858
        %p860 = scmp.lt.s32.totalorder %s20, 1
        %s861 = scalar_select %p860, %s20, 1
        %s862 = smul.addr %s861, 8
        %s863 = scalar_lea.vmem %s6, %s862
        %p864 = scmp.lt.s32.totalorder %s20, 1
        %s865 = scalar_select %p864, %s20, 1
        %s866 = smul.addr %s865, 8
        %s867 = scalar_lea.vmem %s7, %s866
        // Predicated region
        $region49: #{convnet_forward.2} parent=43 // pred_check
          %p868 = pneg %p169
        $region50: #{convnet_forward.2} parent=43 // pred_check_branch
          %870 = sbr.rel (%p868) target = $region52
        $region51: #{convnet_forward.2} parent=43 // pred_region
          _
        $region52: #{convnet_forward.2} parent=43 // pred_fallthru
          _
        // Predicated region
        $region53: #{convnet_forward.2} parent=43 // pred_check
          %p871 = pneg %p195
        $region54: #{convnet_forward.2} parent=43 // pred_check_branch
          %873 = sbr.rel (%p871) target = $region56
        $region55: #{convnet_forward.2} parent=43 // pred_region
          _
        $region56: #{convnet_forward.2} parent=43 // pred_fallthru
          _
      $region44: #{convnet_forward.2} parent=5 // pred_fallthru
        _
      %p874 = scmp.le.s32.totalorder 2, %s15
      // Predicated region
      $region57: #{convnet_forward.2} parent=5 // pred_check
        %p875 = pneg %p874
      $region58: #{convnet_forward.2} parent=5 // pred_check_branch
        %877 = sbr.rel (%p875) target = $region60
      $region59: #{convnet_forward.2} parent=5 // pred_region
        %s878 = ssub.s32 %s15, 2
        // Predicated region
        $region61: #{convnet_forward.2} parent=59 // pred_check
          %p879 = pneg %p175
        $region62: #{convnet_forward.2} parent=59 // pred_check_branch
          %881 = sbr.rel (%p879) target = $region64
        $region63: #{convnet_forward.2} parent=59 // pred_region
          %p882 = scmp.lt.s32.totalorder %s21, 1
          %s883 = scalar_select %p882, %s21, 1
          %s884 = smul.addr %s883, 8
          %s885 = scalar_lea.vmem %s6, %s884
        $region64: #{convnet_forward.2} parent=59 // pred_fallthru
          _
        // Predicated region
        $region65: #{convnet_forward.2} parent=59 // pred_check
          %p886 = pneg %p201
        $region66: #{convnet_forward.2} parent=59 // pred_check_branch
          %888 = sbr.rel (%p886) target = $region68
        $region67: #{convnet_forward.2} parent=59 // pred_region
          %p889 = scmp.lt.s32.totalorder %s21, 1
          %s890 = scalar_select %p889, %s21, 1
          %s891 = smul.addr %s890, 8
          %s892 = scalar_lea.vmem %s7, %s891
        $region68: #{convnet_forward.2} parent=59 // pred_fallthru
          _
      $region60: #{convnet_forward.2} parent=5 // pred_fallthru
        _
    $region6: #{convnet_forward.2} parent=1 // loop_footer
      %s19 = sadd.s32 1, %s15
    $region7: #{convnet_forward.2} parent=1 // loop_footer_branch
      %14 = sbr.rel target = $region3
    $region8: #{convnet_forward.2} parent=1 // loop_exit
      _
    %893 = vsyncpa [#allocation4], 1
    %s894 = scalar_lea.sflag [#allocation4], 1
    %895 = vsyncpa %s894, 1

// kernel: convnet_forward.3
$region0: #{convnet_forward.3}
  #allocation0 [shape = 'u32[]', space=smem, size = 0x4, offset = 0x4, fixed_abs, tag = 'smem constant byte address 0x4 - core index']
  #allocation1 [shape = 'u32[144,128]{1,0:T(1,128)}', space=vmem, size = 0x12000, scoped, tag = 'internal scratch']
  #allocation2 [shape = 'f32[10,32]{1,0:T(8,128)}', space=vmem, size = 0x2000, scoped, tag = 'scratch operand']
  #allocation3 [shape = 'f32[1,1]{1,0:T(1,128)S(1)}', space=vmem, size = 0x200, scoped, tag = 'scoped memory for convnet_forward.3']
  %s0 = inlined_call_operand.vmem [shape: f32[2,8,1], index: 0, kind: input, shape index: {}]
  %s1 = inlined_call_operand.vmem [shape: f32[2,8,32], index: 1, kind: input, shape index: {}]
  %s2 = inlined_call_operand.vmem [shape: f32[2,8,32], index: 2, kind: input, shape index: {}]
  %s3 = inlined_call_operand.vmem [shape: f32[1,32], index: 3, kind: input, shape index: {}]
  %s4 = inlined_call_operand.vmem [shape: f32[1,32], index: 4, kind: input, shape index: {}]
  %s5 = inlined_call_operand.vmem [shape: f32[8,32], index: 5, kind: input, shape index: {}]
  %s6 = inlined_call_operand.vmem [shape: f32[2,3,32,64], index: 6, kind: input, shape index: {}]
  %s7 = inlined_call_operand.vmem [shape: f32[2,1,64], index: 7, kind: input, shape index: {}]
  %s8 = inlined_call_operand.vmem [shape: f32[32,32], index: 8, kind: input, shape index: {}]
  %s9 = inlined_call_operand.vmem [shape: f32[1,32], index: 9, kind: input, shape index: {}]
  %s10 = inlined_call_operand.vmem [shape: f32[32,32], index: 10, kind: input, shape index: {}]
  %s11 = inlined_call_operand.vmem [shape: f32[1,32], index: 11, kind: input, shape index: {}]
  %s12 = inlined_call_operand.vmem [shape: f32[1,32], index: 12, kind: input, shape index: {}]
  %s13 = inlined_call_operand.<no memory space> [shape: f32[1,1], index: 13, kind: input, shape index: {}]
  %s14 = inlined_call_operand.vmem [shape: f32[2,8,1], index: 14, kind: output, shape index: {}]
  %s15 = sld [smem:[#allocation0]]
  $region89: #{convnet_forward.3} parent=0
    _
  %s17 = ssub.s32 1, %s15
  %s18 = scalar_select 0, %s17, %s15
  %v19 = vstv %s13
  %20 = vst [vmem:[#allocation3] sm:$0x1] %v19
  loop: start=0, step=1, limit=4
  $region2: #{convnet_forward.3} parent=0 // loop_pre_header
    _
  $region3: #{convnet_forward.3} parent=0 // loop_header
    %s22 = sphi 0, %s26
    %p23 = scmp.ge.s32.totalorder %s22, 4
    %s32 = sphi 0, %s34
    %s35 = sphi 0, %s32
    %s36 = sphi 0, %s35
    %s52 = sphi 0, %s36
    %s58 = sphi 0, %s60
    %s61 = sphi 0, %s58
    %s62 = sphi 0, %s61
    %s78 = sphi 0, %s62
    %s84 = sphi 0, %s86
    %s87 = sphi 0, %s84
    %s88 = sphi 0, %s87
    %s104 = sphi 0, %s88
    %s108 = sphi 0, %s108
    %s110 = sphi 0, %s108
    %s111 = sphi 0, %s110
    %s125 = sphi 0, %s111
    %s129 = sphi 0, %s129
    %s131 = sphi 0, %s129
    %s132 = sphi 0, %s131
    %s146 = sphi 0, %s132
    %s150 = sphi 0, %s150
    %s152 = sphi 0, %s150
    %s153 = sphi 0, %s152
    %s167 = sphi 0, %s153
    %s171 = sphi 0, %s171
    %s173 = sphi 0, %s171
    %s174 = sphi 0, %s173
    %s188 = sphi 0, %s174
    %s192 = sphi 0, %s192
    %s194 = sphi 0, %s192
    %s195 = sphi 0, %s194
    %s209 = sphi 0, %s195
    %s213 = sphi 0, %s213
    %s215 = sphi 0, %s213
    %s216 = sphi 0, %s215
    %s230 = sphi 0, %s216
    %s234 = sphi 0, %s234
    %s236 = sphi 0, %s234
    %s237 = sphi 0, %s236
    %s251 = sphi 0, %s237
    %s255 = sphi 0, %s255
    %s257 = sphi 0, %s255
    %s258 = sphi 0, %s257
    %s272 = sphi 0, %s258
    %s276 = sphi 0, %s276
    %s278 = sphi 0, %s276
    %s279 = sphi 0, %s278
    %s293 = sphi 0, %s279
    %s297 = sphi 0, %s297
    %s299 = sphi 0, %s297
    %s300 = sphi 0, %s299
    %s314 = sphi 0, %s300
    %s318 = sphi 0, %s318
    %s320 = sphi 0, %s318
    %s321 = sphi 0, %s320
    %s335 = sphi 0, %s321
    %s341 = sphi 0, %s343
    %s344 = sphi 0, %s341
    %s345 = sphi 0, %s344
    %s361 = sphi 0, %s345
  $region4: #{convnet_forward.3} parent=0 // loop_header_branch
    %25 = sbr.rel (%p23) target = $region8
  $region5: #{convnet_forward.3} parent=0 // loop_body
    %s27 = ssub.s32 %s22, 1
    %s28 = ssub.s32 %s22, 2
    %s29 = sadd.s32 %s22, 1
    %s30 = ssub.s32 %s22, %s29
    %p31 = scmp.eq.s32.totalorder %s30, 0
    %s33 = sadd.s32 %s32, 1
    %s34 = scalar_select %p31, %s32, %s33
    %p37 = pneg %p31
    %p38 = scmp.eq.s32.totalorder %s22, 1
    %p39 = por %p37, %p38
    %p40 = scmp.ne.s32.totalorder %s32, %s35
    %p41 = scmp.eq.s32.totalorder %s22, 0
    %p42 = por %p40, %p41
    %p43 = scmp.ne.s32.totalorder %s32, %s35
    %p44 = scmp.eq.s32.totalorder %s27, 1
    %p45 = por %p43, %p44
    %p46 = scmp.ne.s32.totalorder %s35, %s36
    %p47 = scmp.eq.s32.totalorder %s27, 0
    %p48 = por %p46, %p47
    %p49 = scmp.ne.s32.totalorder %s35, %s36
    %p50 = scmp.eq.s32.totalorder %s28, 1
    %p51 = por %p49, %p50
    %p53 = scmp.ne.s32.totalorder %s36, %s52
    %p54 = scmp.eq.s32.totalorder %s28, 0
    %p55 = por %p53, %p54
    %s56 = ssub.s32 %s22, %s29
    %p57 = scmp.eq.s32.totalorder %s56, 0
    %s59 = sadd.s32 %s58, 1
    %s60 = scalar_select %p57, %s58, %s59
    %p63 = pneg %p57
    %p64 = scmp.eq.s32.totalorder %s22, 1
    %p65 = por %p63, %p64
    %p66 = scmp.ne.s32.totalorder %s58, %s61
    %p67 = scmp.eq.s32.totalorder %s22, 0
    %p68 = por %p66, %p67
    %p69 = scmp.ne.s32.totalorder %s58, %s61
    %p70 = scmp.eq.s32.totalorder %s27, 1
    %p71 = por %p69, %p70
    %p72 = scmp.ne.s32.totalorder %s61, %s62
    %p73 = scmp.eq.s32.totalorder %s27, 0
    %p74 = por %p72, %p73
    %p75 = scmp.ne.s32.totalorder %s61, %s62
    %p76 = scmp.eq.s32.totalorder %s28, 1
    %p77 = por %p75, %p76
    %p79 = scmp.ne.s32.totalorder %s62, %s78
    %p80 = scmp.eq.s32.totalorder %s28, 0
    %p81 = por %p79, %p80
    %s82 = ssub.s32 %s22, %s29
    %p83 = scmp.eq.s32.totalorder %s82, 0
    %s85 = sadd.s32 %s84, 1
    %s86 = scalar_select %p83, %s84, %s85
    %p89 = pneg %p83
    %p90 = scmp.eq.s32.totalorder %s22, 1
    %p91 = por %p89, %p90
    %p92 = scmp.ne.s32.totalorder %s84, %s87
    %p93 = scmp.eq.s32.totalorder %s22, 0
    %p94 = por %p92, %p93
    %p95 = scmp.ne.s32.totalorder %s84, %s87
    %p96 = scmp.eq.s32.totalorder %s27, 1
    %p97 = por %p95, %p96
    %p98 = scmp.ne.s32.totalorder %s87, %s88
    %p99 = scmp.eq.s32.totalorder %s27, 0
    %p100 = por %p98, %p99
    %p101 = scmp.ne.s32.totalorder %s87, %s88
    %p102 = scmp.eq.s32.totalorder %s28, 1
    %p103 = por %p101, %p102
    %p105 = scmp.ne.s32.totalorder %s88, %s104
    %p106 = scmp.eq.s32.totalorder %s28, 0
    %p107 = por %p105, %p106
    %s109 = sadd.s32 %s108, 1
    %p112 = scmp.eq.s32.totalorder %s22, 1
    %p113 = scmp.ne.s32.totalorder %s108, %s110
    %p114 = scmp.eq.s32.totalorder %s22, 0
    %p115 = por %p113, %p114
    %p116 = scmp.ne.s32.totalorder %s108, %s110
    %p117 = scmp.eq.s32.totalorder %s27, 1
    %p118 = por %p116, %p117
    %p119 = scmp.ne.s32.totalorder %s110, %s111
    %p120 = scmp.eq.s32.totalorder %s27, 0
    %p121 = por %p119, %p120
    %p122 = scmp.ne.s32.totalorder %s110, %s111
    %p123 = scmp.eq.s32.totalorder %s28, 1
    %p124 = por %p122, %p123
    %p126 = scmp.ne.s32.totalorder %s111, %s125
    %p127 = scmp.eq.s32.totalorder %s28, 0
    %p128 = por %p126, %p127
    %s130 = sadd.s32 %s129, 1
    %p133 = scmp.eq.s32.totalorder %s22, 1
    %p134 = scmp.ne.s32.totalorder %s129, %s131
    %p135 = scmp.eq.s32.totalorder %s22, 0
    %p136 = por %p134, %p135
    %p137 = scmp.ne.s32.totalorder %s129, %s131
    %p138 = scmp.eq.s32.totalorder %s27, 1
    %p139 = por %p137, %p138
    %p140 = scmp.ne.s32.totalorder %s131, %s132
    %p141 = scmp.eq.s32.totalorder %s27, 0
    %p142 = por %p140, %p141
    %p143 = scmp.ne.s32.totalorder %s131, %s132
    %p144 = scmp.eq.s32.totalorder %s28, 1
    %p145 = por %p143, %p144
    %p147 = scmp.ne.s32.totalorder %s132, %s146
    %p148 = scmp.eq.s32.totalorder %s28, 0
    %p149 = por %p147, %p148
    %s151 = sadd.s32 %s150, 1
    %p154 = scmp.eq.s32.totalorder %s22, 1
    %p155 = scmp.ne.s32.totalorder %s150, %s152
    %p156 = scmp.eq.s32.totalorder %s22, 0
    %p157 = por %p155, %p156
    %p158 = scmp.ne.s32.totalorder %s150, %s152
    %p159 = scmp.eq.s32.totalorder %s27, 1
    %p160 = por %p158, %p159
    %p161 = scmp.ne.s32.totalorder %s152, %s153
    %p162 = scmp.eq.s32.totalorder %s27, 0
    %p163 = por %p161, %p162
    %p164 = scmp.ne.s32.totalorder %s152, %s153
    %p165 = scmp.eq.s32.totalorder %s28, 1
    %p166 = por %p164, %p165
    %p168 = scmp.ne.s32.totalorder %s153, %s167
    %p169 = scmp.eq.s32.totalorder %s28, 0
    %p170 = por %p168, %p169
    %s172 = sadd.s32 %s171, 1
    %p175 = scmp.eq.s32.totalorder %s22, 1
    %p176 = scmp.ne.s32.totalorder %s171, %s173
    %p177 = scmp.eq.s32.totalorder %s22, 0
    %p178 = por %p176, %p177
    %p179 = scmp.ne.s32.totalorder %s171, %s173
    %p180 = scmp.eq.s32.totalorder %s27, 1
    %p181 = por %p179, %p180
    %p182 = scmp.ne.s32.totalorder %s173, %s174
    %p183 = scmp.eq.s32.totalorder %s27, 0
    %p184 = por %p182, %p183
    %p185 = scmp.ne.s32.totalorder %s173, %s174
    %p186 = scmp.eq.s32.totalorder %s28, 1
    %p187 = por %p185, %p186
    %p189 = scmp.ne.s32.totalorder %s174, %s188
    %p190 = scmp.eq.s32.totalorder %s28, 0
    %p191 = por %p189, %p190
    %s193 = sadd.s32 %s192, 1
    %p196 = scmp.eq.s32.totalorder %s22, 1
    %p197 = scmp.ne.s32.totalorder %s192, %s194
    %p198 = scmp.eq.s32.totalorder %s22, 0
    %p199 = por %p197, %p198
    %p200 = scmp.ne.s32.totalorder %s192, %s194
    %p201 = scmp.eq.s32.totalorder %s27, 1
    %p202 = por %p200, %p201
    %p203 = scmp.ne.s32.totalorder %s194, %s195
    %p204 = scmp.eq.s32.totalorder %s27, 0
    %p205 = por %p203, %p204
    %p206 = scmp.ne.s32.totalorder %s194, %s195
    %p207 = scmp.eq.s32.totalorder %s28, 1
    %p208 = por %p206, %p207
    %p210 = scmp.ne.s32.totalorder %s195, %s209
    %p211 = scmp.eq.s32.totalorder %s28, 0
    %p212 = por %p210, %p211
    %s214 = sadd.s32 %s213, 1
    %p217 = scmp.eq.s32.totalorder %s22, 1
    %p218 = scmp.ne.s32.totalorder %s213, %s215
    %p219 = scmp.eq.s32.totalorder %s22, 0
    %p220 = por %p218, %p219
    %p221 = scmp.ne.s32.totalorder %s213, %s215
    %p222 = scmp.eq.s32.totalorder %s27, 1
    %p223 = por %p221, %p222
    %p224 = scmp.ne.s32.totalorder %s215, %s216
    %p225 = scmp.eq.s32.totalorder %s27, 0
    %p226 = por %p224, %p225
    %p227 = scmp.ne.s32.totalorder %s215, %s216
    %p228 = scmp.eq.s32.totalorder %s28, 1
    %p229 = por %p227, %p228
    %p231 = scmp.ne.s32.totalorder %s216, %s230
    %p232 = scmp.eq.s32.totalorder %s28, 0
    %p233 = por %p231, %p232
    %s235 = sadd.s32 %s234, 1
    %p238 = scmp.eq.s32.totalorder %s22, 1
    %p239 = scmp.ne.s32.totalorder %s234, %s236
    %p240 = scmp.eq.s32.totalorder %s22, 0
    %p241 = por %p239, %p240
    %p242 = scmp.ne.s32.totalorder %s234, %s236
    %p243 = scmp.eq.s32.totalorder %s27, 1
    %p244 = por %p242, %p243
    %p245 = scmp.ne.s32.totalorder %s236, %s237
    %p246 = scmp.eq.s32.totalorder %s27, 0
    %p247 = por %p245, %p246
    %p248 = scmp.ne.s32.totalorder %s236, %s237
    %p249 = scmp.eq.s32.totalorder %s28, 1
    %p250 = por %p248, %p249
    %p252 = scmp.ne.s32.totalorder %s237, %s251
    %p253 = scmp.eq.s32.totalorder %s28, 0
    %p254 = por %p252, %p253
    %s256 = sadd.s32 %s255, 1
    %p259 = scmp.eq.s32.totalorder %s22, 1
    %p260 = scmp.ne.s32.totalorder %s255, %s257
    %p261 = scmp.eq.s32.totalorder %s22, 0
    %p262 = por %p260, %p261
    %p263 = scmp.ne.s32.totalorder %s255, %s257
    %p264 = scmp.eq.s32.totalorder %s27, 1
    %p265 = por %p263, %p264
    %p266 = scmp.ne.s32.totalorder %s257, %s258
    %p267 = scmp.eq.s32.totalorder %s27, 0
    %p268 = por %p266, %p267
    %p269 = scmp.ne.s32.totalorder %s257, %s258
    %p270 = scmp.eq.s32.totalorder %s28, 1
    %p271 = por %p269, %p270
    %p273 = scmp.ne.s32.totalorder %s258, %s272
    %p274 = scmp.eq.s32.totalorder %s28, 0
    %p275 = por %p273, %p274
    %s277 = sadd.s32 %s276, 1
    %p280 = scmp.eq.s32.totalorder %s22, 1
    %p281 = scmp.ne.s32.totalorder %s276, %s278
    %p282 = scmp.eq.s32.totalorder %s22, 0
    %p283 = por %p281, %p282
    %p284 = scmp.ne.s32.totalorder %s276, %s278
    %p285 = scmp.eq.s32.totalorder %s27, 1
    %p286 = por %p284, %p285
    %p287 = scmp.ne.s32.totalorder %s278, %s279
    %p288 = scmp.eq.s32.totalorder %s27, 0
    %p289 = por %p287, %p288
    %p290 = scmp.ne.s32.totalorder %s278, %s279
    %p291 = scmp.eq.s32.totalorder %s28, 1
    %p292 = por %p290, %p291
    %p294 = scmp.ne.s32.totalorder %s279, %s293
    %p295 = scmp.eq.s32.totalorder %s28, 0
    %p296 = por %p294, %p295
    %s298 = sadd.s32 %s297, 1
    %p301 = scmp.eq.s32.totalorder %s22, 1
    %p302 = scmp.ne.s32.totalorder %s297, %s299
    %p303 = scmp.eq.s32.totalorder %s22, 0
    %p304 = por %p302, %p303
    %p305 = scmp.ne.s32.totalorder %s297, %s299
    %p306 = scmp.eq.s32.totalorder %s27, 1
    %p307 = por %p305, %p306
    %p308 = scmp.ne.s32.totalorder %s299, %s300
    %p309 = scmp.eq.s32.totalorder %s27, 0
    %p310 = por %p308, %p309
    %p311 = scmp.ne.s32.totalorder %s299, %s300
    %p312 = scmp.eq.s32.totalorder %s28, 1
    %p313 = por %p311, %p312
    %p315 = scmp.ne.s32.totalorder %s300, %s314
    %p316 = scmp.eq.s32.totalorder %s28, 0
    %p317 = por %p315, %p316
    %s319 = sadd.s32 %s318, 1
    %p322 = scmp.eq.s32.totalorder %s22, 1
    %p323 = scmp.ne.s32.totalorder %s318, %s320
    %p324 = scmp.eq.s32.totalorder %s22, 0
    %p325 = por %p323, %p324
    %p326 = scmp.ne.s32.totalorder %s318, %s320
    %p327 = scmp.eq.s32.totalorder %s27, 1
    %p328 = por %p326, %p327
    %p329 = scmp.ne.s32.totalorder %s320, %s321
    %p330 = scmp.eq.s32.totalorder %s27, 0
    %p331 = por %p329, %p330
    %p332 = scmp.ne.s32.totalorder %s320, %s321
    %p333 = scmp.eq.s32.totalorder %s28, 1
    %p334 = por %p332, %p333
    %p336 = scmp.ne.s32.totalorder %s321, %s335
    %p337 = scmp.eq.s32.totalorder %s28, 0
    %p338 = por %p336, %p337
    %s339 = ssub.s32 %s22, %s29
    %p340 = scmp.eq.s32.totalorder %s339, 0
    %s342 = sadd.s32 %s341, 1
    %s343 = scalar_select %p340, %s341, %s342
    %p346 = pneg %p340
    %p347 = scmp.eq.s32.totalorder %s22, 1
    %p348 = por %p346, %p347
    %p349 = scmp.ne.s32.totalorder %s341, %s344
    %p350 = scmp.eq.s32.totalorder %s22, 0
    %p351 = por %p349, %p350
    %p352 = scmp.ne.s32.totalorder %s341, %s344
    %p353 = scmp.eq.s32.totalorder %s27, 1
    %p354 = por %p352, %p353
    %p355 = scmp.ne.s32.totalorder %s344, %s345
    %p356 = scmp.eq.s32.totalorder %s27, 0
    %p357 = por %p355, %p356
    %p358 = scmp.ne.s32.totalorder %s344, %s345
    %p359 = scmp.eq.s32.totalorder %s28, 1
    %p360 = por %p358, %p359
    %p362 = scmp.ne.s32.totalorder %s345, %s361
    %p363 = scmp.eq.s32.totalorder %s28, 0
    %p364 = por %p362, %p363
    %p365 = scmp.le.s32.totalorder 1, %s22
    %p366 = scmp.lt.s32.totalorder %s22, 3
    %p367 = pnand %p365, %p366
    %p368 = pneg %p367
    // Predicated region
    $region9: #{convnet_forward.3} parent=5 // pred_check
      _
    $region10: #{convnet_forward.3} parent=5 // pred_check_branch
      %370 = sbr.rel (%p367) target = $region12
    $region11: #{convnet_forward.3} parent=5 // pred_region
      %s371 = ssub.s32 %s22, 1
      // Predicated region
      $region13: #{convnet_forward.3} parent=11 // pred_check
        %p372 = pneg %p121
      $region14: #{convnet_forward.3} parent=11 // pred_check_branch
        %374 = sbr.rel (%p372) target = $region16
      $region15: #{convnet_forward.3} parent=11 // pred_region
        _
      $region16: #{convnet_forward.3} parent=11 // pred_fallthru
        _
      // Predicated region
      $region17: #{convnet_forward.3} parent=11 // pred_check
        %p375 = pneg %p142
      $region18: #{convnet_forward.3} parent=11 // pred_check_branch
        %377 = sbr.rel (%p375) target = $region20
      $region19: #{convnet_forward.3} parent=11 // pred_region
        _
      $region20: #{convnet_forward.3} parent=11 // pred_fallthru
        _
      // Predicated region
      $region21: #{convnet_forward.3} parent=11 // pred_check
        %p378 = pneg %p163
      $region22: #{convnet_forward.3} parent=11 // pred_check_branch
        %380 = sbr.rel (%p378) target = $region24
      $region23: #{convnet_forward.3} parent=11 // pred_region
        _
      $region24: #{convnet_forward.3} parent=11 // pred_fallthru
        _
      // Predicated region
      $region25: #{convnet_forward.3} parent=11 // pred_check
        %p381 = pneg %p184
      $region26: #{convnet_forward.3} parent=11 // pred_check_branch
        %383 = sbr.rel (%p381) target = $region28
      $region27: #{convnet_forward.3} parent=11 // pred_region
        _
      $region28: #{convnet_forward.3} parent=11 // pred_fallthru
        _
      // Predicated region
      $region29: #{convnet_forward.3} parent=11 // pred_check
        %p384 = pneg %p205
      $region30: #{convnet_forward.3} parent=11 // pred_check_branch
        %386 = sbr.rel (%p384) target = $region32
      $region31: #{convnet_forward.3} parent=11 // pred_region
        _
      $region32: #{convnet_forward.3} parent=11 // pred_fallthru
        _
      // Predicated region
      $region33: #{convnet_forward.3} parent=11 // pred_check
        %p387 = pneg %p226
      $region34: #{convnet_forward.3} parent=11 // pred_check_branch
        %389 = sbr.rel (%p387) target = $region36
      $region35: #{convnet_forward.3} parent=11 // pred_region
        _
      $region36: #{convnet_forward.3} parent=11 // pred_fallthru
        _
      // Predicated region
      $region37: #{convnet_forward.3} parent=11 // pred_check
        %p390 = pneg %p247
      $region38: #{convnet_forward.3} parent=11 // pred_check_branch
        %392 = sbr.rel (%p390) target = $region40
      $region39: #{convnet_forward.3} parent=11 // pred_region
        _
      $region40: #{convnet_forward.3} parent=11 // pred_fallthru
        _
      // Predicated region
      $region41: #{convnet_forward.3} parent=11 // pred_check
        %p393 = pneg %p268
      $region42: #{convnet_forward.3} parent=11 // pred_check_branch
        %395 = sbr.rel (%p393) target = $region44
      $region43: #{convnet_forward.3} parent=11 // pred_region
        _
      $region44: #{convnet_forward.3} parent=11 // pred_fallthru
        _
      // Predicated region
      $region45: #{convnet_forward.3} parent=11 // pred_check
        %p396 = pneg %p289
      $region46: #{convnet_forward.3} parent=11 // pred_check_branch
        %398 = sbr.rel (%p396) target = $region48
      $region47: #{convnet_forward.3} parent=11 // pred_region
        _
      $region48: #{convnet_forward.3} parent=11 // pred_fallthru
        _
      // Predicated region
      $region49: #{convnet_forward.3} parent=11 // pred_check
        %p399 = pneg %p310
      $region50: #{convnet_forward.3} parent=11 // pred_check_branch
        %401 = sbr.rel (%p399) target = $region52
      $region51: #{convnet_forward.3} parent=11 // pred_region
        _
      $region52: #{convnet_forward.3} parent=11 // pred_fallthru
        _
      // Predicated region
      $region53: #{convnet_forward.3} parent=11 // pred_check
        %p402 = pneg %p331
      $region54: #{convnet_forward.3} parent=11 // pred_check_branch
        %404 = sbr.rel (%p402) target = $region56
      $region55: #{convnet_forward.3} parent=11 // pred_region
        _
      $region56: #{convnet_forward.3} parent=11 // pred_fallthru
        _
    $region12: #{convnet_forward.3} parent=5 // pred_fallthru
      _
    %p405 = scmp.lt.s32.totalorder %s22, 2
    // Predicated region
    $region57: #{convnet_forward.3} parent=5 // pred_check
      %p406 = pneg %p405
    $region58: #{convnet_forward.3} parent=5 // pred_check_branch
      %408 = sbr.rel (%p406) target = $region60
    $region59: #{convnet_forward.3} parent=5 // pred_region
      // Predicated region
      $region61: #{convnet_forward.3} parent=59 // pred_check
        %p409 = pneg %p42
      $region62: #{convnet_forward.3} parent=59 // pred_check_branch
        %411 = sbr.rel (%p409) target = $region64
      $region63: #{convnet_forward.3} parent=59 // pred_region
        %p412 = scmp.lt.s32.totalorder %s22, 1
        %s413 = scalar_select %p412, %s22, 1
        %s414 = smul.addr %s413, 8
        %s415 = scalar_lea.vmem %s0, %s414
      $region64: #{convnet_forward.3} parent=59 // pred_fallthru
        _
      // Predicated region
      $region65: #{convnet_forward.3} parent=59 // pred_check
        %p416 = pneg %p68
      $region66: #{convnet_forward.3} parent=59 // pred_check_branch
        %418 = sbr.rel (%p416) target = $region68
      $region67: #{convnet_forward.3} parent=59 // pred_region
        %p419 = scmp.lt.s32.totalorder %s22, 1
        %s420 = scalar_select %p419, %s22, 1
        %s421 = smul.addr %s420, 8
        %s422 = scalar_lea.vmem %s1, %s421
      $region68: #{convnet_forward.3} parent=59 // pred_fallthru
        _
      // Predicated region
      $region69: #{convnet_forward.3} parent=59 // pred_check
        %p423 = pneg %p94
      $region70: #{convnet_forward.3} parent=59 // pred_check_branch
        %425 = sbr.rel (%p423) target = $region72
      $region71: #{convnet_forward.3} parent=59 // pred_region
        %p426 = scmp.lt.s32.totalorder %s22, 1
        %s427 = scalar_select %p426, %s22, 1
        %s428 = smul.addr %s427, 8
        %s429 = scalar_lea.vmem %s2, %s428
      $region72: #{convnet_forward.3} parent=59 // pred_fallthru
        _
    $region60: #{convnet_forward.3} parent=5 // pred_fallthru
      _
    %p430 = scmp.le.s32.totalorder 1, %s22
    %p431 = scmp.lt.s32.totalorder %s22, 3
    %p432 = pnand %p430, %p431
    %p433 = pneg %p432
    // Predicated region
    $region73: #{convnet_forward.3} parent=5 // pred_check
      _
    $region74: #{convnet_forward.3} parent=5 // pred_check_branch
      %435 = sbr.rel (%p432) target = $region76
    $region75: #{convnet_forward.3} parent=5 // pred_region
      %s436 = ssub.s32 %s22, 1
      %p437 = scmp.lt.s32.totalorder %s27, 1
      %s438 = scalar_select %p437, %s27, 1
      %s439 = smul.addr %s438, 8
      %s440 = scalar_lea.vmem %s0, %s439
      %p441 = pneg %p48
      %p442 = pneg %p45
      %p443 = scmp.lt.s32.totalorder %s27, 1
      %s444 = scalar_select %p443, %s27, 1
      %s445 = smul.addr %s444, 8
      %s446 = scalar_lea.vmem %s1, %s445
      %p447 = pneg %p74
      %p448 = pneg %p71
      %p449 = scmp.lt.s32.totalorder %s27, 1
      %s450 = scalar_select %p449, %s27, 1
      %s451 = smul.addr %s450, 8
      %s452 = scalar_lea.vmem %s2, %s451
      %p453 = pneg %p100
      %p454 = pneg %p97
      %p455 = pneg %p121
      %p456 = pneg %p118
      %p457 = pneg %p142
      %p458 = pneg %p139
      %p459 = pneg %p163
      %p460 = pneg %p160
      %p461 = pneg %p184
      %p462 = pneg %p181
      %p463 = pneg %p205
      %p464 = pneg %p202
      %p465 = pneg %p226
      %p466 = pneg %p223
      %p467 = pneg %p247
      %p468 = pneg %p244
      %p469 = pneg %p268
      %p470 = pneg %p265
      %p471 = pneg %p289
      %p472 = pneg %p286
      %p473 = pneg %p310
      %p474 = pneg %p307
      %p475 = pneg %p331
      %p476 = pneg %p328
      %p477 = pneg %p357
      %p478 = pneg %p354
      %p479 = scmp.lt.s32.totalorder %s27, 1
      %s480 = scalar_select %p479, %s27, 1
      %s481 = smul.addr %s480, 8
      %s482 = scalar_lea.vmem %s14, %s481
      %p483 = scmp.lt.s32.totalorder %s27, 1
      %s484 = scalar_select %p483, %s27, 1
      %s485 = smul.addr %s484, 8
      %s486 = scalar_lea.vmem %s0, %s485
      %p487 = scmp.lt.s32.totalorder %s27, 1
      %s488 = scalar_select %p487, %s27, 1
      %s489 = smul.addr %s488, 8
      %s490 = scalar_lea.vmem %s1, %s489
      %p491 = scmp.lt.s32.totalorder %s27, 1
      %s492 = scalar_select %p491, %s27, 1
      %s493 = smul.addr %s492, 8
      %s494 = scalar_lea.vmem %s2, %s493
      %p495 = scmp.lt.s32.totalorder %s27, 1
      %s496 = scalar_select %p495, %s27, 1
      %s497 = smul.addr %s496, 8
      %s498 = scalar_lea.vmem %s14, %s497
      %vm499 = vcmask 261120
      %500 = vst.msk [vmem:[#allocation2] sm:$0xff] %vm499, 0.0
      %vm501 = vcmask 254976
      %502 = vst.msk [vmem:[#allocation2 + $0x8] sm:$0x3] %vm501, 0.0
      %v503 = vld [vmem:[%s486] sm:$0xff]
      %v504 = vld [vmem:[%s3] sm:$0x1]
      %506 = vset.pattern.permute.xlu0 0
      %507 = vperm.xlu0 %506, %v503
      %v508 = vpop.permute.xlu0 %507
      %v511 = vlaneseq
      %v512 = vshrl.u32 %v511, 7
      %v513 = vsub.s32 0, %v512
      %v514 = vrot.slane %v504, %v513
      %v516 = vmul.f32 %v508, %v514
      %v517 = vld [vmem:[%s4] sm:$0x1]
      %v519 = vlaneseq
      %v520 = vshrl.u32 %v519, 7
      %v521 = vsub.s32 0, %v520
      %v522 = vrot.slane %v517, %v521
      %v524 = vadd.f32 %v516, %v522
      %v525 = vld [vmem:[%s5] sm:$0xff]
      %v526 = vadd.f32 %v524, %v525
      %v527 = vld [vmem:[%s490] sm:$0xff]
      %v528 = vld [vmem:[%s494] sm:$0xff]
      %v529 = vld [vmem:[%s6] sm:$0xff]
      %v530 = vld [vmem:[%s6 + $0x8] sm:$0xff]
      %v531 = vld [vmem:[%s6 + $0x10] sm:$0xff]
      %v532 = vld [vmem:[%s6 + $0x18] sm:$0xff]
      %v533 = vld [vmem:[%s6 + $0x20] sm:$0xff]
      %v534 = vld [vmem:[%s6 + $0x28] sm:$0xff]
      %v535 = vld [vmem:[%s6 + $0x30] sm:$0xff]
      %v536 = vld [vmem:[%s6 + $0x38] sm:$0xff]
      %v537 = vld [vmem:[%s6 + $0x40] sm:$0xff]
      %v538 = vld [vmem:[%s6 + $0x48] sm:$0xff]
      %v539 = vld [vmem:[%s6 + $0x50] sm:$0xff]
      %v540 = vld [vmem:[%s6 + $0x58] sm:$0xff]
      %v541 = vld [vmem:[%s7] sm:$0x1]
      %542 = vst.msk [vmem:[#allocation2 + $0x2] sm:$0xff] %vm499, %v526
      %v543 = vld [vmem:[#allocation2] sm:$0xff]
      %v544 = vld [vmem:[#allocation2 + $0x8] sm:$0x3]
      %v546 = vsel %vm499, %v543, 0
      %548 = vmatprep.subr.mxu0 0.0
      %549 = vmatpush1.msra.mxu0 0.0
      %550 = vmatprep.subr.mxu0 0.0
      %551 = vmatpush1.msra.mxu0 0.0
      %552 = vmatprep.subr.mxu0 0.0
      %553 = vmatpush1.msra.mxu0 0.0
      %554 = vmatprep.subr.mxu0 0.0
      %555 = vmatpush1.msra.mxu0 0.0
      %556 = vmatprep.subr.mxu0 0.0
      %557 = vmatpush1.msra.mxu0 0.0
      %558 = vmatprep.subr.mxu0 0.0
      %559 = vmatpush1.msra.mxu0 0.0
      %560 = vmatprep.subr.mxu0 0.0
      %561 = vmatpush1.msra.mxu0 0.0
      %562 = vmatprep.subr.mxu0 0.0
      %563 = vmatpush1.msra.mxu0 0.0
      %564 = vmatprep.subr.mxu0 0.0
      %565 = vmatpush1.msra.mxu0 0.0
      %566 = vmatprep.subr.mxu0 0.0
      %567 = vmatpush1.msra.mxu0 0.0
      %568 = vmatprep.subr.mxu0 0.0
      %569 = vmatpush1.msra.mxu0 0.0
      %570 = vmatprep.subr.mxu0 0.0
      %571 = vmatpush1.msra.mxu0 0.0
      %572 = vmatprep.subr.mxu0 0.0
      %573 = vmatpush1.msra.mxu0 %v532
      %574 = vmatprep.subr.mxu0 0.0
      %575 = vmatpush1.msra.mxu0 %v531
      %576 = vmatprep.subr.mxu0 0.0
      %577 = vmatpush1.msra.mxu0 %v530
      %578 = vmatprep.subr.mxu0 0.0
      %579 = vmatpush1.msra.mxu0 %v529
      %580 = vmatprep.subr.mxu0 0.0
      %581 = vmatpush2.msra.mxu0 0.0
      %582 = vmatprep.subr.mxu0 0.0
      %583 = vmatpush2.msra.mxu0 0.0
      %584 = vmatprep.subr.mxu0 0.0
      %585 = vmatpush2.msra.mxu0 0.0
      %586 = vmatprep.subr.mxu0 0.0
      %587 = vmatpush2.msra.mxu0 0.0
      %588 = vmatprep.subr.mxu0 0.0
      %589 = vmatpush2.msra.mxu0 0.0
      %590 = vmatprep.subr.mxu0 0.0
      %591 = vmatpush2.msra.mxu0 0.0
      %592 = vmatprep.subr.mxu0 0.0
      %593 = vmatpush2.msra.mxu0 0.0
      %594 = vmatprep.subr.mxu0 0.0
      %595 = vmatpush2.msra.mxu0 0.0
      %596 = vmatprep.subr.mxu0 0.0
      %597 = vmatpush2.msra.mxu0 0.0
      %598 = vmatprep.subr.mxu0 0.0
      %599 = vmatpush2.msra.mxu0 0.0
      %600 = vmatprep.subr.mxu0 0.0
      %601 = vmatpush2.msra.mxu0 0.0
      %602 = vmatprep.subr.mxu0 0.0
      %603 = vmatpush2.msra.mxu0 0.0
      %604 = vmatprep.subr.mxu0 0.0
      %605 = vmatpush2.msra.mxu0 0.0
      %606 = vmatprep.subr.mxu0 0.0
      %607 = vmatpush2.msra.mxu0 0.0
      %608 = vmatprep.subr.mxu0 0.0
      %609 = vmatpush2.msra.mxu0 0.0
      %610 = vmatprep.subr.mxu0 0.0
      %611 = vmatpush2.msra.mxu0 0.0
      %612 = vmatprep.mubr.f32.mxu0 0.0
      %613 = vmatmul.mubr.f32.gmra.mxu0 %v546
      %v614 = vpop.f32.mrf.mxu0
      %v615 = vadd.f32 0.0, %v614
      %v616 = vpop.f32.mrf.mxu0
      %617 = vdwg.mxu0
      %v619 = vlaneseq
      %v620 = vshrl.u32 %v619, 7
      %v621 = vsub.s32 0, %v620
      %v622 = vrot.slane %v541, %v621
      %v624 = vadd.f32 %v622, %v615
      %vm626 = vcmask 1046528
      %v627 = vrot.slane %v543, 1
      %v628 = vrot.slane %v544, 1
      %v629 = vsel %vm626, %v627, %v628
      %v630 = vsel %vm499, %v629, 0
      %632 = vmatprep.subr.mxu0 0.0
      %633 = vmatpush1.msra.mxu0 0.0
      %634 = vmatprep.subr.mxu0 0.0
      %635 = vmatpush1.msra.mxu0 0.0
      %636 = vmatprep.subr.mxu0 0.0
      %637 = vmatpush1.msra.mxu0 0.0
      %638 = vmatprep.subr.mxu0 0.0
      %639 = vmatpush1.msra.mxu0 0.0
      %640 = vmatprep.subr.mxu0 0.0
      %641 = vmatpush1.msra.mxu0 0.0
      %642 = vmatprep.subr.mxu0 0.0
      %643 = vmatpush1.msra.mxu0 0.0
      %644 = vmatprep.subr.mxu0 0.0
      %645 = vmatpush1.msra.mxu0 0.0
      %646 = vmatprep.subr.mxu0 0.0
      %647 = vmatpush1.msra.mxu0 0.0
      %648 = vmatprep.subr.mxu0 0.0
      %649 = vmatpush1.msra.mxu0 0.0
      %650 = vmatprep.subr.mxu0 0.0
      %651 = vmatpush1.msra.mxu0 0.0
      %652 = vmatprep.subr.mxu0 0.0
      %653 = vmatpush1.msra.mxu0 0.0
      %654 = vmatprep.subr.mxu0 0.0
      %655 = vmatpush1.msra.mxu0 0.0
      %656 = vmatprep.subr.mxu0 0.0
      %657 = vmatpush1.msra.mxu0 %v536
      %658 = vmatprep.subr.mxu0 0.0
      %659 = vmatpush1.msra.mxu0 %v535
      %660 = vmatprep.subr.mxu0 0.0
      %661 = vmatpush1.msra.mxu0 %v534
      %662 = vmatprep.subr.mxu0 0.0
      %663 = vmatpush1.msra.mxu0 %v533
      %664 = vmatprep.subr.mxu0 0.0
      %665 = vmatpush2.msra.mxu0 0.0
      %666 = vmatprep.subr.mxu0 0.0
      %667 = vmatpush2.msra.mxu0 0.0
      %668 = vmatprep.subr.mxu0 0.0
      %669 = vmatpush2.msra.mxu0 0.0
      %670 = vmatprep.subr.mxu0 0.0
      %671 = vmatpush2.msra.mxu0 0.0
      %672 = vmatprep.subr.mxu0 0.0
      %673 = vmatpush2.msra.mxu0 0.0
      %674 = vmatprep.subr.mxu0 0.0
      %675 = vmatpush2.msra.mxu0 0.0
      %676 = vmatprep.subr.mxu0 0.0
      %677 = vmatpush2.msra.mxu0 0.0
      %678 = vmatprep.subr.mxu0 0.0
      %679 = vmatpush2.msra.mxu0 0.0
      %680 = vmatprep.subr.mxu0 0.0
      %681 = vmatpush2.msra.mxu0 0.0
      %682 = vmatprep.subr.mxu0 0.0
      %683 = vmatpush2.msra.mxu0 0.0
      %684 = vmatprep.subr.mxu0 0.0
      %685 = vmatpush2.msra.mxu0 0.0
      %686 = vmatprep.subr.mxu0 0.0
      %687 = vmatpush2.msra.mxu0 0.0
      %688 = vmatprep.subr.mxu0 0.0
      %689 = vmatpush2.msra.mxu0 0.0
      %690 = vmatprep.subr.mxu0 0.0
      %691 = vmatpush2.msra.mxu0 0.0
      %692 = vmatprep.subr.mxu0 0.0
      %693 = vmatpush2.msra.mxu0 0.0
      %694 = vmatprep.subr.mxu0 0.0
      %695 = vmatpush2.msra.mxu0 0.0
      %696 = vmatprep.mubr.f32.mxu0 0.0
      %697 = vmatmul.mubr.f32.gmra.mxu0 %v630
      %v698 = vpop.f32.mrf.mxu0
      %v699 = vadd.f32 0.0, %v698
      %v700 = vpop.f32.mrf.mxu0
      %701 = vdwg.mxu0
      %v702 = vadd.f32 %v624, %v699
      %vm703 = vcmask 1045504
      %v704 = vrot.slane %v543, 2
      %v705 = vrot.slane %v544, 2
      %v706 = vsel %vm703, %v704, %v705
      %v707 = vsel %vm499, %v706, 0
      %709 = vmatprep.subr.mxu0 0.0
      %710 = vmatpush1.msra.mxu0 0.0
      %711 = vmatprep.subr.mxu0 0.0
      %712 = vmatpush1.msra.mxu0 0.0
      %713 = vmatprep.subr.mxu0 0.0
      %714 = vmatpush1.msra.mxu0 0.0
      %715 = vmatprep.subr.mxu0 0.0
      %716 = vmatpush1.msra.mxu0 0.0
      %717 = vmatprep.subr.mxu0 0.0
      %718 = vmatpush1.msra.mxu0 0.0
      %719 = vmatprep.subr.mxu0 0.0
      %720 = vmatpush1.msra.mxu0 0.0
      %721 = vmatprep.subr.mxu0 0.0
      %722 = vmatpush1.msra.mxu0 0.0
      %723 = vmatprep.subr.mxu0 0.0
      %724 = vmatpush1.msra.mxu0 0.0
      %725 = vmatprep.subr.mxu0 0.0
      %726 = vmatpush1.msra.mxu0 0.0
      %727 = vmatprep.subr.mxu0 0.0
      %728 = vmatpush1.msra.mxu0 0.0
      %729 = vmatprep.subr.mxu0 0.0
      %730 = vmatpush1.msra.mxu0 0.0
      %731 = vmatprep.subr.mxu0 0.0
      %732 = vmatpush1.msra.mxu0 0.0
      %733 = vmatprep.subr.mxu0 0.0
      %734 = vmatpush1.msra.mxu0 %v540
      %735 = vmatprep.subr.mxu0 0.0
      %736 = vmatpush1.msra.mxu0 %v539
      %737 = vmatprep.subr.mxu0 0.0
      %738 = vmatpush1.msra.mxu0 %v538
      %739 = vmatprep.subr.mxu0 0.0
      %740 = vmatpush1.msra.mxu0 %v537
      %741 = vmatprep.subr.mxu0 0.0
      %742 = vmatpush2.msra.mxu0 0.0
      %743 = vmatprep.subr.mxu0 0.0
      %744 = vmatpush2.msra.mxu0 0.0
      %745 = vmatprep.subr.mxu0 0.0
      %746 = vmatpush2.msra.mxu0 0.0
      %747 = vmatprep.subr.mxu0 0.0
      %748 = vmatpush2.msra.mxu0 0.0
      %749 = vmatprep.subr.mxu0 0.0
      %750 = vmatpush2.msra.mxu0 0.0
      %751 = vmatprep.subr.mxu0 0.0
      %752 = vmatpush2.msra.mxu0 0.0
      %753 = vmatprep.subr.mxu0 0.0
      %754 = vmatpush2.msra.mxu0 0.0
      %755 = vmatprep.subr.mxu0 0.0
      %756 = vmatpush2.msra.mxu0 0.0
      %757 = vmatprep.subr.mxu0 0.0
      %758 = vmatpush2.msra.mxu0 0.0
      %759 = vmatprep.subr.mxu0 0.0
      %760 = vmatpush2.msra.mxu0 0.0
      %761 = vmatprep.subr.mxu0 0.0
      %762 = vmatpush2.msra.mxu0 0.0
      %763 = vmatprep.subr.mxu0 0.0
      %764 = vmatpush2.msra.mxu0 0.0
      %765 = vmatprep.subr.mxu0 0.0
      %766 = vmatpush2.msra.mxu0 0.0
      %767 = vmatprep.subr.mxu0 0.0
      %768 = vmatpush2.msra.mxu0 0.0
      %769 = vmatprep.subr.mxu0 0.0
      %770 = vmatpush2.msra.mxu0 0.0
      %771 = vmatprep.subr.mxu0 0.0
      %772 = vmatpush2.msra.mxu0 0.0
      %773 = vmatprep.mubr.f32.mxu0 0.0
      %774 = vmatmul.mubr.f32.gmra.mxu0 %v707
      %v775 = vpop.f32.mrf.mxu0
      %v776 = vadd.f32 0.0, %v775
      %v777 = vpop.f32.mrf.mxu0
      %778 = vdwg.mxu0
      %v779 = vadd.f32 %v702, %v776
      %v780 = vxor.u32 %v779, 2147483648
      %v781 = vmul.f32 %v780, 1.442695
      %v782 = vpow.pop %v781
      %v783 = vadd.f32 %v782, 1.0
      %v784 = vrcp.pop %v783
      %v785 = vmul.f32 1.0, %v784
      %787 = vrot.lane.b32.xlu0 %v785, 96
      %v788 = vpop.permute.xlu0 %787
      %v790 = vmul.f32 %v779, %v788
      %v791 = vld [vmem:[%s8] sm:$0xff]
      %v792 = vld [vmem:[%s8 + $0x8] sm:$0xff]
      %v793 = vld [vmem:[%s8 + $0x10] sm:$0xff]
      %v794 = vld [vmem:[%s8 + $0x18] sm:$0xff]
      %v795 = vld [vmem:[%s9] sm:$0x1]
      %v797 = vlaneseq
      %v798 = vshrl.u32 %v797, 7
      %v799 = vsub.s32 0, %v798
      %v800 = vrot.slane %v795, %v799
      %v803 = vsel %vm499, %v790, 0
      %805 = vmatprep.subr.mxu0 0.0
      %806 = vmatpush1.msra.mxu0 0.0
      %807 = vmatprep.subr.mxu0 0.0
      %808 = vmatpush1.msra.mxu0 0.0
      %809 = vmatprep.subr.mxu0 0.0
      %810 = vmatpush1.msra.mxu0 0.0
      %811 = vmatprep.subr.mxu0 0.0
      %812 = vmatpush1.msra.mxu0 0.0
      %813 = vmatprep.subr.mxu0 0.0
      %814 = vmatpush1.msra.mxu0 0.0
      %815 = vmatprep.subr.mxu0 0.0
      %816 = vmatpush1.msra.mxu0 0.0
      %817 = vmatprep.subr.mxu0 0.0
      %818 = vmatpush1.msra.mxu0 0.0
      %819 = vmatprep.subr.mxu0 0.0
      %820 = vmatpush1.msra.mxu0 0.0
      %821 = vmatprep.subr.mxu0 0.0
      %822 = vmatpush1.msra.mxu0 0.0
      %823 = vmatprep.subr.mxu0 0.0
      %824 = vmatpush1.msra.mxu0 0.0
      %825 = vmatprep.subr.mxu0 0.0
      %826 = vmatpush1.msra.mxu0 0.0
      %827 = vmatprep.subr.mxu0 0.0
      %828 = vmatpush1.msra.mxu0 0.0
      %829 = vmatprep.subr.mxu0 0.0
      %830 = vmatpush1.msra.mxu0 %v794
      %831 = vmatprep.subr.mxu0 0.0
      %832 = vmatpush1.msra.mxu0 %v793
      %833 = vmatprep.subr.mxu0 0.0
      %834 = vmatpush1.msra.mxu0 %v792
      %835 = vmatprep.subr.mxu0 0.0
      %836 = vmatpush1.msra.mxu0 %v791
      %837 = vmatprep.subr.mxu0 0.0
      %838 = vmatpush2.msra.mxu0 0.0
      %839 = vmatprep.subr.mxu0 0.0
      %840 = vmatpush2.msra.mxu0 0.0
      %841 = vmatprep.subr.mxu0 0.0
      %842 = vmatpush2.msra.mxu0 0.0
      %843 = vmatprep.subr.mxu0 0.0
      %844 = vmatpush2.msra.mxu0 0.0
      %845 = vmatprep.subr.mxu0 0.0
      %846 = vmatpush2.msra.mxu0 0.0
      %847 = vmatprep.subr.mxu0 0.0
      %848 = vmatpush2.msra.mxu0 0.0
      %849 = vmatprep.subr.mxu0 0.0
      %850 = vmatpush2.msra.mxu0 0.0
      %851 = vmatprep.subr.mxu0 0.0
      %852 = vmatpush2.msra.mxu0 0.0
      %853 = vmatprep.subr.mxu0 0.0
      %854 = vmatpush2.msra.mxu0 0.0
      %855 = vmatprep.subr.mxu0 0.0
      %856 = vmatpush2.msra.mxu0 0.0
      %857 = vmatprep.subr.mxu0 0.0
      %858 = vmatpush2.msra.mxu0 0.0
      %859 = vmatprep.subr.mxu0 0.0
      %860 = vmatpush2.msra.mxu0 0.0
      %861 = vmatprep.subr.mxu0 0.0
      %862 = vmatpush2.msra.mxu0 0.0
      %863 = vmatprep.subr.mxu0 0.0
      %864 = vmatpush2.msra.mxu0 0.0
      %865 = vmatprep.subr.mxu0 0.0
      %866 = vmatpush2.msra.mxu0 0.0
      %867 = vmatprep.subr.mxu0 0.0
      %868 = vmatpush2.msra.mxu0 0.0
      %869 = vmatprep.mubr.f32.mxu0 0.0
      %870 = vmatmul.mubr.f32.gmra.mxu0 %v803
      %v871 = vpop.f32.mrf.mxu0
      %v872 = vadd.f32 %v800, %v871
      %v873 = vpop.f32.mrf.mxu0
      %874 = vdwg.mxu0
      %v875 = vadd.f32 %v872, %v526
      %v876 = vmul.f32 %v875, 0.70710677
      %v878 = vsel %vm499, %v876, 0
      %v881 = vsel %vm499, %v527, 0
      %883 = vmatprep.subr.mxu0 0.0
      %884 = vmatpush1.xpose.msra.mxu0 0.0
      %885 = vmatprep.subr.mxu0 0.0
      %886 = vmatpush1.xpose.msra.mxu0 0.0
      %887 = vmatprep.subr.mxu0 0.0
      %888 = vmatpush1.xpose.msra.mxu0 0.0
      %889 = vmatprep.subr.mxu0 0.0
      %890 = vmatpush1.xpose.msra.mxu0 0.0
      %891 = vmatprep.subr.mxu0 0.0
      %892 = vmatpush1.xpose.msra.mxu0 0.0
      %893 = vmatprep.subr.mxu0 0.0
      %894 = vmatpush1.xpose.msra.mxu0 0.0
      %895 = vmatprep.subr.mxu0 0.0
      %896 = vmatpush1.xpose.msra.mxu0 0.0
      %897 = vmatprep.subr.mxu0 0.0
      %898 = vmatpush1.xpose.msra.mxu0 0.0
      %899 = vmatprep.subr.mxu0 0.0
      %900 = vmatpush1.xpose.msra.mxu0 0.0
      %901 = vmatprep.subr.mxu0 0.0
      %902 = vmatpush1.xpose.msra.mxu0 0.0
      %903 = vmatprep.subr.mxu0 0.0
      %904 = vmatpush1.xpose.msra.mxu0 0.0
      %905 = vmatprep.subr.mxu0 0.0
      %906 = vmatpush1.xpose.msra.mxu0 0.0
      %907 = vmatprep.subr.mxu0 0.0
      %908 = vmatpush1.xpose.msra.mxu0 0.0
      %909 = vmatprep.subr.mxu0 0.0
      %910 = vmatpush1.xpose.msra.mxu0 0.0
      %911 = vmatprep.subr.mxu0 0.0
      %912 = vmatpush1.xpose.msra.mxu0 0.0
      %913 = vmatprep.subr.mxu0 0.0
      %914 = vmatpush1.xpose.msra.mxu0 %v881
      %915 = vmatprep.subr.mxu0 0.0
      %916 = vmatpush2.xpose.msra.mxu0 0.0
      %917 = vmatprep.subr.mxu0 0.0
      %918 = vmatpush2.xpose.msra.mxu0 0.0
      %919 = vmatprep.subr.mxu0 0.0
      %920 = vmatpush2.xpose.msra.mxu0 0.0
      %921 = vmatprep.subr.mxu0 0.0
      %922 = vmatpush2.xpose.msra.mxu0 0.0
      %923 = vmatprep.subr.mxu0 0.0
      %924 = vmatpush2.xpose.msra.mxu0 0.0
      %925 = vmatprep.subr.mxu0 0.0
      %926 = vmatpush2.xpose.msra.mxu0 0.0
      %927 = vmatprep.subr.mxu0 0.0
      %928 = vmatpush2.xpose.msra.mxu0 0.0
      %929 = vmatprep.subr.mxu0 0.0
      %930 = vmatpush2.xpose.msra.mxu0 0.0
      %931 = vmatprep.subr.mxu0 0.0
      %932 = vmatpush2.xpose.msra.mxu0 0.0
      %933 = vmatprep.subr.mxu0 0.0
      %934 = vmatpush2.xpose.msra.mxu0 0.0
      %935 = vmatprep.subr.mxu0 0.0
      %936 = vmatpush2.xpose.msra.mxu0 0.0
      %937 = vmatprep.subr.mxu0 0.0
      %938 = vmatpush2.xpose.msra.mxu0 0.0
      %939 = vmatprep.subr.mxu0 0.0
      %940 = vmatpush2.xpose.msra.mxu0 0.0
      %941 = vmatprep.subr.mxu0 0.0
      %942 = vmatpush2.xpose.msra.mxu0 0.0
      %943 = vmatprep.subr.mxu0 0.0
      %944 = vmatpush2.xpose.msra.mxu0 0.0
      %945 = vmatprep.subr.mxu0 0.0
      %946 = vmatpush2.xpose.msra.mxu0 0.0
      %947 = vmatprep.mubr.f32.mxu0 0.0
      %948 = vmatmul.mubr.f32.gmra.mxu0 %v878
      %v949 = vpop.f32.mrf.mxu0
      %v950 = vadd.f32 0.0, %v949
      %v951 = vpop.f32.mrf.mxu0
      %952 = vdwg.mxu0
      %vm953 = vcmask 64512
      %v954 = vsel %vm953, %v950, -inf
      %955 = vmax.xlane.f32.xlu0 %v954
      %v956 = vpop.xlane.xlu0 %955
      %v957 = vsub.f32 %v950, %v956
      %v958 = vmul.f32 %v957, 1.442695
      %v959 = vpow.pop %v958
      %v960 = vsel %vm953, %v959, 0.0
      %961 = vadd.xlane.f32.xlu0 %v960
      %v962 = vpop.xlane.xlu0 %961
      %v963 = vrcp.pop %v962
      %v964 = vmul.f32 %v959, %v963
      %v966 = vsel %vm953, %v964, 0
      %968 = vmatprep.subr.mxu0 0.0
      %969 = vmatpush1.msra.mxu0 0.0
      %970 = vmatprep.subr.mxu0 0.0
      %971 = vmatpush1.msra.mxu0 0.0
      %972 = vmatprep.subr.mxu0 0.0
      %973 = vmatpush1.msra.mxu0 0.0
      %974 = vmatprep.subr.mxu0 0.0
      %975 = vmatpush1.msra.mxu0 0.0
      %976 = vmatprep.subr.mxu0 0.0
      %977 = vmatpush1.msra.mxu0 0.0
      %978 = vmatprep.subr.mxu0 0.0
      %979 = vmatpush1.msra.mxu0 0.0
      %980 = vmatprep.subr.mxu0 0.0
      %981 = vmatpush1.msra.mxu0 0.0
      %982 = vmatprep.subr.mxu0 0.0
      %983 = vmatpush1.msra.mxu0 0.0
      %984 = vmatprep.subr.mxu0 0.0
      %985 = vmatpush1.msra.mxu0 0.0
      %986 = vmatprep.subr.mxu0 0.0
      %987 = vmatpush1.msra.mxu0 0.0
      %988 = vmatprep.subr.mxu0 0.0
      %989 = vmatpush1.msra.mxu0 0.0
      %990 = vmatprep.subr.mxu0 0.0
      %991 = vmatpush1.msra.mxu0 0.0
      %992 = vmatprep.subr.mxu0 0.0
      %993 = vmatpush1.msra.mxu0 0.0
      %994 = vmatprep.subr.mxu0 0.0
      %995 = vmatpush1.msra.mxu0 0.0
      %996 = vmatprep.subr.mxu0 0.0
      %997 = vmatpush1.msra.mxu0 0.0
      %998 = vmatprep.subr.mxu0 0.0
      %999 = vmatpush1.msra.mxu0 %v528
      %1000 = vmatprep.subr.mxu0 0.0
      %1001 = vmatpush2.msra.mxu0 0.0
      %1002 = vmatprep.subr.mxu0 0.0
      %1003 = vmatpush2.msra.mxu0 0.0
      %1004 = vmatprep.subr.mxu0 0.0
      %1005 = vmatpush2.msra.mxu0 0.0
      %1006 = vmatprep.subr.mxu0 0.0
      %1007 = vmatpush2.msra.mxu0 0.0
      %1008 = vmatprep.subr.mxu0 0.0
      %1009 = vmatpush2.msra.mxu0 0.0
      %1010 = vmatprep.subr.mxu0 0.0
      %1011 = vmatpush2.msra.mxu0 0.0
      %1012 = vmatprep.subr.mxu0 0.0
      %1013 = vmatpush2.msra.mxu0 0.0
      %1014 = vmatprep.subr.mxu0 0.0
      %1015 = vmatpush2.msra.mxu0 0.0
      %1016 = vmatprep.subr.mxu0 0.0
      %1017 = vmatpush2.msra.mxu0 0.0
      %1018 = vmatprep.subr.mxu0 0.0
      %1019 = vmatpush2.msra.mxu0 0.0
      %1020 = vmatprep.subr.mxu0 0.0
      %1021 = vmatpush2.msra.mxu0 0.0
      %1022 = vmatprep.subr.mxu0 0.0
      %1023 = vmatpush2.msra.mxu0 0.0
      %1024 = vmatprep.subr.mxu0 0.0
      %1025 = vmatpush2.msra.mxu0 0.0
      %1026 = vmatprep.subr.mxu0 0.0
      %1027 = vmatpush2.msra.mxu0 0.0
      %1028 = vmatprep.subr.mxu0 0.0
      %1029 = vmatpush2.msra.mxu0 0.0
      %1030 = vmatprep.subr.mxu0 0.0
      %1031 = vmatpush2.msra.mxu0 0.0
      %1032 = vmatprep.mubr.f32.mxu0 0.0
      %1033 = vmatmul.mubr.f32.gmra.mxu0 %v966
      %v1034 = vpop.f32.mrf.mxu0
      %v1035 = vadd.f32 0.0, %v1034
      %v1036 = vpop.f32.mrf.mxu0
      %1037 = vdwg.mxu0
      %v1038 = vld [vmem:[%s10] sm:$0xff]
      %v1039 = vld [vmem:[%s10 + $0x8] sm:$0xff]
      %v1040 = vld [vmem:[%s10 + $0x10] sm:$0xff]
      %v1041 = vld [vmem:[%s10 + $0x18] sm:$0xff]
      %v1042 = vld [vmem:[%s11] sm:$0x1]
      %v1044 = vlaneseq
      %v1045 = vshrl.u32 %v1044, 7
      %v1046 = vsub.s32 0, %v1045
      %v1047 = vrot.slane %v1042, %v1046
      %v1050 = vsel %vm499, %v1035, 0
      %1052 = vmatprep.subr.mxu0 0.0
      %1053 = vmatpush1.msra.mxu0 0.0
      %1054 = vmatprep.subr.mxu0 0.0
      %1055 = vmatpush1.msra.mxu0 0.0
      %1056 = vmatprep.subr.mxu0 0.0
      %1057 = vmatpush1.msra.mxu0 0.0
      %1058 = vmatprep.subr.mxu0 0.0
      %1059 = vmatpush1.msra.mxu0 0.0
      %1060 = vmatprep.subr.mxu0 0.0
      %1061 = vmatpush1.msra.mxu0 0.0
      %1062 = vmatprep.subr.mxu0 0.0
      %1063 = vmatpush1.msra.mxu0 0.0
      %1064 = vmatprep.subr.mxu0 0.0
      %1065 = vmatpush1.msra.mxu0 0.0
      %1066 = vmatprep.subr.mxu0 0.0
      %1067 = vmatpush1.msra.mxu0 0.0
      %1068 = vmatprep.subr.mxu0 0.0
      %1069 = vmatpush1.msra.mxu0 0.0
      %1070 = vmatprep.subr.mxu0 0.0
      %1071 = vmatpush1.msra.mxu0 0.0
      %1072 = vmatprep.subr.mxu0 0.0
      %1073 = vmatpush1.msra.mxu0 0.0
      %1074 = vmatprep.subr.mxu0 0.0
      %1075 = vmatpush1.msra.mxu0 0.0
      %1076 = vmatprep.subr.mxu0 0.0
      %1077 = vmatpush1.msra.mxu0 %v1041
      %1078 = vmatprep.subr.mxu0 0.0
      %1079 = vmatpush1.msra.mxu0 %v1040
      %1080 = vmatprep.subr.mxu0 0.0
      %1081 = vmatpush1.msra.mxu0 %v1039
      %1082 = vmatprep.subr.mxu0 0.0
      %1083 = vmatpush1.msra.mxu0 %v1038
      %1084 = vmatprep.subr.mxu0 0.0
      %1085 = vmatpush2.msra.mxu0 0.0
      %1086 = vmatprep.subr.mxu0 0.0
      %1087 = vmatpush2.msra.mxu0 0.0
      %1088 = vmatprep.subr.mxu0 0.0
      %1089 = vmatpush2.msra.mxu0 0.0
      %1090 = vmatprep.subr.mxu0 0.0
      %1091 = vmatpush2.msra.mxu0 0.0
      %1092 = vmatprep.subr.mxu0 0.0
      %1093 = vmatpush2.msra.mxu0 0.0
      %1094 = vmatprep.subr.mxu0 0.0
      %1095 = vmatpush2.msra.mxu0 0.0
      %1096 = vmatprep.subr.mxu0 0.0
      %1097 = vmatpush2.msra.mxu0 0.0
      %1098 = vmatprep.subr.mxu0 0.0
      %1099 = vmatpush2.msra.mxu0 0.0
      %1100 = vmatprep.subr.mxu0 0.0
      %1101 = vmatpush2.msra.mxu0 0.0
      %1102 = vmatprep.subr.mxu0 0.0
      %1103 = vmatpush2.msra.mxu0 0.0
      %1104 = vmatprep.subr.mxu0 0.0
      %1105 = vmatpush2.msra.mxu0 0.0
      %1106 = vmatprep.subr.mxu0 0.0
      %1107 = vmatpush2.msra.mxu0 0.0
      %1108 = vmatprep.subr.mxu0 0.0
      %1109 = vmatpush2.msra.mxu0 0.0
      %1110 = vmatprep.subr.mxu0 0.0
      %1111 = vmatpush2.msra.mxu0 0.0
      %1112 = vmatprep.subr.mxu0 0.0
      %1113 = vmatpush2.msra.mxu0 0.0
      %1114 = vmatprep.subr.mxu0 0.0
      %1115 = vmatpush2.msra.mxu0 0.0
      %1116 = vmatprep.mubr.f32.mxu0 0.0
      %1117 = vmatmul.mubr.f32.gmra.mxu0 %v1050
      %v1118 = vpop.f32.mrf.mxu0
      %v1119 = vadd.f32 %v1047, %v1118
      %v1120 = vpop.f32.mrf.mxu0
      %1121 = vdwg.mxu0
      %v1122 = vadd.f32 %v790, %v1119
      %v1123 = vmul.f32 %v1122, 0.70710677
      %v1124 = vadd.f32 %v1123, %v526
      %v1125 = vmul.f32 %v1124, 0.70710677
      %s1126 = scalar_lea.vmem %s6, 96
      %v1127 = vld [vmem:[%s1126] sm:$0xff]
      %v1128 = vld [vmem:[%s1126 + $0x8] sm:$0xff]
      %v1129 = vld [vmem:[%s1126 + $0x10] sm:$0xff]
      %v1130 = vld [vmem:[%s1126 + $0x18] sm:$0xff]
      %v1131 = vld [vmem:[%s1126 + $0x20] sm:$0xff]
      %v1132 = vld [vmem:[%s1126 + $0x28] sm:$0xff]
      %v1133 = vld [vmem:[%s1126 + $0x30] sm:$0xff]
      %v1134 = vld [vmem:[%s1126 + $0x38] sm:$0xff]
      %v1135 = vld [vmem:[%s1126 + $0x40] sm:$0xff]
      %v1136 = vld [vmem:[%s1126 + $0x48] sm:$0xff]
      %v1137 = vld [vmem:[%s1126 + $0x50] sm:$0xff]
      %v1138 = vld [vmem:[%s1126 + $0x58] sm:$0xff]
      %s1139 = scalar_lea.vmem %s7, 1
      %v1140 = vld [vmem:[%s1139] sm:$0x1]
      %1141 = vst.msk [vmem:[#allocation2 + $0x2] sm:$0xff] %vm499, %v1125
      %v1142 = vld [vmem:[#allocation2] sm:$0xff]
      %v1143 = vld [vmem:[#allocation2 + $0x8] sm:$0x3]
      %v1145 = vsel %vm499, %v1142, 0
      %1147 = vmatprep.subr.mxu0 0.0
      %1148 = vmatpush1.msra.mxu0 0.0
      %1149 = vmatprep.subr.mxu0 0.0
      %1150 = vmatpush1.msra.mxu0 0.0
      %1151 = vmatprep.subr.mxu0 0.0
      %1152 = vmatpush1.msra.mxu0 0.0
      %1153 = vmatprep.subr.mxu0 0.0
      %1154 = vmatpush1.msra.mxu0 0.0
      %1155 = vmatprep.subr.mxu0 0.0
      %1156 = vmatpush1.msra.mxu0 0.0
      %1157 = vmatprep.subr.mxu0 0.0
      %1158 = vmatpush1.msra.mxu0 0.0
      %1159 = vmatprep.subr.mxu0 0.0
      %1160 = vmatpush1.msra.mxu0 0.0
      %1161 = vmatprep.subr.mxu0 0.0
      %1162 = vmatpush1.msra.mxu0 0.0
      %1163 = vmatprep.subr.mxu0 0.0
      %1164 = vmatpush1.msra.mxu0 0.0
      %1165 = vmatprep.subr.mxu0 0.0
      %1166 = vmatpush1.msra.mxu0 0.0
      %1167 = vmatprep.subr.mxu0 0.0
      %1168 = vmatpush1.msra.mxu0 0.0
      %1169 = vmatprep.subr.mxu0 0.0
      %1170 = vmatpush1.msra.mxu0 0.0
      %1171 = vmatprep.subr.mxu0 0.0
      %1172 = vmatpush1.msra.mxu0 %v1130
      %1173 = vmatprep.subr.mxu0 0.0
      %1174 = vmatpush1.msra.mxu0 %v1129
      %1175 = vmatprep.subr.mxu0 0.0
      %1176 = vmatpush1.msra.mxu0 %v1128
      %1177 = vmatprep.subr.mxu0 0.0
      %1178 = vmatpush1.msra.mxu0 %v1127
      %1179 = vmatprep.subr.mxu0 0.0
      %1180 = vmatpush2.msra.mxu0 0.0
      %1181 = vmatprep.subr.mxu0 0.0
      %1182 = vmatpush2.msra.mxu0 0.0
      %1183 = vmatprep.subr.mxu0 0.0
      %1184 = vmatpush2.msra.mxu0 0.0
      %1185 = vmatprep.subr.mxu0 0.0
      %1186 = vmatpush2.msra.mxu0 0.0
      %1187 = vmatprep.subr.mxu0 0.0
      %1188 = vmatpush2.msra.mxu0 0.0
      %1189 = vmatprep.subr.mxu0 0.0
      %1190 = vmatpush2.msra.mxu0 0.0
      %1191 = vmatprep.subr.mxu0 0.0
      %1192 = vmatpush2.msra.mxu0 0.0
      %1193 = vmatprep.subr.mxu0 0.0
      %1194 = vmatpush2.msra.mxu0 0.0
      %1195 = vmatprep.subr.mxu0 0.0
      %1196 = vmatpush2.msra.mxu0 0.0
      %1197 = vmatprep.subr.mxu0 0.0
      %1198 = vmatpush2.msra.mxu0 0.0
      %1199 = vmatprep.subr.mxu0 0.0
      %1200 = vmatpush2.msra.mxu0 0.0
      %1201 = vmatprep.subr.mxu0 0.0
      %1202 = vmatpush2.msra.mxu0 0.0
      %1203 = vmatprep.subr.mxu0 0.0
      %1204 = vmatpush2.msra.mxu0 0.0
      %1205 = vmatprep.subr.mxu0 0.0
      %1206 = vmatpush2.msra.mxu0 0.0
      %1207 = vmatprep.subr.mxu0 0.0
      %1208 = vmatpush2.msra.mxu0 0.0
      %1209 = vmatprep.subr.mxu0 0.0
      %1210 = vmatpush2.msra.mxu0 0.0
      %1211 = vmatprep.mubr.f32.mxu0 0.0
      %1212 = vmatmul.mubr.f32.gmra.mxu0 %v1145
      %v1213 = vpop.f32.mrf.mxu0
      %v1214 = vadd.f32 0.0, %v1213
      %v1215 = vpop.f32.mrf.mxu0
      %1216 = vdwg.mxu0
      %v1218 = vlaneseq
      %v1219 = vshrl.u32 %v1218, 7
      %v1220 = vsub.s32 0, %v1219
      %v1221 = vrot.slane %v1140, %v1220
      %v1223 = vadd.f32 %v1221, %v1214
      %v1225 = vrot.slane %v1142, 1
      %v1226 = vrot.slane %v1143, 1
      %v1227 = vsel %vm626, %v1225, %v1226
      %v1228 = vsel %vm499, %v1227, 0
      %1230 = vmatprep.subr.mxu0 0.0
      %1231 = vmatpush1.msra.mxu0 0.0
      %1232 = vmatprep.subr.mxu0 0.0
      %1233 = vmatpush1.msra.mxu0 0.0
      %1234 = vmatprep.subr.mxu0 0.0
      %1235 = vmatpush1.msra.mxu0 0.0
      %1236 = vmatprep.subr.mxu0 0.0
      %1237 = vmatpush1.msra.mxu0 0.0
      %1238 = vmatprep.subr.mxu0 0.0
      %1239 = vmatpush1.msra.mxu0 0.0
      %1240 = vmatprep.subr.mxu0 0.0
      %1241 = vmatpush1.msra.mxu0 0.0
      %1242 = vmatprep.subr.mxu0 0.0
      %1243 = vmatpush1.msra.mxu0 0.0
      %1244 = vmatprep.subr.mxu0 0.0
      %1245 = vmatpush1.msra.mxu0 0.0
      %1246 = vmatprep.subr.mxu0 0.0
      %1247 = vmatpush1.msra.mxu0 0.0
      %1248 = vmatprep.subr.mxu0 0.0
      %1249 = vmatpush1.msra.mxu0 0.0
      %1250 = vmatprep.subr.mxu0 0.0
      %1251 = vmatpush1.msra.mxu0 0.0
      %1252 = vmatprep.subr.mxu0 0.0
      %1253 = vmatpush1.msra.mxu0 0.0
      %1254 = vmatprep.subr.mxu0 0.0
      %1255 = vmatpush1.msra.mxu0 %v1134
      %1256 = vmatprep.subr.mxu0 0.0
      %1257 = vmatpush1.msra.mxu0 %v1133
      %1258 = vmatprep.subr.mxu0 0.0
      %1259 = vmatpush1.msra.mxu0 %v1132
      %1260 = vmatprep.subr.mxu0 0.0
      %1261 = vmatpush1.msra.mxu0 %v1131
      %1262 = vmatprep.subr.mxu0 0.0
      %1263 = vmatpush2.msra.mxu0 0.0
      %1264 = vmatprep.subr.mxu0 0.0
      %1265 = vmatpush2.msra.mxu0 0.0
      %1266 = vmatprep.subr.mxu0 0.0
      %1267 = vmatpush2.msra.mxu0 0.0
      %1268 = vmatprep.subr.mxu0 0.0
      %1269 = vmatpush2.msra.mxu0 0.0
      %1270 = vmatprep.subr.mxu0 0.0
      %1271 = vmatpush2.msra.mxu0 0.0
      %1272 = vmatprep.subr.mxu0 0.0
      %1273 = vmatpush2.msra.mxu0 0.0
      %1274 = vmatprep.subr.mxu0 0.0
      %1275 = vmatpush2.msra.mxu0 0.0
      %1276 = vmatprep.subr.mxu0 0.0
      %1277 = vmatpush2.msra.mxu0 0.0
      %1278 = vmatprep.subr.mxu0 0.0
      %1279 = vmatpush2.msra.mxu0 0.0
      %1280 = vmatprep.subr.mxu0 0.0
      %1281 = vmatpush2.msra.mxu0 0.0
      %1282 = vmatprep.subr.mxu0 0.0
      %1283 = vmatpush2.msra.mxu0 0.0
      %1284 = vmatprep.subr.mxu0 0.0
      %1285 = vmatpush2.msra.mxu0 0.0
      %1286 = vmatprep.subr.mxu0 0.0
      %1287 = vmatpush2.msra.mxu0 0.0
      %1288 = vmatprep.subr.mxu0 0.0
      %1289 = vmatpush2.msra.mxu0 0.0
      %1290 = vmatprep.subr.mxu0 0.0
      %1291 = vmatpush2.msra.mxu0 0.0
      %1292 = vmatprep.subr.mxu0 0.0
      %1293 = vmatpush2.msra.mxu0 0.0
      %1294 = vmatprep.mubr.f32.mxu0 0.0
      %1295 = vmatmul.mubr.f32.gmra.mxu0 %v1228
      %v1296 = vpop.f32.mrf.mxu0
      %v1297 = vadd.f32 0.0, %v1296
      %v1298 = vpop.f32.mrf.mxu0
      %1299 = vdwg.mxu0
      %v1300 = vadd.f32 %v1223, %v1297
      %v1301 = vrot.slane %v1142, 2
      %v1302 = vrot.slane %v1143, 2
      %v1303 = vsel %vm703, %v1301, %v1302
      %v1304 = vsel %vm499, %v1303, 0
      %1306 = vmatprep.subr.mxu0 0.0
      %1307 = vmatpush1.msra.mxu0 0.0
      %1308 = vmatprep.subr.mxu0 0.0
      %1309 = vmatpush1.msra.mxu0 0.0
      %1310 = vmatprep.subr.mxu0 0.0
      %1311 = vmatpush1.msra.mxu0 0.0
      %1312 = vmatprep.subr.mxu0 0.0
      %1313 = vmatpush1.msra.mxu0 0.0
      %1314 = vmatprep.subr.mxu0 0.0
      %1315 = vmatpush1.msra.mxu0 0.0
      %1316 = vmatprep.subr.mxu0 0.0
      %1317 = vmatpush1.msra.mxu0 0.0
      %1318 = vmatprep.subr.mxu0 0.0
      %1319 = vmatpush1.msra.mxu0 0.0
      %1320 = vmatprep.subr.mxu0 0.0
      %1321 = vmatpush1.msra.mxu0 0.0
      %1322 = vmatprep.subr.mxu0 0.0
      %1323 = vmatpush1.msra.mxu0 0.0
      %1324 = vmatprep.subr.mxu0 0.0
      %1325 = vmatpush1.msra.mxu0 0.0
      %1326 = vmatprep.subr.mxu0 0.0
      %1327 = vmatpush1.msra.mxu0 0.0
      %1328 = vmatprep.subr.mxu0 0.0
      %1329 = vmatpush1.msra.mxu0 0.0
      %1330 = vmatprep.subr.mxu0 0.0
      %1331 = vmatpush1.msra.mxu0 %v1138
      %1332 = vmatprep.subr.mxu0 0.0
      %1333 = vmatpush1.msra.mxu0 %v1137
      %1334 = vmatprep.subr.mxu0 0.0
      %1335 = vmatpush1.msra.mxu0 %v1136
      %1336 = vmatprep.subr.mxu0 0.0
      %1337 = vmatpush1.msra.mxu0 %v1135
      %1338 = vmatprep.subr.mxu0 0.0
      %1339 = vmatpush2.msra.mxu0 0.0
      %1340 = vmatprep.subr.mxu0 0.0
      %1341 = vmatpush2.msra.mxu0 0.0
      %1342 = vmatprep.subr.mxu0 0.0
      %1343 = vmatpush2.msra.mxu0 0.0
      %1344 = vmatprep.subr.mxu0 0.0
      %1345 = vmatpush2.msra.mxu0 0.0
      %1346 = vmatprep.subr.mxu0 0.0
      %1347 = vmatpush2.msra.mxu0 0.0
      %1348 = vmatprep.subr.mxu0 0.0
      %1349 = vmatpush2.msra.mxu0 0.0
      %1350 = vmatprep.subr.mxu0 0.0
      %1351 = vmatpush2.msra.mxu0 0.0
      %1352 = vmatprep.subr.mxu0 0.0
      %1353 = vmatpush2.msra.mxu0 0.0
      %1354 = vmatprep.subr.mxu0 0.0
      %1355 = vmatpush2.msra.mxu0 0.0
      %1356 = vmatprep.subr.mxu0 0.0
      %1357 = vmatpush2.msra.mxu0 0.0
      %1358 = vmatprep.subr.mxu0 0.0
      %1359 = vmatpush2.msra.mxu0 0.0
      %1360 = vmatprep.subr.mxu0 0.0
      %1361 = vmatpush2.msra.mxu0 0.0
      %1362 = vmatprep.subr.mxu0 0.0
      %1363 = vmatpush2.msra.mxu0 0.0
      %1364 = vmatprep.subr.mxu0 0.0
      %1365 = vmatpush2.msra.mxu0 0.0
      %1366 = vmatprep.subr.mxu0 0.0
      %1367 = vmatpush2.msra.mxu0 0.0
      %1368 = vmatprep.subr.mxu0 0.0
      %1369 = vmatpush2.msra.mxu0 0.0
      %1370 = vmatprep.mubr.f32.mxu0 0.0
      %1371 = vmatmul.mubr.f32.gmra.mxu0 %v1304
      %v1372 = vpop.f32.mrf.mxu0
      %v1373 = vadd.f32 0.0, %v1372
      %v1374 = vpop.f32.mrf.mxu0
      %1375 = vdwg.mxu0
      %v1376 = vadd.f32 %v1300, %v1373
      %v1377 = vxor.u32 %v1376, 2147483648
      %v1378 = vmul.f32 %v1377, 1.442695
      %v1379 = vpow.pop %v1378
      %v1380 = vadd.f32 %v1379, 1.0
      %v1381 = vrcp.pop %v1380
      %v1382 = vmul.f32 1.0, %v1381
      %1384 = vrot.lane.b32.xlu0 %v1382, 96
      %v1385 = vpop.permute.xlu0 %1384
      %v1387 = vmul.f32 %v1376, %v1385
      %v1388 = vld [vmem:[%s8] sm:$0xff]
      %v1389 = vld [vmem:[%s8 + $0x8] sm:$0xff]
      %v1390 = vld [vmem:[%s8 + $0x10] sm:$0xff]
      %v1391 = vld [vmem:[%s8 + $0x18] sm:$0xff]
      %v1392 = vld [vmem:[%s9] sm:$0x1]
      %v1394 = vlaneseq
      %v1395 = vshrl.u32 %v1394, 7
      %v1396 = vsub.s32 0, %v1395
      %v1397 = vrot.slane %v1392, %v1396
      %v1400 = vsel %vm499, %v1387, 0
      %1402 = vmatprep.subr.mxu0 0.0
      %1403 = vmatpush1.msra.mxu0 0.0
      %1404 = vmatprep.subr.mxu0 0.0
      %1405 = vmatpush1.msra.mxu0 0.0
      %1406 = vmatprep.subr.mxu0 0.0
      %1407 = vmatpush1.msra.mxu0 0.0
      %1408 = vmatprep.subr.mxu0 0.0
      %1409 = vmatpush1.msra.mxu0 0.0
      %1410 = vmatprep.subr.mxu0 0.0
      %1411 = vmatpush1.msra.mxu0 0.0
      %1412 = vmatprep.subr.mxu0 0.0
      %1413 = vmatpush1.msra.mxu0 0.0
      %1414 = vmatprep.subr.mxu0 0.0
      %1415 = vmatpush1.msra.mxu0 0.0
      %1416 = vmatprep.subr.mxu0 0.0
      %1417 = vmatpush1.msra.mxu0 0.0
      %1418 = vmatprep.subr.mxu0 0.0
      %1419 = vmatpush1.msra.mxu0 0.0
      %1420 = vmatprep.subr.mxu0 0.0
      %1421 = vmatpush1.msra.mxu0 0.0
      %1422 = vmatprep.subr.mxu0 0.0
      %1423 = vmatpush1.msra.mxu0 0.0
      %1424 = vmatprep.subr.mxu0 0.0
      %1425 = vmatpush1.msra.mxu0 0.0
      %1426 = vmatprep.subr.mxu0 0.0
      %1427 = vmatpush1.msra.mxu0 %v1391
      %1428 = vmatprep.subr.mxu0 0.0
      %1429 = vmatpush1.msra.mxu0 %v1390
      %1430 = vmatprep.subr.mxu0 0.0
      %1431 = vmatpush1.msra.mxu0 %v1389
      %1432 = vmatprep.subr.mxu0 0.0
      %1433 = vmatpush1.msra.mxu0 %v1388
      %1434 = vmatprep.subr.mxu0 0.0
      %1435 = vmatpush2.msra.mxu0 0.0
      %1436 = vmatprep.subr.mxu0 0.0
      %1437 = vmatpush2.msra.mxu0 0.0
      %1438 = vmatprep.subr.mxu0 0.0
      %1439 = vmatpush2.msra.mxu0 0.0
      %1440 = vmatprep.subr.mxu0 0.0
      %1441 = vmatpush2.msra.mxu0 0.0
      %1442 = vmatprep.subr.mxu0 0.0
      %1443 = vmatpush2.msra.mxu0 0.0
      %1444 = vmatprep.subr.mxu0 0.0
      %1445 = vmatpush2.msra.mxu0 0.0
      %1446 = vmatprep.subr.mxu0 0.0
      %1447 = vmatpush2.msra.mxu0 0.0
      %1448 = vmatprep.subr.mxu0 0.0
      %1449 = vmatpush2.msra.mxu0 0.0
      %1450 = vmatprep.subr.mxu0 0.0
      %1451 = vmatpush2.msra.mxu0 0.0
      %1452 = vmatprep.subr.mxu0 0.0
      %1453 = vmatpush2.msra.mxu0 0.0
      %1454 = vmatprep.subr.mxu0 0.0
      %1455 = vmatpush2.msra.mxu0 0.0
      %1456 = vmatprep.subr.mxu0 0.0
      %1457 = vmatpush2.msra.mxu0 0.0
      %1458 = vmatprep.subr.mxu0 0.0
      %1459 = vmatpush2.msra.mxu0 0.0
      %1460 = vmatprep.subr.mxu0 0.0
      %1461 = vmatpush2.msra.mxu0 0.0
      %1462 = vmatprep.subr.mxu0 0.0
      %1463 = vmatpush2.msra.mxu0 0.0
      %1464 = vmatprep.subr.mxu0 0.0
      %1465 = vmatpush2.msra.mxu0 0.0
      %1466 = vmatprep.mubr.f32.mxu0 0.0
      %1467 = vmatmul.mubr.f32.gmra.mxu0 %v1400
      %v1468 = vpop.f32.mrf.mxu0
      %v1469 = vadd.f32 %v1397, %v1468
      %v1470 = vpop.f32.mrf.mxu0
      %1471 = vdwg.mxu0
      %v1472 = vadd.f32 %v1469, %v526
      %v1473 = vmul.f32 %v1472, 0.70710677
      %v1475 = vsel %vm499, %v1473, 0
      %1477 = vmatprep.subr.mxu0 0.0
      %1478 = vmatpush1.xpose.msra.mxu0 0.0
      %1479 = vmatprep.subr.mxu0 0.0
      %1480 = vmatpush1.xpose.msra.mxu0 0.0
      %1481 = vmatprep.subr.mxu0 0.0
      %1482 = vmatpush1.xpose.msra.mxu0 0.0
      %1483 = vmatprep.subr.mxu0 0.0
      %1484 = vmatpush1.xpose.msra.mxu0 0.0
      %1485 = vmatprep.subr.mxu0 0.0
      %1486 = vmatpush1.xpose.msra.mxu0 0.0
      %1487 = vmatprep.subr.mxu0 0.0
      %1488 = vmatpush1.xpose.msra.mxu0 0.0
      %1489 = vmatprep.subr.mxu0 0.0
      %1490 = vmatpush1.xpose.msra.mxu0 0.0
      %1491 = vmatprep.subr.mxu0 0.0
      %1492 = vmatpush1.xpose.msra.mxu0 0.0
      %1493 = vmatprep.subr.mxu0 0.0
      %1494 = vmatpush1.xpose.msra.mxu0 0.0
      %1495 = vmatprep.subr.mxu0 0.0
      %1496 = vmatpush1.xpose.msra.mxu0 0.0
      %1497 = vmatprep.subr.mxu0 0.0
      %1498 = vmatpush1.xpose.msra.mxu0 0.0
      %1499 = vmatprep.subr.mxu0 0.0
      %1500 = vmatpush1.xpose.msra.mxu0 0.0
      %1501 = vmatprep.subr.mxu0 0.0
      %1502 = vmatpush1.xpose.msra.mxu0 0.0
      %1503 = vmatprep.subr.mxu0 0.0
      %1504 = vmatpush1.xpose.msra.mxu0 0.0
      %1505 = vmatprep.subr.mxu0 0.0
      %1506 = vmatpush1.xpose.msra.mxu0 0.0
      %1507 = vmatprep.subr.mxu0 0.0
      %1508 = vmatpush1.xpose.msra.mxu0 %v881
      %1509 = vmatprep.subr.mxu0 0.0
      %1510 = vmatpush2.xpose.msra.mxu0 0.0
      %1511 = vmatprep.subr.mxu0 0.0
      %1512 = vmatpush2.xpose.msra.mxu0 0.0
      %1513 = vmatprep.subr.mxu0 0.0
      %1514 = vmatpush2.xpose.msra.mxu0 0.0
      %1515 = vmatprep.subr.mxu0 0.0
      %1516 = vmatpush2.xpose.msra.mxu0 0.0
      %1517 = vmatprep.subr.mxu0 0.0
      %1518 = vmatpush2.xpose.msra.mxu0 0.0
      %1519 = vmatprep.subr.mxu0 0.0
      %1520 = vmatpush2.xpose.msra.mxu0 0.0
      %1521 = vmatprep.subr.mxu0 0.0
      %1522 = vmatpush2.xpose.msra.mxu0 0.0
      %1523 = vmatprep.subr.mxu0 0.0
      %1524 = vmatpush2.xpose.msra.mxu0 0.0
      %1525 = vmatprep.subr.mxu0 0.0
      %1526 = vmatpush2.xpose.msra.mxu0 0.0
      %1527 = vmatprep.subr.mxu0 0.0
      %1528 = vmatpush2.xpose.msra.mxu0 0.0
      %1529 = vmatprep.subr.mxu0 0.0
      %1530 = vmatpush2.xpose.msra.mxu0 0.0
      %1531 = vmatprep.subr.mxu0 0.0
      %1532 = vmatpush2.xpose.msra.mxu0 0.0
      %1533 = vmatprep.subr.mxu0 0.0
      %1534 = vmatpush2.xpose.msra.mxu0 0.0
      %1535 = vmatprep.subr.mxu0 0.0
      %1536 = vmatpush2.xpose.msra.mxu0 0.0
      %1537 = vmatprep.subr.mxu0 0.0
      %1538 = vmatpush2.xpose.msra.mxu0 0.0
      %1539 = vmatprep.subr.mxu0 0.0
      %1540 = vmatpush2.xpose.msra.mxu0 0.0
      %1541 = vmatprep.mubr.f32.mxu0 0.0
      %1542 = vmatmul.mubr.f32.gmra.mxu0 %v1475
      %v1543 = vpop.f32.mrf.mxu0
      %v1544 = vadd.f32 0.0, %v1543
      %v1545 = vpop.f32.mrf.mxu0
      %1546 = vdwg.mxu0
      %v1547 = vsel %vm953, %v1544, -inf
      %1548 = vmax.xlane.f32.xlu0 %v1547
      %v1549 = vpop.xlane.xlu0 %1548
      %v1550 = vsub.f32 %v1544, %v1549
      %v1551 = vmul.f32 %v1550, 1.442695
      %v1552 = vpow.pop %v1551
      %v1553 = vsel %vm953, %v1552, 0.0
      %1554 = vadd.xlane.f32.xlu0 %v1553
      %v1555 = vpop.xlane.xlu0 %1554
      %v1556 = vrcp.pop %v1555
      %v1557 = vmul.f32 %v1552, %v1556
      %v1559 = vsel %vm953, %v1557, 0
      %1561 = vmatprep.subr.mxu0 0.0
      %1562 = vmatpush1.msra.mxu0 0.0
      %1563 = vmatprep.subr.mxu0 0.0
      %1564 = vmatpush1.msra.mxu0 0.0
      %1565 = vmatprep.subr.mxu0 0.0
      %1566 = vmatpush1.msra.mxu0 0.0
      %1567 = vmatprep.subr.mxu0 0.0
      %1568 = vmatpush1.msra.mxu0 0.0
      %1569 = vmatprep.subr.mxu0 0.0
      %1570 = vmatpush1.msra.mxu0 0.0
      %1571 = vmatprep.subr.mxu0 0.0
      %1572 = vmatpush1.msra.mxu0 0.0
      %1573 = vmatprep.subr.mxu0 0.0
      %1574 = vmatpush1.msra.mxu0 0.0
      %1575 = vmatprep.subr.mxu0 0.0
      %1576 = vmatpush1.msra.mxu0 0.0
      %1577 = vmatprep.subr.mxu0 0.0
      %1578 = vmatpush1.msra.mxu0 0.0
      %1579 = vmatprep.subr.mxu0 0.0
      %1580 = vmatpush1.msra.mxu0 0.0
      %1581 = vmatprep.subr.mxu0 0.0
      %1582 = vmatpush1.msra.mxu0 0.0
      %1583 = vmatprep.subr.mxu0 0.0
      %1584 = vmatpush1.msra.mxu0 0.0
      %1585 = vmatprep.subr.mxu0 0.0
      %1586 = vmatpush1.msra.mxu0 0.0
      %1587 = vmatprep.subr.mxu0 0.0
      %1588 = vmatpush1.msra.mxu0 0.0
      %1589 = vmatprep.subr.mxu0 0.0
      %1590 = vmatpush1.msra.mxu0 0.0
      %1591 = vmatprep.subr.mxu0 0.0
      %1592 = vmatpush1.msra.mxu0 %v528
      %1593 = vmatprep.subr.mxu0 0.0
      %1594 = vmatpush2.msra.mxu0 0.0
      %1595 = vmatprep.subr.mxu0 0.0
      %1596 = vmatpush2.msra.mxu0 0.0
      %1597 = vmatprep.subr.mxu0 0.0
      %1598 = vmatpush2.msra.mxu0 0.0
      %1599 = vmatprep.subr.mxu0 0.0
      %1600 = vmatpush2.msra.mxu0 0.0
      %1601 = vmatprep.subr.mxu0 0.0
      %1602 = vmatpush2.msra.mxu0 0.0
      %1603 = vmatprep.subr.mxu0 0.0
      %1604 = vmatpush2.msra.mxu0 0.0
      %1605 = vmatprep.subr.mxu0 0.0
      %1606 = vmatpush2.msra.mxu0 0.0
      %1607 = vmatprep.subr.mxu0 0.0
      %1608 = vmatpush2.msra.mxu0 0.0
      %1609 = vmatprep.subr.mxu0 0.0
      %1610 = vmatpush2.msra.mxu0 0.0
      %1611 = vmatprep.subr.mxu0 0.0
      %1612 = vmatpush2.msra.mxu0 0.0
      %1613 = vmatprep.subr.mxu0 0.0
      %1614 = vmatpush2.msra.mxu0 0.0
      %1615 = vmatprep.subr.mxu0 0.0
      %1616 = vmatpush2.msra.mxu0 0.0
      %1617 = vmatprep.subr.mxu0 0.0
      %1618 = vmatpush2.msra.mxu0 0.0
      %1619 = vmatprep.subr.mxu0 0.0
      %1620 = vmatpush2.msra.mxu0 0.0
      %1621 = vmatprep.subr.mxu0 0.0
      %1622 = vmatpush2.msra.mxu0 0.0
      %1623 = vmatprep.subr.mxu0 0.0
      %1624 = vmatpush2.msra.mxu0 0.0
      %1625 = vmatprep.mubr.f32.mxu0 0.0
      %1626 = vmatmul.mubr.f32.gmra.mxu0 %v1559
      %v1627 = vpop.f32.mrf.mxu0
      %v1628 = vadd.f32 0.0, %v1627
      %v1629 = vpop.f32.mrf.mxu0
      %1630 = vdwg.mxu0
      %v1631 = vld [vmem:[%s10] sm:$0xff]
      %v1632 = vld [vmem:[%s10 + $0x8] sm:$0xff]
      %v1633 = vld [vmem:[%s10 + $0x10] sm:$0xff]
      %v1634 = vld [vmem:[%s10 + $0x18] sm:$0xff]
      %v1635 = vld [vmem:[%s11] sm:$0x1]
      %v1637 = vlaneseq
      %v1638 = vshrl.u32 %v1637, 7
      %v1639 = vsub.s32 0, %v1638
      %v1640 = vrot.slane %v1635, %v1639
      %v1643 = vsel %vm499, %v1628, 0
      %1645 = vmatprep.subr.mxu0 0.0
      %1646 = vmatpush1.msra.mxu0 0.0
      %1647 = vmatprep.subr.mxu0 0.0
      %1648 = vmatpush1.msra.mxu0 0.0
      %1649 = vmatprep.subr.mxu0 0.0
      %1650 = vmatpush1.msra.mxu0 0.0
      %1651 = vmatprep.subr.mxu0 0.0
      %1652 = vmatpush1.msra.mxu0 0.0
      %1653 = vmatprep.subr.mxu0 0.0
      %1654 = vmatpush1.msra.mxu0 0.0
      %1655 = vmatprep.subr.mxu0 0.0
      %1656 = vmatpush1.msra.mxu0 0.0
      %1657 = vmatprep.subr.mxu0 0.0
      %1658 = vmatpush1.msra.mxu0 0.0
      %1659 = vmatprep.subr.mxu0 0.0
      %1660 = vmatpush1.msra.mxu0 0.0
      %1661 = vmatprep.subr.mxu0 0.0
      %1662 = vmatpush1.msra.mxu0 0.0
      %1663 = vmatprep.subr.mxu0 0.0
      %1664 = vmatpush1.msra.mxu0 0.0
      %1665 = vmatprep.subr.mxu0 0.0
      %1666 = vmatpush1.msra.mxu0 0.0
      %1667 = vmatprep.subr.mxu0 0.0
      %1668 = vmatpush1.msra.mxu0 0.0
      %1669 = vmatprep.subr.mxu0 0.0
      %1670 = vmatpush1.msra.mxu0 %v1634
      %1671 = vmatprep.subr.mxu0 0.0
      %1672 = vmatpush1.msra.mxu0 %v1633
      %1673 = vmatprep.subr.mxu0 0.0
      %1674 = vmatpush1.msra.mxu0 %v1632
      %1675 = vmatprep.subr.mxu0 0.0
      %1676 = vmatpush1.msra.mxu0 %v1631
      %1677 = vmatprep.subr.mxu0 0.0
      %1678 = vmatpush2.msra.mxu0 0.0
      %1679 = vmatprep.subr.mxu0 0.0
      %1680 = vmatpush2.msra.mxu0 0.0
      %1681 = vmatprep.subr.mxu0 0.0
      %1682 = vmatpush2.msra.mxu0 0.0
      %1683 = vmatprep.subr.mxu0 0.0
      %1684 = vmatpush2.msra.mxu0 0.0
      %1685 = vmatprep.subr.mxu0 0.0
      %1686 = vmatpush2.msra.mxu0 0.0
      %1687 = vmatprep.subr.mxu0 0.0
      %1688 = vmatpush2.msra.mxu0 0.0
      %1689 = vmatprep.subr.mxu0 0.0
      %1690 = vmatpush2.msra.mxu0 0.0
      %1691 = vmatprep.subr.mxu0 0.0
      %1692 = vmatpush2.msra.mxu0 0.0
      %1693 = vmatprep.subr.mxu0 0.0
      %1694 = vmatpush2.msra.mxu0 0.0
      %1695 = vmatprep.subr.mxu0 0.0
      %1696 = vmatpush2.msra.mxu0 0.0
      %1697 = vmatprep.subr.mxu0 0.0
      %1698 = vmatpush2.msra.mxu0 0.0
      %1699 = vmatprep.subr.mxu0 0.0
      %1700 = vmatpush2.msra.mxu0 0.0
      %1701 = vmatprep.subr.mxu0 0.0
      %1702 = vmatpush2.msra.mxu0 0.0
      %1703 = vmatprep.subr.mxu0 0.0
      %1704 = vmatpush2.msra.mxu0 0.0
      %1705 = vmatprep.subr.mxu0 0.0
      %1706 = vmatpush2.msra.mxu0 0.0
      %1707 = vmatprep.subr.mxu0 0.0
      %1708 = vmatpush2.msra.mxu0 0.0
      %1709 = vmatprep.mubr.f32.mxu0 0.0
      %1710 = vmatmul.mubr.f32.gmra.mxu0 %v1643
      %v1711 = vpop.f32.mrf.mxu0
      %v1712 = vadd.f32 %v1640, %v1711
      %v1713 = vpop.f32.mrf.mxu0
      %1714 = vdwg.mxu0
      %v1715 = vadd.f32 %v1387, %v1712
      %v1716 = vmul.f32 %v1715, 0.70710677
      %v1717 = vadd.f32 %v1716, %v1125
      %v1718 = vmul.f32 %v1717, 0.70710677
      %v1719 = vld [vmem:[%s12] sm:$0x1]
      %v1721 = vlaneseq
      %v1722 = vshrl.u32 %v1721, 7
      %v1723 = vsub.s32 0, %v1722
      %v1724 = vrot.slane %v1719, %v1723
      %v1726 = vmul.f32 %v1718, %v1724
      %v1727 = vsel %vm499, %v1726, 0.0
      %1728 = vadd.xlane.f32.xlu0 %v1727
      %v1729 = vpop.xlane.xlu0 %1728
      %v1730 = vld [vmem:[#allocation3] sm:$0x1]
      %v1732 = vlaneseq
      %v1733 = vshrl.u32 %v1732, 7
      %v1734 = vsub.s32 0, %v1733
      %v1735 = vrot.slane %v1730, %v1734
      %v1737 = vadd.f32 %v1729, %v1735
      %vm1738 = vcmask 7168
      %1739 = vst.msk [vmem:[%s498] sm:$0xff] %vm1738, %v1737
      %p1740 = scmp.lt.s32.totalorder %s27, 1
      %s1741 = scalar_select %p1740, %s27, 1
      %s1742 = smul.addr %s1741, 8
      %s1743 = scalar_lea.vmem %s14, %s1742
      // Predicated region
      $region77: #{convnet_forward.3} parent=75 // pred_check
        %p1744 = pneg %p354
      $region78: #{convnet_forward.3} parent=75 // pred_check_branch
        %1746 = sbr.rel (%p1744) target = $region80
      $region79: #{convnet_forward.3} parent=75 // pred_region
        _
      $region80: #{convnet_forward.3} parent=75 // pred_fallthru
        _
    $region76: #{convnet_forward.3} parent=5 // pred_fallthru
      _
    %p1747 = scmp.le.s32.totalorder 2, %s22
    // Predicated region
    $region81: #{convnet_forward.3} parent=5 // pred_check
      %p1748 = pneg %p1747
    $region82: #{convnet_forward.3} parent=5 // pred_check_branch
      %1750 = sbr.rel (%p1748) target = $region84
    $region83: #{convnet_forward.3} parent=5 // pred_region
      %s1751 = ssub.s32 %s22, 2
      // Predicated region
      $region85: #{convnet_forward.3} parent=83 // pred_check
        %p1752 = pneg %p360
      $region86: #{convnet_forward.3} parent=83 // pred_check_branch
        %1754 = sbr.rel (%p1752) target = $region88
      $region87: #{convnet_forward.3} parent=83 // pred_region
        %p1755 = scmp.lt.s32.totalorder %s28, 1
        %s1756 = scalar_select %p1755, %s28, 1
        %s1757 = smul.addr %s1756, 8
        %s1758 = scalar_lea.vmem %s14, %s1757
      $region88: #{convnet_forward.3} parent=83 // pred_fallthru
        _
    $region84: #{convnet_forward.3} parent=5 // pred_fallthru
      _
  $region6: #{convnet_forward.3} parent=0 // loop_footer
    %s26 = sadd.s32 1, %s22
  $region7: #{convnet_forward.3} parent=0 // loop_footer_branch
    %21 = sbr.rel target = $region3
  $region8: #{convnet_forward.3} parent=0 // loop_exit
    _

</llo_original>
